<compile_context>
chip_gen: v6e
topology: v6e:2x2x1
jax: 0.10.0
libtpu: 0.0.40
codegen_flags: <defaults>
</compile_context>

<pallas_src>
import numpy as np
import jax
import jax.numpy as jnp
from jax import lax
from jax.experimental import pallas as pl
from jax.experimental.pallas import tpu as pltpu

# ---- model hyper-parameters (mirror the PyTorch module) ------------------------------------
INPUT_SIZE = 1
NUM_CLASSES = 2
D_MODEL = 32
NHEAD = 2          # head split is a no-op here: attention == V-projection for seq_len == 1
NUM_LAYERS = 10
D_FF = 2048        # nn.Transformer default dim_feedforward
LN_EPS = 1e-5      # nn.Transformer default layer_norm_eps
OUT_PAD = 128      # lane-dense padded width for the final fc output store

# packed small-parameter slab row layouts (see pack_params)
ENC_SM_ROWS = 38   # [0:32]=W_attn  32=b_attn  33=b2  34=ln1w 35=ln1b 36=ln2w 37=ln2b
DEC_SM_ROWS = 73   # [0:32]=W_sattn [32:64]=W_cattn 64=b_sattn 65=b_cattn 66=b2
                   # 67=ln1w 68=ln1b 69=ln2w 70=ln2b 71=ln3w 72=ln3b
MISC_ROWS = 6      # 0=emb_w 1=emb_b 2=enc_norm_w 3=enc_norm_b 4=dec_norm_w 5=dec_norm_b
FC_ROWS = D_MODEL + 1  # [0:32]=fc_w (padded to 128 lanes)  32=fc_b (padded)


# ---- in-kernel helpers ----------------------------------------------------------------------
def _layernorm(x, w, b):
    mu = jnp.mean(x, axis=-1, keepdims=True)
    var = jnp.mean((x - mu) ** 2, axis=-1, keepdims=True)
    return (x - mu) * lax.rsqrt(var + LN_EPS) * w + b


def _dot(a, b):
    return jnp.dot(a, b, preferred_element_type=jnp.float32)


# ---- fused, layer-streaming Pallas kernel ---------------------------------------------------
def transformer_kernel(
        src_ref, tgt_ref, misc_ref, fc_ref,
        enc_sm_ref, enc_b1_ref, enc_w1_ref, enc_w2_ref,
        dec_sm_ref, dec_b1_ref, dec_w1_ref, dec_w2_ref,
        o_ref, x_sc, y_sc):
    step = pl.program_id(0)            # 0..NUM_LAYERS-1: encoder, NUM_LAYERS..2L-1: decoder

    @pl.when(step == 0)
    def _embed():
        emb_w = misc_ref[0:1, :]       # (1, D)
        emb_b = misc_ref[1:2, :]
        # K == 1 linear == broadcast outer product on the VPU (avoids two degenerate MXU dots)
        x_sc[...] = src_ref[...] * emb_w + emb_b      # (B, D)  embedding(src)
        y_sc[...] = tgt_ref[...] * emb_w + emb_b      # (B, D)  embedding(tgt)

    # ---------------- encoder layer (post-norm); attention pre-fused ------------------------
    @pl.when(step < NUM_LAYERS)
    def _encoder_layer():
        x = x_sc[...]
        sa = _dot(x, enc_sm_ref[0:32, :]) + enc_sm_ref[32:33, :]
        h = _layernorm(x + sa, enc_sm_ref[34:35, :], enc_sm_ref[35:36, :])
        ff = jnp.maximum(
            _dot(h.astype(jnp.bfloat16), enc_w1_ref[...]) + enc_b1_ref[...], 0.0)
        ff = _dot(ff.astype(jnp.bfloat16), enc_w2_ref[...]) + enc_sm_ref[33:34, :]
        x_sc[...] = _layernorm(h + ff, enc_sm_ref[36:37, :], enc_sm_ref[37:38, :])

    # ---------------- decoder layer (post-norm); self+cross attention pre-fused -------------
    @pl.when(step >= NUM_LAYERS)
    def _decoder_layer():
        # encoder.norm(x) -> memory; recomputed per step (a few VPU ops, cheaper than carrying
        # another scratch buffer, fully hidden under the FFN weight DMA).
        mem = _layernorm(x_sc[...], misc_ref[2:3, :], misc_ref[3:4, :])
        y = y_sc[...]
        sa = _dot(y, dec_sm_ref[0:32, :]) + dec_sm_ref[64:65, :]
        y = _layernorm(y + sa, dec_sm_ref[67:68, :], dec_sm_ref[68:69, :])
        ca = _dot(mem, dec_sm_ref[32:64, :]) + dec_sm_ref[65:66, :]
        y = _layernorm(y + ca, dec_sm_ref[69:70, :], dec_sm_ref[70:71, :])
        ff = jnp.maximum(
            _dot(y.astype(jnp.bfloat16), dec_w1_ref[...]) + dec_b1_ref[...], 0.0)
        ff = _dot(ff.astype(jnp.bfloat16), dec_w2_ref[...]) + dec_sm_ref[66:67, :]
        y = _layernorm(y + ff, dec_sm_ref[71:72, :], dec_sm_ref[72:73, :])
        y_sc[...] = y

        @pl.when(step == 2 * NUM_LAYERS - 1)
        def _final():
            # seq_len == 1 -> mean(dim=0) is the identity; decoder.norm then zero-padded,
            # lane-dense final fc.
            out = _layernorm(y, misc_ref[4:5, :], misc_ref[5:6, :])
            o_ref[...] = _dot(out, fc_ref[0:32, :]) + fc_ref[32:33, :]


# ---- wrapper: one pallas_call, layer-streaming grid -----------------------------------------
def pallas_forward(src, tgt, kp):
    batch = src.shape[0]
    L = NUM_LAYERS

    def const_spec(rows, cols):               # resident slabs: DMA'd once (block idx constant)
        return pl.BlockSpec((rows, cols), lambda l: (0, 0))

    def enc_spec(rows, cols):                 # stream layer l while l < L, then hold layer L-1
        return pl.BlockSpec((None, rows, cols),
                            lambda l: (jnp.minimum(l, L - 1), 0, 0))

    def dec_spec(rows, cols):                 # hold layer 0 (prefetched) until l >= L
        return pl.BlockSpec((None, rows, cols),
                            lambda l: (jnp.maximum(l - L, 0), 0, 0))

    out_pad = pl.pallas_call(
        transformer_kernel,
        grid=(2 * L,),
        in_specs=[
            const_spec(batch, INPUT_SIZE),        # src
            const_spec(batch, INPUT_SIZE),        # tgt
            const_spec(MISC_ROWS, D_MODEL),       # emb / enc_norm / dec_norm
            const_spec(FC_ROWS, OUT_PAD),         # fc weight+bias (lane padded)
            enc_spec(ENC_SM_ROWS, D_MODEL),       # fused attention + biases + LN (f32)
            enc_spec(1, D_FF),                    # b1 (f32)
            enc_spec(D_MODEL, D_FF),              # w1 (bf16)
            enc_spec(D_FF, D_MODEL),              # w2 (bf16, math orientation, NN dot)
            dec_spec(DEC_SM_ROWS, D_MODEL),
            dec_spec(1, D_FF),
            dec_spec(D_MODEL, D_FF),
            dec_spec(D_FF, D_MODEL),
        ],
        out_specs=pl.BlockSpec((batch, OUT_PAD), lambda l: (0, 0)),
        out_shape=jax.ShapeDtypeStruct((batch, OUT_PAD), jnp.float32),
        scratch_shapes=[pltpu.VMEM((batch, D_MODEL), jnp.float32),   # x carry
                        pltpu.VMEM((batch, D_MODEL), jnp.float32)],  # y carry
        compiler_params=pltpu.CompilerParams(
            dimension_semantics=("arbitrary",),           # carries in scratch across steps
            vmem_limit_bytes=8 * 1024 * 1024),            # ~3 MiB actually used
    )(src, tgt, kp["misc"], kp["fc"],
      kp["enc_sm"], kp["enc_b1"], kp["enc_w1"], kp["enc_w2"],
      kp["dec_sm"], kp["dec_b1"], kp["dec_w1"], kp["dec_w2"])
    return out_pad[:, :NUM_CLASSES]


# ---- pack the per-layer parameter dicts into stacked, kernel-friendly slabs -----------------
def pack_params(params):
    def fuse_attn(wv, bv, wo, bo):
        # exact for seq_len == 1: attn(x) = (x @ Wv + bv) @ Wo + bo = x @ (Wv Wo) + (bv Wo + bo)
        return wv @ wo, bv @ wo + bo

    enc = params["enc_layers"]
    dec = params["dec_layers"]

    enc_sm = []
    for p in enc:
        w, b = fuse_attn(p["wv"], p["bv"], p["wo"], p["bo"])
        enc_sm.append(jnp.concatenate(
            [w, b, p["b2"], p["ln1w"], p["ln1b"], p["ln2w"], p["ln2b"]], axis=0))   # (38, 32)

    dec_sm = []
    for p in dec:
        ws, bs = fuse_attn(p["wvs"], p["bvs"], p["wos"], p["bos"])
        wc, bc = fuse_attn(p["wvc"], p["bvc"], p["woc"], p["boc"])
        dec_sm.append(jnp.concatenate(
            [ws, wc, bs, bc, p["b2"], p["ln1w"], p["ln1b"], p["ln2w"], p["ln2b"],
             p["ln3w"], p["ln3b"]], axis=0))                                        # (73, 32)

    fc_w_pad = jnp.zeros((D_MODEL, OUT_PAD), jnp.float32).at[:, :NUM_CLASSES].set(params["fc_w"])
    fc_b_pad = jnp.zeros((1, OUT_PAD), jnp.float32).at[:, :NUM_CLASSES].set(params["fc_b"])

    return {
        "misc": jnp.concatenate(
            [params["emb_w"], params["emb_b"],
             params["enc_norm_w"], params["enc_norm_b"],
             params["dec_norm_w"], params["dec_norm_b"]], axis=0),      # (6, 32)
        "fc": jnp.concatenate([fc_w_pad, fc_b_pad], axis=0),            # (33, 128)
        "enc_sm": jnp.stack(enc_sm),                                    # (L, 38, 32)  f32
        "enc_b1": jnp.stack([p["b1"] for p in enc]),                    # (L, 1, 2048) f32
        "enc_w1": jnp.stack([p["w1"] for p in enc]).astype(jnp.bfloat16),  # (L, 32, 2048)
        "enc_w2": jnp.stack([p["w2"] for p in enc]).astype(jnp.bfloat16),  # (L, 2048, 32)
        "dec_sm": jnp.stack(dec_sm),                                    # (L, 73, 32)  f32
        "dec_b1": jnp.stack([p["b1"] for p in dec]),
        "dec_w1": jnp.stack([p["w1"] for p in dec]).astype(jnp.bfloat16),
        "dec_w2": jnp.stack([p["w2"] for p in dec]).astype(jnp.bfloat16),
    }


# ---- pure-JAX reference (unfused attention weights, full f32) -------------------------------
def _ref_ln(x, w, b):
    mu = jnp.mean(x, axis=-1, keepdims=True)
    var = jnp.mean((x - mu) ** 2, axis=-1, keepdims=True)
    return (x - mu) * lax.rsqrt(var + LN_EPS) * w + b


def reference_forward(src, tgt, params):
    x = src @ params["emb_w"] + params["emb_b"]
    y = tgt @ params["emb_w"] + params["emb_b"]
    for p in params["enc_layers"]:
        sa = (x @ p["wv"] + p["bv"]) @ p["wo"] + p["bo"]
        h = _ref_ln(x + sa, p["ln1w"], p["ln1b"])
        ff = jnp.maximum(h @ p["w1"] + p["b1"], 0.0) @ p["w2"] + p["b2"]
        x = _ref_ln(h + ff, p["ln2w"], p["ln2b"])
    mem = _ref_ln(x, params["enc_norm_w"], params["enc_norm_b"])
    for p in params["dec_layers"]:
        sa = (y @ p["wvs"] + p["bvs"]) @ p["wos"] + p["bos"]
        y = _ref_ln(y + sa, p["ln1w"], p["ln1b"])
        ca = (mem @ p["wvc"] + p["bvc"]) @ p["woc"] + p["boc"]
        y = _ref_ln(y + ca, p["ln2w"], p["ln2b"])
        ff = jnp.maximum(y @ p["w1"] + p["b1"], 0.0) @ p["w2"] + p["b2"]
        y = _ref_ln(y + ff, p["ln3w"], p["ln3b"])
    out = _ref_ln(y, params["dec_norm_w"], params["dec_norm_b"])
    return out @ params["fc_w"] + params["fc_b"]


# ---- deterministic parameter init (shapes from the PyTorch __init__) ------------------------
def init_params(key):
    keys = iter(jax.random.split(key, 256))

    def nrm(shape, scale=0.05):
        return (scale * jax.random.normal(next(keys), shape)).astype(jnp.float32)

    ones = lambda s: jnp.ones(s, jnp.float32)
    zeros = lambda s: jnp.zeros(s, jnp.float32)

    params = {
        "emb_w": nrm((INPUT_SIZE, D_MODEL)),          # torch Linear weight (32,1) stored as W.T
        "emb_b": nrm((1, D_MODEL)),
        "fc_w": nrm((D_MODEL, NUM_CLASSES)),          # torch Linear weight (2,32) stored as W.T
        "fc_b": nrm((1, NUM_CLASSES)),
        "enc_norm_w": ones((1, D_MODEL)), "enc_norm_b": zeros((1, D_MODEL)),
        "dec_norm_w": ones((1, D_MODEL)), "dec_norm_b": zeros((1, D_MODEL)),
        "enc_layers": [], "dec_layers": [],
    }

    for _ in range(NUM_LAYERS):
        in_proj_w = nrm((3 * D_MODEL, D_MODEL))       # packed QKV like torch MHA in_proj_weight
        in_proj_b = nrm((3 * D_MODEL,))
        params["enc_layers"].append({
            "wv": in_proj_w[2 * D_MODEL:].T,          # only V-slice is live (seq_len == 1)
            "bv": in_proj_b[2 * D_MODEL:].reshape(1, D_MODEL),
            "wo": nrm((D_MODEL, D_MODEL)).T, "bo": nrm((1, D_MODEL)),
            "w1": nrm((D_FF, D_MODEL)).T, "b1": nrm((1, D_FF)),
            "w2": nrm((D_MODEL, D_FF)).T, "b2": nrm((1, D_MODEL)),
            "ln1w": ones((1, D_MODEL)), "ln1b": zeros((1, D_MODEL)),
            "ln2w": ones((1, D_MODEL)), "ln2b": zeros((1, D_MODEL)),
        })

    for _ in range(NUM_LAYERS):
        sp_w = nrm((3 * D_MODEL, D_MODEL)); sp_b = nrm((3 * D_MODEL,))
        cp_w = nrm((3 * D_MODEL, D_MODEL)); cp_b = nrm((3 * D_MODEL,))
        params["dec_layers"].append({
            "wvs": sp_w[2 * D_MODEL:].T, "bvs": sp_b[2 * D_MODEL:].reshape(1, D_MODEL),
            "wos": nrm((D_MODEL, D_MODEL)).T, "bos": nrm((1, D_MODEL)),
            "wvc": cp_w[2 * D_MODEL:].T, "bvc": cp_b[2 * D_MODEL:].reshape(1, D_MODEL),
            "woc": nrm((D_MODEL, D_MODEL)).T, "boc": nrm((1, D_MODEL)),
            "w1": nrm((D_FF, D_MODEL)).T, "b1": nrm((1, D_FF)),
            "w2": nrm((D_MODEL, D_FF)).T, "b2": nrm((1, D_MODEL)),
            "ln1w": ones((1, D_MODEL)), "ln1b": zeros((1, D_MODEL)),
            "ln2w": ones((1, D_MODEL)), "ln2b": zeros((1, D_MODEL)),
            "ln3w": ones((1, D_MODEL)), "ln3b": zeros((1, D_MODEL)),
        })
    return params


# ---- main -----------------------------------------------------------------------------------
if __name__ == "__main__":
    key = jax.random.PRNGKey(0)
    kp_key, ks, kt = jax.random.split(key, 3)

    params = init_params(kp_key)
    kernel_params = pack_params(params)          # stacked / attention-fused / bf16-FFN slabs

    batch = 16
    src = jax.random.normal(ks, (batch, INPUT_SIZE), dtype=jnp.float32)
    tgt = jax.random.normal(kt, (batch, INPUT_SIZE), dtype=jnp.float32)

    fwd = jax.jit(pallas_forward)
    out = jax.block_until_ready(fwd(src, tgt, kernel_params))

    assert out.shape == (batch, NUM_CLASSES), out.shape
    assert bool(jnp.all(jnp.isfinite(out)))

    ref = reference_forward(src, tgt, params)    # full-f32, unfused-attention reference
    assert np.allclose(np.asarray(out), np.asarray(ref), atol=5e-2, rtol=5e-2), (
        "Pallas output diverges from JAX reference")

    print("KERNEL_OK")
</pallas_src>

<mosaic_0001>
module attributes {stable_mosaic.version = 11 : i64} {
  func.func @transformer_kernel(%arg0: i32, %arg1: memref<16x1xf32, #tpu.memory_space<vmem>>, %arg2: memref<16x1xf32, #tpu.memory_space<vmem>>, %arg3: memref<6x32xf32, #tpu.memory_space<vmem>>, %arg4: memref<33x128xf32, #tpu.memory_space<vmem>>, %arg5: memref<1x38x32xf32, #tpu.memory_space<vmem>>, %arg6: memref<1x1x2048xf32, #tpu.memory_space<vmem>>, %arg7: memref<1x32x2048xbf16, #tpu.memory_space<vmem>>, %arg8: memref<1x2048x32xbf16, #tpu.memory_space<vmem>>, %arg9: memref<1x73x32xf32, #tpu.memory_space<vmem>>, %arg10: memref<1x1x2048xf32, #tpu.memory_space<vmem>>, %arg11: memref<1x32x2048xbf16, #tpu.memory_space<vmem>>, %arg12: memref<1x2048x32xbf16, #tpu.memory_space<vmem>>, %arg13: memref<16x128xf32, #tpu.memory_space<vmem>>, %arg14: memref<16x32xf32, #tpu.memory_space<vmem>>, %arg15: memref<16x32xf32, #tpu.memory_space<vmem>>) attributes {dimension_semantics = [#tpu.dimension_semantics<arbitrary>], iteration_bounds = array<i64: 20>, scalar_prefetch = 0 : i64, scratch_operands = 2 : i64, tpu.core_type = #tpu.core_type<tc>, window_params = [{pipeline_mode = #tpu.pipeline_mode<synchronous>, transform_indices = @transform_0, window_bounds = array<i64: 16, 1>}, {pipeline_mode = #tpu.pipeline_mode<synchronous>, transform_indices = @transform_1, window_bounds = array<i64: 16, 1>}, {pipeline_mode = #tpu.pipeline_mode<synchronous>, transform_indices = @transform_2, window_bounds = array<i64: 6, 32>}, {pipeline_mode = #tpu.pipeline_mode<synchronous>, transform_indices = @transform_3, window_bounds = array<i64: 33, 128>}, {transform_indices = @transform_4, window_bounds = array<i64: 1, 38, 32>}, {transform_indices = @transform_5, window_bounds = array<i64: 1, 1, 2048>}, {transform_indices = @transform_6, window_bounds = array<i64: 1, 32, 2048>}, {transform_indices = @transform_7, window_bounds = array<i64: 1, 2048, 32>}, {transform_indices = @transform_8, window_bounds = array<i64: 1, 73, 32>}, {transform_indices = @transform_9, window_bounds = array<i64: 1, 1, 2048>}, {transform_indices = @transform_10, window_bounds = array<i64: 1, 32, 2048>}, {transform_indices = @transform_11, window_bounds = array<i64: 1, 2048, 32>}, {pipeline_mode = #tpu.pipeline_mode<synchronous>, transform_indices = @transform_12, window_bounds = array<i64: 16, 128>}]} {
    %c0_i32 = arith.constant 0 : i32
    %0 = arith.cmpi eq, %arg0, %c0_i32 : i32
    %1 = arith.extui %0 : i1 to i32
    %c0_i32_0 = arith.constant 0 : i32
    %2 = arith.cmpi ne, %1, %c0_i32_0 : i32
    scf.if %2 {
      %c0 = arith.constant 0 : index
      %c0_4 = arith.constant 0 : index
      %9 = vector.load %arg3[%c0, %c0_4] : memref<6x32xf32, #tpu.memory_space<vmem>>, vector<1x32xf32>
      %c1 = arith.constant 1 : index
      %c0_5 = arith.constant 0 : index
      %10 = vector.load %arg3[%c1, %c0_5] : memref<6x32xf32, #tpu.memory_space<vmem>>, vector<1x32xf32>
      %c0_6 = arith.constant 0 : index
      %c0_7 = arith.constant 0 : index
      %11 = vector.load %arg1[%c0_6, %c0_7] : memref<16x1xf32, #tpu.memory_space<vmem>>, vector<16x1xf32>
      %12 = vector.broadcast %11 : vector<16x1xf32> to vector<16x32xf32>
      %13 = vector.broadcast %9 : vector<1x32xf32> to vector<16x32xf32>
      %14 = arith.mulf %12, %13 : vector<16x32xf32>
      %15 = vector.broadcast %10 : vector<1x32xf32> to vector<16x32xf32>
      %16 = arith.addf %14, %15 : vector<16x32xf32>
      %c0_8 = arith.constant 0 : index
      %c0_9 = arith.constant 0 : index
      %17 = vector.load %arg14[%c0_8, %c0_9] : memref<16x32xf32, #tpu.memory_space<vmem>>, vector<16x32xf32>
      tpu.vector_store %arg14[%c0_8, %c0_9], %16 {strides = array<i32>} : memref<16x32xf32, #tpu.memory_space<vmem>>, vector<16x32xf32>,
      %c0_10 = arith.constant 0 : index
      %c0_11 = arith.constant 0 : index
      %18 = vector.load %arg2[%c0_10, %c0_11] : memref<16x1xf32, #tpu.memory_space<vmem>>, vector<16x1xf32>
      %19 = vector.broadcast %18 : vector<16x1xf32> to vector<16x32xf32>
      %20 = vector.broadcast %9 : vector<1x32xf32> to vector<16x32xf32>
      %21 = arith.mulf %19, %20 : vector<16x32xf32>
      %22 = vector.broadcast %10 : vector<1x32xf32> to vector<16x32xf32>
      %23 = arith.addf %21, %22 : vector<16x32xf32>
      %c0_12 = arith.constant 0 : index
      %c0_13 = arith.constant 0 : index
      %24 = vector.load %arg15[%c0_12, %c0_13] : memref<16x32xf32, #tpu.memory_space<vmem>>, vector<16x32xf32>
      tpu.vector_store %arg15[%c0_12, %c0_13], %23 {strides = array<i32>} : memref<16x32xf32, #tpu.memory_space<vmem>>, vector<16x32xf32>,
    } else {
    }
    %c10_i32 = arith.constant 10 : i32
    %3 = arith.cmpi slt, %arg0, %c10_i32 : i32
    %4 = arith.extui %3 : i1 to i32
    %c0_i32_1 = arith.constant 0 : i32
    %5 = arith.cmpi ne, %4, %c0_i32_1 : i32
    scf.if %5 {
      %c0 = arith.constant 0 : index
      %c0_4 = arith.constant 0 : index
      %9 = vector.load %arg14[%c0, %c0_4] : memref<16x32xf32, #tpu.memory_space<vmem>>, vector<16x32xf32>
      %c0_5 = arith.constant 0 : index
      %c0_6 = arith.constant 0 : index
      %c0_7 = arith.constant 0 : index
      %10 = vector.load %arg5[%c0_5, %c0_6, %c0_7] : memref<1x38x32xf32, #tpu.memory_space<vmem>>, vector<1x32x32xf32>
      %11 = vector.shape_cast %10 : vector<1x32x32xf32> to vector<32x32xf32>
      %cst = arith.constant dense<0.000000e+00> : vector<16x32xf32>
      %12 = tpu.matmul %9, %11, %cst {dimension_numbers = #tpu.dot_dimension_numbers<[1], [0], [0], [1], [0, 0, 1, 1], [], []>} : vector<16x32xf32>, vector<32x32xf32>, vector<16x32xf32> -> vector<16x32xf32>
      %c0_8 = arith.constant 0 : index
      %c32 = arith.constant 32 : index
      %c0_9 = arith.constant 0 : index
      %13 = vector.load %arg5[%c0_8, %c32, %c0_9] : memref<1x38x32xf32, #tpu.memory_space<vmem>>, vector<1x1x32xf32>
      %14 = vector.shape_cast %13 : vector<1x1x32xf32> to vector<1x32xf32>
      %15 = vector.broadcast %14 : vector<1x32xf32> to vector<16x32xf32>
      %16 = arith.addf %12, %15 : vector<16x32xf32>
      %17 = arith.addf %9, %16 : vector<16x32xf32>
      %c0_10 = arith.constant 0 : index
      %c34 = arith.constant 34 : index
      %c0_11 = arith.constant 0 : index
      %18 = vector.load %arg5[%c0_10, %c34, %c0_11] : memref<1x38x32xf32, #tpu.memory_space<vmem>>, vector<1x1x32xf32>
      %19 = vector.shape_cast %18 : vector<1x1x32xf32> to vector<1x32xf32>
      %c0_12 = arith.constant 0 : index
      %c35 = arith.constant 35 : index
      %c0_13 = arith.constant 0 : index
      %20 = vector.load %arg5[%c0_12, %c35, %c0_13] : memref<1x38x32xf32, #tpu.memory_space<vmem>>, vector<1x1x32xf32>
      %21 = vector.shape_cast %20 : vector<1x1x32xf32> to vector<1x32xf32>
      %cst_14 = arith.constant dense<0.000000e+00> : vector<16xf32>
      %22 = vector.multi_reduction <add>, %17, %cst_14 [1] : vector<16x32xf32> to vector<16xf32>
      %23 = vector.shape_cast %22 : vector<16xf32> to vector<16x1xf32>
      %cst_15 = arith.constant 3.200000e+01 : f32
      %24 = vector.broadcast %cst_15 : f32 to vector<16x1xf32>
      %25 = arith.divf %23, %24 : vector<16x1xf32>
      %26 = vector.broadcast %25 : vector<16x1xf32> to vector<16x32xf32>
      %27 = arith.subf %17, %26 : vector<16x32xf32>
      %28 = arith.mulf %27, %27 : vector<16x32xf32>
      %cst_16 = arith.constant dense<0.000000e+00> : vector<16xf32>
      %29 = vector.multi_reduction <add>, %28, %cst_16 [1] : vector<16x32xf32> to vector<16xf32>
      %30 = vector.shape_cast %29 : vector<16xf32> to vector<16x1xf32>
      %cst_17 = arith.constant 3.200000e+01 : f32
      %31 = vector.broadcast %cst_17 : f32 to vector<16x1xf32>
      %32 = arith.divf %30, %31 : vector<16x1xf32>
      %33 = vector.broadcast %25 : vector<16x1xf32> to vector<16x32xf32>
      %34 = arith.subf %17, %33 : vector<16x32xf32>
      %cst_18 = arith.constant 9.99999974E-6 : f32
      %35 = vector.broadcast %cst_18 : f32 to vector<16x1xf32>
      %36 = arith.addf %32, %35 : vector<16x1xf32>
      %37 = math.rsqrt %36 : vector<16x1xf32>
      %38 = vector.broadcast %37 : vector<16x1xf32> to vector<16x32xf32>
      %39 = arith.mulf %34, %38 : vector<16x32xf32>
      %40 = vector.broadcast %19 : vector<1x32xf32> to vector<16x32xf32>
      %41 = arith.mulf %39, %40 : vector<16x32xf32>
      %42 = vector.broadcast %21 : vector<1x32xf32> to vector<16x32xf32>
      %43 = arith.addf %41, %42 : vector<16x32xf32>
      %44 = arith.truncf %43 : vector<16x32xf32> to vector<16x32xbf16>
      %c0_19 = arith.constant 0 : index
      %c0_20 = arith.constant 0 : index
      %c0_21 = arith.constant 0 : index
      %45 = vector.load %arg7[%c0_19, %c0_20, %c0_21] : memref<1x32x2048xbf16, #tpu.memory_space<vmem>>, vector<1x32x2048xbf16>
      %46 = vector.shape_cast %45 : vector<1x32x2048xbf16> to vector<32x2048xbf16>
      %cst_22 = arith.constant dense<0.000000e+00> : vector<16x2048xf32>
      %47 = tpu.matmul %44, %46, %cst_22 {dimension_numbers = #tpu.dot_dimension_numbers<[1], [0], [0], [1], [0, 0, 1, 1], [], []>} : vector<16x32xbf16>, vector<32x2048xbf16>, vector<16x2048xf32> -> vector<16x2048xf32>
      %c0_23 = arith.constant 0 : index
      %c0_24 = arith.constant 0 : index
      %c0_25 = arith.constant 0 : index
      %48 = vector.load %arg6[%c0_23, %c0_24, %c0_25] : memref<1x1x2048xf32, #tpu.memory_space<vmem>>, vector<1x1x2048xf32>
      %49 = vector.shape_cast %48 : vector<1x1x2048xf32> to vector<1x2048xf32>
      %50 = vector.broadcast %49 : vector<1x2048xf32> to vector<16x2048xf32>
      %51 = arith.addf %47, %50 : vector<16x2048xf32>
      %cst_26 = arith.constant 0.000000e+00 : f32
      %52 = vector.broadcast %cst_26 : f32 to vector<16x2048xf32>
      %53 = arith.maximumf %51, %52 : vector<16x2048xf32>
      %54 = arith.truncf %53 : vector<16x2048xf32> to vector<16x2048xbf16>
      %c0_27 = arith.constant 0 : index
      %c0_28 = arith.constant 0 : index
      %c0_29 = arith.constant 0 : index
      %55 = vector.load %arg8[%c0_27, %c0_28, %c0_29] : memref<1x2048x32xbf16, #tpu.memory_space<vmem>>, vector<1x2048x32xbf16>
      %56 = vector.shape_cast %55 : vector<1x2048x32xbf16> to vector<2048x32xbf16>
      %cst_30 = arith.constant dense<0.000000e+00> : vector<16x32xf32>
      %57 = tpu.matmul %54, %56, %cst_30 {dimension_numbers = #tpu.dot_dimension_numbers<[1], [0], [0], [1], [0, 0, 1, 1], [], []>} : vector<16x2048xbf16>, vector<2048x32xbf16>, vector<16x32xf32> -> vector<16x32xf32>
      %c0_31 = arith.constant 0 : index
      %c33 = arith.constant 33 : index
      %c0_32 = arith.constant 0 : index
      %58 = vector.load %arg5[%c0_31, %c33, %c0_32] : memref<1x38x32xf32, #tpu.memory_space<vmem>>, vector<1x1x32xf32>
      %59 = vector.shape_cast %58 : vector<1x1x32xf32> to vector<1x32xf32>
      %60 = vector.broadcast %59 : vector<1x32xf32> to vector<16x32xf32>
      %61 = arith.addf %57, %60 : vector<16x32xf32>
      %62 = arith.addf %43, %61 : vector<16x32xf32>
      %c0_33 = arith.constant 0 : index
      %c36 = arith.constant 36 : index
      %c0_34 = arith.constant 0 : index
      %63 = vector.load %arg5[%c0_33, %c36, %c0_34] : memref<1x38x32xf32, #tpu.memory_space<vmem>>, vector<1x1x32xf32>
      %64 = vector.shape_cast %63 : vector<1x1x32xf32> to vector<1x32xf32>
      %c0_35 = arith.constant 0 : index
      %c37 = arith.constant 37 : index
      %c0_36 = arith.constant 0 : index
      %65 = vector.load %arg5[%c0_35, %c37, %c0_36] : memref<1x38x32xf32, #tpu.memory_space<vmem>>, vector<1x1x32xf32>
      %66 = vector.shape_cast %65 : vector<1x1x32xf32> to vector<1x32xf32>
      %cst_37 = arith.constant dense<0.000000e+00> : vector<16xf32>
      %67 = vector.multi_reduction <add>, %62, %cst_37 [1] : vector<16x32xf32> to vector<16xf32>
      %68 = vector.shape_cast %67 : vector<16xf32> to vector<16x1xf32>
      %cst_38 = arith.constant 3.200000e+01 : f32
      %69 = vector.broadcast %cst_38 : f32 to vector<16x1xf32>
      %70 = arith.divf %68, %69 : vector<16x1xf32>
      %71 = vector.broadcast %70 : vector<16x1xf32> to vector<16x32xf32>
      %72 = arith.subf %62, %71 : vector<16x32xf32>
      %73 = arith.mulf %72, %72 : vector<16x32xf32>
      %cst_39 = arith.constant dense<0.000000e+00> : vector<16xf32>
      %74 = vector.multi_reduction <add>, %73, %cst_39 [1] : vector<16x32xf32> to vector<16xf32>
      %75 = vector.shape_cast %74 : vector<16xf32> to vector<16x1xf32>
      %cst_40 = arith.constant 3.200000e+01 : f32
      %76 = vector.broadcast %cst_40 : f32 to vector<16x1xf32>
      %77 = arith.divf %75, %76 : vector<16x1xf32>
      %78 = vector.broadcast %70 : vector<16x1xf32> to vector<16x32xf32>
      %79 = arith.subf %62, %78 : vector<16x32xf32>
      %cst_41 = arith.constant 9.99999974E-6 : f32
      %80 = vector.broadcast %cst_41 : f32 to vector<16x1xf32>
      %81 = arith.addf %77, %80 : vector<16x1xf32>
      %82 = math.rsqrt %81 : vector<16x1xf32>
      %83 = vector.broadcast %82 : vector<16x1xf32> to vector<16x32xf32>
      %84 = arith.mulf %79, %83 : vector<16x32xf32>
      %85 = vector.broadcast %64 : vector<1x32xf32> to vector<16x32xf32>
      %86 = arith.mulf %84, %85 : vector<16x32xf32>
      %87 = vector.broadcast %66 : vector<1x32xf32> to vector<16x32xf32>
      %88 = arith.addf %86, %87 : vector<16x32xf32>
      %c0_42 = arith.constant 0 : index
      %c0_43 = arith.constant 0 : index
      %89 = vector.load %arg14[%c0_42, %c0_43] : memref<16x32xf32, #tpu.memory_space<vmem>>, vector<16x32xf32>
      tpu.vector_store %arg14[%c0_42, %c0_43], %88 {strides = array<i32>} : memref<16x32xf32, #tpu.memory_space<vmem>>, vector<16x32xf32>,
    } else {
    }
    %c10_i32_2 = arith.constant 10 : i32
    %6 = arith.cmpi sge, %arg0, %c10_i32_2 : i32
    %7 = arith.extui %6 : i1 to i32
    %c0_i32_3 = arith.constant 0 : i32
    %8 = arith.cmpi ne, %7, %c0_i32_3 : i32
    scf.if %8 {
      %c0 = arith.constant 0 : index
      %c0_4 = arith.constant 0 : index
      %9 = vector.load %arg14[%c0, %c0_4] : memref<16x32xf32, #tpu.memory_space<vmem>>, vector<16x32xf32>
      %c2 = arith.constant 2 : index
      %c0_5 = arith.constant 0 : index
      %10 = vector.load %arg3[%c2, %c0_5] : memref<6x32xf32, #tpu.memory_space<vmem>>, vector<1x32xf32>
      %c3 = arith.constant 3 : index
      %c0_6 = arith.constant 0 : index
      %11 = vector.load %arg3[%c3, %c0_6] : memref<6x32xf32, #tpu.memory_space<vmem>>, vector<1x32xf32>
      %cst = arith.constant dense<0.000000e+00> : vector<16xf32>
      %12 = vector.multi_reduction <add>, %9, %cst [1] : vector<16x32xf32> to vector<16xf32>
      %13 = vector.shape_cast %12 : vector<16xf32> to vector<16x1xf32>
      %cst_7 = arith.constant 3.200000e+01 : f32
      %14 = vector.broadcast %cst_7 : f32 to vector<16x1xf32>
      %15 = arith.divf %13, %14 : vector<16x1xf32>
      %16 = vector.broadcast %15 : vector<16x1xf32> to vector<16x32xf32>
      %17 = arith.subf %9, %16 : vector<16x32xf32>
      %18 = arith.mulf %17, %17 : vector<16x32xf32>
      %cst_8 = arith.constant dense<0.000000e+00> : vector<16xf32>
      %19 = vector.multi_reduction <add>, %18, %cst_8 [1] : vector<16x32xf32> to vector<16xf32>
      %20 = vector.shape_cast %19 : vector<16xf32> to vector<16x1xf32>
      %cst_9 = arith.constant 3.200000e+01 : f32
      %21 = vector.broadcast %cst_9 : f32 to vector<16x1xf32>
      %22 = arith.divf %20, %21 : vector<16x1xf32>
      %23 = vector.broadcast %15 : vector<16x1xf32> to vector<16x32xf32>
      %24 = arith.subf %9, %23 : vector<16x32xf32>
      %cst_10 = arith.constant 9.99999974E-6 : f32
      %25 = vector.broadcast %cst_10 : f32 to vector<16x1xf32>
      %26 = arith.addf %22, %25 : vector<16x1xf32>
      %27 = math.rsqrt %26 : vector<16x1xf32>
      %28 = vector.broadcast %27 : vector<16x1xf32> to vector<16x32xf32>
      %29 = arith.mulf %24, %28 : vector<16x32xf32>
      %30 = vector.broadcast %10 : vector<1x32xf32> to vector<16x32xf32>
      %31 = arith.mulf %29, %30 : vector<16x32xf32>
      %32 = vector.broadcast %11 : vector<1x32xf32> to vector<16x32xf32>
      %33 = arith.addf %31, %32 : vector<16x32xf32>
      %c0_11 = arith.constant 0 : index
      %c0_12 = arith.constant 0 : index
      %34 = vector.load %arg15[%c0_11, %c0_12] : memref<16x32xf32, #tpu.memory_space<vmem>>, vector<16x32xf32>
      %c0_13 = arith.constant 0 : index
      %c0_14 = arith.constant 0 : index
      %c0_15 = arith.constant 0 : index
      %35 = vector.load %arg9[%c0_13, %c0_14, %c0_15] : memref<1x73x32xf32, #tpu.memory_space<vmem>>, vector<1x32x32xf32>
      %36 = vector.shape_cast %35 : vector<1x32x32xf32> to vector<32x32xf32>
      %cst_16 = arith.constant dense<0.000000e+00> : vector<16x32xf32>
      %37 = tpu.matmul %34, %36, %cst_16 {dimension_numbers = #tpu.dot_dimension_numbers<[1], [0], [0], [1], [0, 0, 1, 1], [], []>} : vector<16x32xf32>, vector<32x32xf32>, vector<16x32xf32> -> vector<16x32xf32>
      %c0_17 = arith.constant 0 : index
      %c64 = arith.constant 64 : index
      %c0_18 = arith.constant 0 : index
      %38 = vector.load %arg9[%c0_17, %c64, %c0_18] : memref<1x73x32xf32, #tpu.memory_space<vmem>>, vector<1x1x32xf32>
      %39 = vector.shape_cast %38 : vector<1x1x32xf32> to vector<1x32xf32>
      %40 = vector.broadcast %39 : vector<1x32xf32> to vector<16x32xf32>
      %41 = arith.addf %37, %40 : vector<16x32xf32>
      %42 = arith.addf %34, %41 : vector<16x32xf32>
      %c0_19 = arith.constant 0 : index
      %c67 = arith.constant 67 : index
      %c0_20 = arith.constant 0 : index
      %43 = vector.load %arg9[%c0_19, %c67, %c0_20] : memref<1x73x32xf32, #tpu.memory_space<vmem>>, vector<1x1x32xf32>
      %44 = vector.shape_cast %43 : vector<1x1x32xf32> to vector<1x32xf32>
      %c0_21 = arith.constant 0 : index
      %c68 = arith.constant 68 : index
      %c0_22 = arith.constant 0 : index
      %45 = vector.load %arg9[%c0_21, %c68, %c0_22] : memref<1x73x32xf32, #tpu.memory_space<vmem>>, vector<1x1x32xf32>
      %46 = vector.shape_cast %45 : vector<1x1x32xf32> to vector<1x32xf32>
      %cst_23 = arith.constant dense<0.000000e+00> : vector<16xf32>
      %47 = vector.multi_reduction <add>, %42, %cst_23 [1] : vector<16x32xf32> to vector<16xf32>
      %48 = vector.shape_cast %47 : vector<16xf32> to vector<16x1xf32>
      %cst_24 = arith.constant 3.200000e+01 : f32
      %49 = vector.broadcast %cst_24 : f32 to vector<16x1xf32>
      %50 = arith.divf %48, %49 : vector<16x1xf32>
      %51 = vector.broadcast %50 : vector<16x1xf32> to vector<16x32xf32>
      %52 = arith.subf %42, %51 : vector<16x32xf32>
      %53 = arith.mulf %52, %52 : vector<16x32xf32>
      %cst_25 = arith.constant dense<0.000000e+00> : vector<16xf32>
      %54 = vector.multi_reduction <add>, %53, %cst_25 [1] : vector<16x32xf32> to vector<16xf32>
      %55 = vector.shape_cast %54 : vector<16xf32> to vector<16x1xf32>
      %cst_26 = arith.constant 3.200000e+01 : f32
      %56 = vector.broadcast %cst_26 : f32 to vector<16x1xf32>
      %57 = arith.divf %55, %56 : vector<16x1xf32>
      %58 = vector.broadcast %50 : vector<16x1xf32> to vector<16x32xf32>
      %59 = arith.subf %42, %58 : vector<16x32xf32>
      %cst_27 = arith.constant 9.99999974E-6 : f32
      %60 = vector.broadcast %cst_27 : f32 to vector<16x1xf32>
      %61 = arith.addf %57, %60 : vector<16x1xf32>
      %62 = math.rsqrt %61 : vector<16x1xf32>
      %63 = vector.broadcast %62 : vector<16x1xf32> to vector<16x32xf32>
      %64 = arith.mulf %59, %63 : vector<16x32xf32>
      %65 = vector.broadcast %44 : vector<1x32xf32> to vector<16x32xf32>
      %66 = arith.mulf %64, %65 : vector<16x32xf32>
      %67 = vector.broadcast %46 : vector<1x32xf32> to vector<16x32xf32>
      %68 = arith.addf %66, %67 : vector<16x32xf32>
      %c0_28 = arith.constant 0 : index
      %c32 = arith.constant 32 : index
      %c0_29 = arith.constant 0 : index
      %69 = vector.load %arg9[%c0_28, %c32, %c0_29] : memref<1x73x32xf32, #tpu.memory_space<vmem>>, vector<1x32x32xf32>
      %70 = vector.shape_cast %69 : vector<1x32x32xf32> to vector<32x32xf32>
      %cst_30 = arith.constant dense<0.000000e+00> : vector<16x32xf32>
      %71 = tpu.matmul %33, %70, %cst_30 {dimension_numbers = #tpu.dot_dimension_numbers<[1], [0], [0], [1], [0, 0, 1, 1], [], []>} : vector<16x32xf32>, vector<32x32xf32>, vector<16x32xf32> -> vector<16x32xf32>
      %c0_31 = arith.constant 0 : index
      %c65 = arith.constant 65 : index
      %c0_32 = arith.constant 0 : index
      %72 = vector.load %arg9[%c0_31, %c65, %c0_32] : memref<1x73x32xf32, #tpu.memory_space<vmem>>, vector<1x1x32xf32>
      %73 = vector.shape_cast %72 : vector<1x1x32xf32> to vector<1x32xf32>
      %74 = vector.broadcast %73 : vector<1x32xf32> to vector<16x32xf32>
      %75 = arith.addf %71, %74 : vector<16x32xf32>
      %76 = arith.addf %68, %75 : vector<16x32xf32>
      %c0_33 = arith.constant 0 : index
      %c69 = arith.constant 69 : index
      %c0_34 = arith.constant 0 : index
      %77 = vector.load %arg9[%c0_33, %c69, %c0_34] : memref<1x73x32xf32, #tpu.memory_space<vmem>>, vector<1x1x32xf32>
      %78 = vector.shape_cast %77 : vector<1x1x32xf32> to vector<1x32xf32>
      %c0_35 = arith.constant 0 : index
      %c70 = arith.constant 70 : index
      %c0_36 = arith.constant 0 : index
      %79 = vector.load %arg9[%c0_35, %c70, %c0_36] : memref<1x73x32xf32, #tpu.memory_space<vmem>>, vector<1x1x32xf32>
      %80 = vector.shape_cast %79 : vector<1x1x32xf32> to vector<1x32xf32>
      %cst_37 = arith.constant dense<0.000000e+00> : vector<16xf32>
      %81 = vector.multi_reduction <add>, %76, %cst_37 [1] : vector<16x32xf32> to vector<16xf32>
      %82 = vector.shape_cast %81 : vector<16xf32> to vector<16x1xf32>
      %cst_38 = arith.constant 3.200000e+01 : f32
      %83 = vector.broadcast %cst_38 : f32 to vector<16x1xf32>
      %84 = arith.divf %82, %83 : vector<16x1xf32>
      %85 = vector.broadcast %84 : vector<16x1xf32> to vector<16x32xf32>
      %86 = arith.subf %76, %85 : vector<16x32xf32>
      %87 = arith.mulf %86, %86 : vector<16x32xf32>
      %cst_39 = arith.constant dense<0.000000e+00> : vector<16xf32>
      %88 = vector.multi_reduction <add>, %87, %cst_39 [1] : vector<16x32xf32> to vector<16xf32>
      %89 = vector.shape_cast %88 : vector<16xf32> to vector<16x1xf32>
      %cst_40 = arith.constant 3.200000e+01 : f32
      %90 = vector.broadcast %cst_40 : f32 to vector<16x1xf32>
      %91 = arith.divf %89, %90 : vector<16x1xf32>
      %92 = vector.broadcast %84 : vector<16x1xf32> to vector<16x32xf32>
      %93 = arith.subf %76, %92 : vector<16x32xf32>
      %cst_41 = arith.constant 9.99999974E-6 : f32
      %94 = vector.broadcast %cst_41 : f32 to vector<16x1xf32>
      %95 = arith.addf %91, %94 : vector<16x1xf32>
      %96 = math.rsqrt %95 : vector<16x1xf32>
      %97 = vector.broadcast %96 : vector<16x1xf32> to vector<16x32xf32>
      %98 = arith.mulf %93, %97 : vector<16x32xf32>
      %99 = vector.broadcast %78 : vector<1x32xf32> to vector<16x32xf32>
      %100 = arith.mulf %98, %99 : vector<16x32xf32>
      %101 = vector.broadcast %80 : vector<1x32xf32> to vector<16x32xf32>
      %102 = arith.addf %100, %101 : vector<16x32xf32>
      %103 = arith.truncf %102 : vector<16x32xf32> to vector<16x32xbf16>
      %c0_42 = arith.constant 0 : index
      %c0_43 = arith.constant 0 : index
      %c0_44 = arith.constant 0 : index
      %104 = vector.load %arg11[%c0_42, %c0_43, %c0_44] : memref<1x32x2048xbf16, #tpu.memory_space<vmem>>, vector<1x32x2048xbf16>
      %105 = vector.shape_cast %104 : vector<1x32x2048xbf16> to vector<32x2048xbf16>
      %cst_45 = arith.constant dense<0.000000e+00> : vector<16x2048xf32>
      %106 = tpu.matmul %103, %105, %cst_45 {dimension_numbers = #tpu.dot_dimension_numbers<[1], [0], [0], [1], [0, 0, 1, 1], [], []>} : vector<16x32xbf16>, vector<32x2048xbf16>, vector<16x2048xf32> -> vector<16x2048xf32>
      %c0_46 = arith.constant 0 : index
      %c0_47 = arith.constant 0 : index
      %c0_48 = arith.constant 0 : index
      %107 = vector.load %arg10[%c0_46, %c0_47, %c0_48] : memref<1x1x2048xf32, #tpu.memory_space<vmem>>, vector<1x1x2048xf32>
      %108 = vector.shape_cast %107 : vector<1x1x2048xf32> to vector<1x2048xf32>
      %109 = vector.broadcast %108 : vector<1x2048xf32> to vector<16x2048xf32>
      %110 = arith.addf %106, %109 : vector<16x2048xf32>
      %cst_49 = arith.constant 0.000000e+00 : f32
      %111 = vector.broadcast %cst_49 : f32 to vector<16x2048xf32>
      %112 = arith.maximumf %110, %111 : vector<16x2048xf32>
      %113 = arith.truncf %112 : vector<16x2048xf32> to vector<16x2048xbf16>
      %c0_50 = arith.constant 0 : index
      %c0_51 = arith.constant 0 : index
      %c0_52 = arith.constant 0 : index
      %114 = vector.load %arg12[%c0_50, %c0_51, %c0_52] : memref<1x2048x32xbf16, #tpu.memory_space<vmem>>, vector<1x2048x32xbf16>
      %115 = vector.shape_cast %114 : vector<1x2048x32xbf16> to vector<2048x32xbf16>
      %cst_53 = arith.constant dense<0.000000e+00> : vector<16x32xf32>
      %116 = tpu.matmul %113, %115, %cst_53 {dimension_numbers = #tpu.dot_dimension_numbers<[1], [0], [0], [1], [0, 0, 1, 1], [], []>} : vector<16x2048xbf16>, vector<2048x32xbf16>, vector<16x32xf32> -> vector<16x32xf32>
      %c0_54 = arith.constant 0 : index
      %c66 = arith.constant 66 : index
      %c0_55 = arith.constant 0 : index
      %117 = vector.load %arg9[%c0_54, %c66, %c0_55] : memref<1x73x32xf32, #tpu.memory_space<vmem>>, vector<1x1x32xf32>
      %118 = vector.shape_cast %117 : vector<1x1x32xf32> to vector<1x32xf32>
      %119 = vector.broadcast %118 : vector<1x32xf32> to vector<16x32xf32>
      %120 = arith.addf %116, %119 : vector<16x32xf32>
      %121 = arith.addf %102, %120 : vector<16x32xf32>
      %c0_56 = arith.constant 0 : index
      %c71 = arith.constant 71 : index
      %c0_57 = arith.constant 0 : index
      %122 = vector.load %arg9[%c0_56, %c71, %c0_57] : memref<1x73x32xf32, #tpu.memory_space<vmem>>, vector<1x1x32xf32>
      %123 = vector.shape_cast %122 : vector<1x1x32xf32> to vector<1x32xf32>
      %c0_58 = arith.constant 0 : index
      %c72 = arith.constant 72 : index
      %c0_59 = arith.constant 0 : index
      %124 = vector.load %arg9[%c0_58, %c72, %c0_59] : memref<1x73x32xf32, #tpu.memory_space<vmem>>, vector<1x1x32xf32>
      %125 = vector.shape_cast %124 : vector<1x1x32xf32> to vector<1x32xf32>
      %cst_60 = arith.constant dense<0.000000e+00> : vector<16xf32>
      %126 = vector.multi_reduction <add>, %121, %cst_60 [1] : vector<16x32xf32> to vector<16xf32>
      %127 = vector.shape_cast %126 : vector<16xf32> to vector<16x1xf32>
      %cst_61 = arith.constant 3.200000e+01 : f32
      %128 = vector.broadcast %cst_61 : f32 to vector<16x1xf32>
      %129 = arith.divf %127, %128 : vector<16x1xf32>
      %130 = vector.broadcast %129 : vector<16x1xf32> to vector<16x32xf32>
      %131 = arith.subf %121, %130 : vector<16x32xf32>
      %132 = arith.mulf %131, %131 : vector<16x32xf32>
      %cst_62 = arith.constant dense<0.000000e+00> : vector<16xf32>
      %133 = vector.multi_reduction <add>, %132, %cst_62 [1] : vector<16x32xf32> to vector<16xf32>
      %134 = vector.shape_cast %133 : vector<16xf32> to vector<16x1xf32>
      %cst_63 = arith.constant 3.200000e+01 : f32
      %135 = vector.broadcast %cst_63 : f32 to vector<16x1xf32>
      %136 = arith.divf %134, %135 : vector<16x1xf32>
      %137 = vector.broadcast %129 : vector<16x1xf32> to vector<16x32xf32>
      %138 = arith.subf %121, %137 : vector<16x32xf32>
      %cst_64 = arith.constant 9.99999974E-6 : f32
      %139 = vector.broadcast %cst_64 : f32 to vector<16x1xf32>
      %140 = arith.addf %136, %139 : vector<16x1xf32>
      %141 = math.rsqrt %140 : vector<16x1xf32>
      %142 = vector.broadcast %141 : vector<16x1xf32> to vector<16x32xf32>
      %143 = arith.mulf %138, %142 : vector<16x32xf32>
      %144 = vector.broadcast %123 : vector<1x32xf32> to vector<16x32xf32>
      %145 = arith.mulf %143, %144 : vector<16x32xf32>
      %146 = vector.broadcast %125 : vector<1x32xf32> to vector<16x32xf32>
      %147 = arith.addf %145, %146 : vector<16x32xf32>
      %c0_65 = arith.constant 0 : index
      %c0_66 = arith.constant 0 : index
      %148 = vector.load %arg15[%c0_65, %c0_66] : memref<16x32xf32, #tpu.memory_space<vmem>>, vector<16x32xf32>
      tpu.vector_store %arg15[%c0_65, %c0_66], %147 {strides = array<i32>} : memref<16x32xf32, #tpu.memory_space<vmem>>, vector<16x32xf32>,
      %c19_i32 = arith.constant 19 : i32
      %149 = arith.cmpi eq, %arg0, %c19_i32 : i32
      %150 = arith.extui %149 : i1 to i32
      %c0_i32_67 = arith.constant 0 : i32
      %151 = arith.cmpi ne, %150, %c0_i32_67 : i32
      scf.if %151 {
        %c4 = arith.constant 4 : index
        %c0_68 = arith.constant 0 : index
        %152 = vector.load %arg3[%c4, %c0_68] : memref<6x32xf32, #tpu.memory_space<vmem>>, vector<1x32xf32>
        %c5 = arith.constant 5 : index
        %c0_69 = arith.constant 0 : index
        %153 = vector.load %arg3[%c5, %c0_69] : memref<6x32xf32, #tpu.memory_space<vmem>>, vector<1x32xf32>
        %cst_70 = arith.constant dense<0.000000e+00> : vector<16xf32>
        %154 = vector.multi_reduction <add>, %147, %cst_70 [1] : vector<16x32xf32> to vector<16xf32>
        %155 = vector.shape_cast %154 : vector<16xf32> to vector<16x1xf32>
        %cst_71 = arith.constant 3.200000e+01 : f32
        %156 = vector.broadcast %cst_71 : f32 to vector<16x1xf32>
        %157 = arith.divf %155, %156 : vector<16x1xf32>
        %158 = vector.broadcast %157 : vector<16x1xf32> to vector<16x32xf32>
        %159 = arith.subf %147, %158 : vector<16x32xf32>
        %160 = arith.mulf %159, %159 : vector<16x32xf32>
        %cst_72 = arith.constant dense<0.000000e+00> : vector<16xf32>
        %161 = vector.multi_reduction <add>, %160, %cst_72 [1] : vector<16x32xf32> to vector<16xf32>
        %162 = vector.shape_cast %161 : vector<16xf32> to vector<16x1xf32>
        %cst_73 = arith.constant 3.200000e+01 : f32
        %163 = vector.broadcast %cst_73 : f32 to vector<16x1xf32>
        %164 = arith.divf %162, %163 : vector<16x1xf32>
        %165 = vector.broadcast %157 : vector<16x1xf32> to vector<16x32xf32>
        %166 = arith.subf %147, %165 : vector<16x32xf32>
        %cst_74 = arith.constant 9.99999974E-6 : f32
        %167 = vector.broadcast %cst_74 : f32 to vector<16x1xf32>
        %168 = arith.addf %164, %167 : vector<16x1xf32>
        %169 = math.rsqrt %168 : vector<16x1xf32>
        %170 = vector.broadcast %169 : vector<16x1xf32> to vector<16x32xf32>
        %171 = arith.mulf %166, %170 : vector<16x32xf32>
        %172 = vector.broadcast %152 : vector<1x32xf32> to vector<16x32xf32>
        %173 = arith.mulf %171, %172 : vector<16x32xf32>
        %174 = vector.broadcast %153 : vector<1x32xf32> to vector<16x32xf32>
        %175 = arith.addf %173, %174 : vector<16x32xf32>
        %c0_75 = arith.constant 0 : index
        %c0_76 = arith.constant 0 : index
        %176 = vector.load %arg4[%c0_75, %c0_76] : memref<33x128xf32, #tpu.memory_space<vmem>>, vector<32x128xf32>
        %cst_77 = arith.constant dense<0.000000e+00> : vector<16x128xf32>
        %177 = tpu.matmul %175, %176, %cst_77 {dimension_numbers = #tpu.dot_dimension_numbers<[1], [0], [0], [1], [0, 0, 1, 1], [], []>} : vector<16x32xf32>, vector<32x128xf32>, vector<16x128xf32> -> vector<16x128xf32>
        %c32_78 = arith.constant 32 : index
        %c0_79 = arith.constant 0 : index
        %178 = vector.load %arg4[%c32_78, %c0_79] : memref<33x128xf32, #tpu.memory_space<vmem>>, vector<1x128xf32>
        %179 = vector.broadcast %178 : vector<1x128xf32> to vector<16x128xf32>
        %180 = arith.addf %177, %179 : vector<16x128xf32>
        %c0_80 = arith.constant 0 : index
        %c0_81 = arith.constant 0 : index
        %181 = vector.load %arg13[%c0_80, %c0_81] : memref<16x128xf32, #tpu.memory_space<vmem>>, vector<16x128xf32>
        tpu.vector_store %arg13[%c0_80, %c0_81], %180 {strides = array<i32>} : memref<16x128xf32, #tpu.memory_space<vmem>>, vector<16x128xf32>,
      } else {
      }
    } else {
    }
    return
  }
  func.func @transform_0(%arg0: i32) -> (i32, i32) {
    %c0_i32 = arith.constant 0 : i32
    %c0_i32_0 = arith.constant 0 : i32
    %c0_i32_1 = arith.constant 0 : i32
    return %c0_i32, %c0_i32_0 : i32, i32
  }
  func.func @transform_1(%arg0: i32) -> (i32, i32) {
    %c0_i32 = arith.constant 0 : i32
    %c0_i32_0 = arith.constant 0 : i32
    %c0_i32_1 = arith.constant 0 : i32
    return %c0_i32, %c0_i32_0 : i32, i32
  }
  func.func @transform_2(%arg0: i32) -> (i32, i32) {
    %c0_i32 = arith.constant 0 : i32
    %c0_i32_0 = arith.constant 0 : i32
    %c0_i32_1 = arith.constant 0 : i32
    return %c0_i32, %c0_i32_0 : i32, i32
  }
  func.func @transform_3(%arg0: i32) -> (i32, i32) {
    %c0_i32 = arith.constant 0 : i32
    %c0_i32_0 = arith.constant 0 : i32
    %c0_i32_1 = arith.constant 0 : i32
    return %c0_i32, %c0_i32_0 : i32, i32
  }
  func.func @transform_4(%arg0: i32) -> (i32, i32, i32) {
    %c9_i32 = arith.constant 9 : i32
    %0 = arith.minsi %arg0, %c9_i32 : i32
    %c0_i32 = arith.constant 0 : i32
    %c0_i32_0 = arith.constant 0 : i32
    %c0_i32_1 = arith.constant 0 : i32
    return %0, %c0_i32, %c0_i32_0 : i32, i32, i32
  }
  func.func @transform_5(%arg0: i32) -> (i32, i32, i32) {
    %c9_i32 = arith.constant 9 : i32
    %0 = arith.minsi %arg0, %c9_i32 : i32
    %c0_i32 = arith.constant 0 : i32
    %c0_i32_0 = arith.constant 0 : i32
    %c0_i32_1 = arith.constant 0 : i32
    return %0, %c0_i32, %c0_i32_0 : i32, i32, i32
  }
  func.func @transform_6(%arg0: i32) -> (i32, i32, i32) {
    %c9_i32 = arith.constant 9 : i32
    %0 = arith.minsi %arg0, %c9_i32 : i32
    %c0_i32 = arith.constant 0 : i32
    %c0_i32_0 = arith.constant 0 : i32
    %c0_i32_1 = arith.constant 0 : i32
    return %0, %c0_i32, %c0_i32_0 : i32, i32, i32
  }
  func.func @transform_7(%arg0: i32) -> (i32, i32, i32) {
    %c9_i32 = arith.constant 9 : i32
    %0 = arith.minsi %arg0, %c9_i32 : i32
    %c0_i32 = arith.constant 0 : i32
    %c0_i32_0 = arith.constant 0 : i32
    %c0_i32_1 = arith.constant 0 : i32
    return %0, %c0_i32, %c0_i32_0 : i32, i32, i32
  }
  func.func @transform_8(%arg0: i32) -> (i32, i32, i32) {
    %c10_i32 = arith.constant 10 : i32
    %0 = arith.subi %arg0, %c10_i32 : i32
    %c0_i32 = arith.constant 0 : i32
    %1 = arith.maxsi %0, %c0_i32 : i32
    %c0_i32_0 = arith.constant 0 : i32
    %c0_i32_1 = arith.constant 0 : i32
    %c0_i32_2 = arith.constant 0 : i32
    return %1, %c0_i32_0, %c0_i32_1 : i32, i32, i32
  }
  func.func @transform_9(%arg0: i32) -> (i32, i32, i32) {
    %c10_i32 = arith.constant 10 : i32
    %0 = arith.subi %arg0, %c10_i32 : i32
    %c0_i32 = arith.constant 0 : i32
    %1 = arith.maxsi %0, %c0_i32 : i32
    %c0_i32_0 = arith.constant 0 : i32
    %c0_i32_1 = arith.constant 0 : i32
    %c0_i32_2 = arith.constant 0 : i32
    return %1, %c0_i32_0, %c0_i32_1 : i32, i32, i32
  }
  func.func @transform_10(%arg0: i32) -> (i32, i32, i32) {
    %c10_i32 = arith.constant 10 : i32
    %0 = arith.subi %arg0, %c10_i32 : i32
    %c0_i32 = arith.constant 0 : i32
    %1 = arith.maxsi %0, %c0_i32 : i32
    %c0_i32_0 = arith.constant 0 : i32
    %c0_i32_1 = arith.constant 0 : i32
    %c0_i32_2 = arith.constant 0 : i32
    return %1, %c0_i32_0, %c0_i32_1 : i32, i32, i32
  }
  func.func @transform_11(%arg0: i32) -> (i32, i32, i32) {
    %c10_i32 = arith.constant 10 : i32
    %0 = arith.subi %arg0, %c10_i32 : i32
    %c0_i32 = arith.constant 0 : i32
    %1 = arith.maxsi %0, %c0_i32 : i32
    %c0_i32_0 = arith.constant 0 : i32
    %c0_i32_1 = arith.constant 0 : i32
    %c0_i32_2 = arith.constant 0 : i32
    return %1, %c0_i32_0, %c0_i32_1 : i32, i32, i32
  }
  func.func @transform_12(%arg0: i32) -> (i32, i32) {
    %c0_i32 = arith.constant 0 : i32
    %c0_i32_0 = arith.constant 0 : i32
    %c0_i32_1 = arith.constant 0 : i32
    return %c0_i32, %c0_i32_0 : i32, i32
  }
}

</mosaic_0001>

<llo_original>
// kernel: pallas_forward.1
$region0: #{pallas_forward.1}
  #allocation0 [shape = 'u32[]', space=smem, size = 0x4, offset = 0x4, fixed_abs, tag = 'smem constant byte address 0x4 - core index']
  #allocation1 [shape = 'u32[144,128]{1,0:T(1,128)}', space=vmem, size = 0x12000, scoped, tag = 'internal scratch']
  #allocation2 [shape = 'f32[16,32]{1,0:T(8,128)}', space=vmem, size = 0x2000, scoped, tag = 'scratch operand']
  #allocation3 [shape = 'f32[16,32]{1,0:T(8,128)}', space=vmem, size = 0x2000, scoped, tag = 'scratch operand']
  %s0 = inlined_call_operand.vmem [shape: f32[16,1], index: 0, kind: input, shape index: {}]
  %s1 = inlined_call_operand.vmem [shape: f32[16,1], index: 1, kind: input, shape index: {}]
  %s2 = inlined_call_operand.vmem [shape: f32[6,32], index: 2, kind: input, shape index: {}]
  %s3 = inlined_call_operand.vmem [shape: f32[33,128], index: 3, kind: input, shape index: {}]
  %s4 = inlined_call_operand.vmem [shape: f32[10,38,32], index: 4, kind: input, shape index: {}]
  %s5 = inlined_call_operand.vmem [shape: f32[10,1,2048], index: 5, kind: input, shape index: {}]
  %s6 = inlined_call_operand.vmem [shape: bf16[10,32,2048], index: 6, kind: input, shape index: {}]
  %s7 = inlined_call_operand.vmem [shape: bf16[10,2048,32], index: 7, kind: input, shape index: {}]
  %s8 = inlined_call_operand.vmem [shape: f32[10,73,32], index: 8, kind: input, shape index: {}]
  %s9 = inlined_call_operand.vmem [shape: f32[10,1,2048], index: 9, kind: input, shape index: {}]
  %s10 = inlined_call_operand.vmem [shape: bf16[10,32,2048], index: 10, kind: input, shape index: {}]
  %s11 = inlined_call_operand.vmem [shape: bf16[10,2048,32], index: 11, kind: input, shape index: {}]
  %s12 = inlined_call_operand.vmem [shape: f32[16,128], index: 12, kind: output, shape index: {}]
  %s13 = sld [smem:[#allocation0]]
  $region97: #{pallas_forward.1} parent=0
    _
  %s15 = ssub.s32 1, %s13
  %s16 = scalar_select 0, %s15, %s13
  loop: start=0, step=1, limit=22
  $region2: #{pallas_forward.1} parent=0 // loop_pre_header
    _
  $region3: #{pallas_forward.1} parent=0 // loop_header
    %s18 = sphi 0, %s22
    %p19 = scmp.ge.s32.totalorder %s18, 22
    %s26 = sphi 0, %s26
    %s28 = sphi 0, %s26
    %s29 = sphi 0, %s28
    %s43 = sphi 0, %s29
    %s47 = sphi 0, %s47
    %s49 = sphi 0, %s47
    %s50 = sphi 0, %s49
    %s64 = sphi 0, %s50
    %s68 = sphi 0, %s68
    %s70 = sphi 0, %s68
    %s71 = sphi 0, %s70
    %s85 = sphi 0, %s71
    %s89 = sphi 0, %s89
    %s91 = sphi 0, %s89
    %s92 = sphi 0, %s91
    %s106 = sphi 0, %s92
    %s116 = sphi 0, %s118
    %s119 = sphi 0, %s116
    %s120 = sphi 0, %s119
    %s136 = sphi 0, %s120
    %s146 = sphi 0, %s148
    %s149 = sphi 0, %s146
    %s150 = sphi 0, %s149
    %s166 = sphi 0, %s150
    %s176 = sphi 0, %s178
    %s179 = sphi 0, %s176
    %s180 = sphi 0, %s179
    %s196 = sphi 0, %s180
    %s206 = sphi 0, %s208
    %s209 = sphi 0, %s206
    %s210 = sphi 0, %s209
    %s226 = sphi 0, %s210
    %s238 = sphi 0, %s240
    %s241 = sphi 0, %s238
    %s242 = sphi 0, %s241
    %s258 = sphi 0, %s242
    %s270 = sphi 0, %s272
    %s273 = sphi 0, %s270
    %s274 = sphi 0, %s273
    %s290 = sphi 0, %s274
    %s302 = sphi 0, %s304
    %s305 = sphi 0, %s302
    %s306 = sphi 0, %s305
    %s322 = sphi 0, %s306
    %s334 = sphi 0, %s336
    %s337 = sphi 0, %s334
    %s338 = sphi 0, %s337
    %s354 = sphi 0, %s338
    %s358 = sphi 0, %s358
    %s360 = sphi 0, %s358
    %s361 = sphi 0, %s360
    %s375 = sphi 0, %s361
  $region4: #{pallas_forward.1} parent=0 // loop_header_branch
    %21 = sbr.rel (%p19) target = $region8
  $region5: #{pallas_forward.1} parent=0 // loop_body
    %s23 = ssub.s32 %s18, 1
    %s24 = ssub.s32 %s18, 2
    %s25 = sadd.s32 %s18, 1
    %s27 = sadd.s32 %s26, 1
    %p30 = scmp.eq.s32.totalorder %s18, 19
    %p31 = scmp.ne.s32.totalorder %s26, %s28
    %p32 = scmp.eq.s32.totalorder %s18, 0
    %p33 = por %p31, %p32
    %p34 = scmp.ne.s32.totalorder %s26, %s28
    %p35 = scmp.eq.s32.totalorder %s23, 19
    %p36 = por %p34, %p35
    %p37 = scmp.ne.s32.totalorder %s28, %s29
    %p38 = scmp.eq.s32.totalorder %s23, 0
    %p39 = por %p37, %p38
    %p40 = scmp.ne.s32.totalorder %s28, %s29
    %p41 = scmp.eq.s32.totalorder %s24, 19
    %p42 = por %p40, %p41
    %p44 = scmp.ne.s32.totalorder %s29, %s43
    %p45 = scmp.eq.s32.totalorder %s24, 0
    %p46 = por %p44, %p45
    %s48 = sadd.s32 %s47, 1
    %p51 = scmp.eq.s32.totalorder %s18, 19
    %p52 = scmp.ne.s32.totalorder %s47, %s49
    %p53 = scmp.eq.s32.totalorder %s18, 0
    %p54 = por %p52, %p53
    %p55 = scmp.ne.s32.totalorder %s47, %s49
    %p56 = scmp.eq.s32.totalorder %s23, 19
    %p57 = por %p55, %p56
    %p58 = scmp.ne.s32.totalorder %s49, %s50
    %p59 = scmp.eq.s32.totalorder %s23, 0
    %p60 = por %p58, %p59
    %p61 = scmp.ne.s32.totalorder %s49, %s50
    %p62 = scmp.eq.s32.totalorder %s24, 19
    %p63 = por %p61, %p62
    %p65 = scmp.ne.s32.totalorder %s50, %s64
    %p66 = scmp.eq.s32.totalorder %s24, 0
    %p67 = por %p65, %p66
    %s69 = sadd.s32 %s68, 1
    %p72 = scmp.eq.s32.totalorder %s18, 19
    %p73 = scmp.ne.s32.totalorder %s68, %s70
    %p74 = scmp.eq.s32.totalorder %s18, 0
    %p75 = por %p73, %p74
    %p76 = scmp.ne.s32.totalorder %s68, %s70
    %p77 = scmp.eq.s32.totalorder %s23, 19
    %p78 = por %p76, %p77
    %p79 = scmp.ne.s32.totalorder %s70, %s71
    %p80 = scmp.eq.s32.totalorder %s23, 0
    %p81 = por %p79, %p80
    %p82 = scmp.ne.s32.totalorder %s70, %s71
    %p83 = scmp.eq.s32.totalorder %s24, 19
    %p84 = por %p82, %p83
    %p86 = scmp.ne.s32.totalorder %s71, %s85
    %p87 = scmp.eq.s32.totalorder %s24, 0
    %p88 = por %p86, %p87
    %s90 = sadd.s32 %s89, 1
    %p93 = scmp.eq.s32.totalorder %s18, 19
    %p94 = scmp.ne.s32.totalorder %s89, %s91
    %p95 = scmp.eq.s32.totalorder %s18, 0
    %p96 = por %p94, %p95
    %p97 = scmp.ne.s32.totalorder %s89, %s91
    %p98 = scmp.eq.s32.totalorder %s23, 19
    %p99 = por %p97, %p98
    %p100 = scmp.ne.s32.totalorder %s91, %s92
    %p101 = scmp.eq.s32.totalorder %s23, 0
    %p102 = por %p100, %p101
    %p103 = scmp.ne.s32.totalorder %s91, %s92
    %p104 = scmp.eq.s32.totalorder %s24, 19
    %p105 = por %p103, %p104
    %p107 = scmp.ne.s32.totalorder %s92, %s106
    %p108 = scmp.eq.s32.totalorder %s24, 0
    %p109 = por %p107, %p108
    %p110 = scmp.lt.s32.totalorder %s18, 9
    %s111 = scalar_select %p110, %s18, 9
    %p112 = scmp.lt.s32.totalorder %s25, 9
    %s113 = scalar_select %p112, %s25, 9
    %s114 = ssub.s32 %s111, %s113
    %p115 = scmp.eq.s32.totalorder %s114, 0
    %s117 = sadd.s32 %s116, 1
    %s118 = scalar_select %p115, %s116, %s117
    %p121 = pneg %p115
    %p122 = scmp.eq.s32.totalorder %s18, 19
    %p123 = por %p121, %p122
    %p124 = scmp.ne.s32.totalorder %s116, %s119
    %p125 = scmp.eq.s32.totalorder %s18, 0
    %p126 = por %p124, %p125
    %p127 = scmp.ne.s32.totalorder %s116, %s119
    %p128 = scmp.eq.s32.totalorder %s23, 19
    %p129 = por %p127, %p128
    %p130 = scmp.ne.s32.totalorder %s119, %s120
    %p131 = scmp.eq.s32.totalorder %s23, 0
    %p132 = por %p130, %p131
    %p133 = scmp.ne.s32.totalorder %s119, %s120
    %p134 = scmp.eq.s32.totalorder %s24, 19
    %p135 = por %p133, %p134
    %p137 = scmp.ne.s32.totalorder %s120, %s136
    %p138 = scmp.eq.s32.totalorder %s24, 0
    %p139 = por %p137, %p138
    %p140 = scmp.lt.s32.totalorder %s18, 9
    %s141 = scalar_select %p140, %s18, 9
    %p142 = scmp.lt.s32.totalorder %s25, 9
    %s143 = scalar_select %p142, %s25, 9
    %s144 = ssub.s32 %s141, %s143
    %p145 = scmp.eq.s32.totalorder %s144, 0
    %s147 = sadd.s32 %s146, 1
    %s148 = scalar_select %p145, %s146, %s147
    %p151 = pneg %p145
    %p152 = scmp.eq.s32.totalorder %s18, 19
    %p153 = por %p151, %p152
    %p154 = scmp.ne.s32.totalorder %s146, %s149
    %p155 = scmp.eq.s32.totalorder %s18, 0
    %p156 = por %p154, %p155
    %p157 = scmp.ne.s32.totalorder %s146, %s149
    %p158 = scmp.eq.s32.totalorder %s23, 19
    %p159 = por %p157, %p158
    %p160 = scmp.ne.s32.totalorder %s149, %s150
    %p161 = scmp.eq.s32.totalorder %s23, 0
    %p162 = por %p160, %p161
    %p163 = scmp.ne.s32.totalorder %s149, %s150
    %p164 = scmp.eq.s32.totalorder %s24, 19
    %p165 = por %p163, %p164
    %p167 = scmp.ne.s32.totalorder %s150, %s166
    %p168 = scmp.eq.s32.totalorder %s24, 0
    %p169 = por %p167, %p168
    %p170 = scmp.lt.s32.totalorder %s18, 9
    %s171 = scalar_select %p170, %s18, 9
    %p172 = scmp.lt.s32.totalorder %s25, 9
    %s173 = scalar_select %p172, %s25, 9
    %s174 = ssub.s32 %s171, %s173
    %p175 = scmp.eq.s32.totalorder %s174, 0
    %s177 = sadd.s32 %s176, 1
    %s178 = scalar_select %p175, %s176, %s177
    %p181 = pneg %p175
    %p182 = scmp.eq.s32.totalorder %s18, 19
    %p183 = por %p181, %p182
    %p184 = scmp.ne.s32.totalorder %s176, %s179
    %p185 = scmp.eq.s32.totalorder %s18, 0
    %p186 = por %p184, %p185
    %p187 = scmp.ne.s32.totalorder %s176, %s179
    %p188 = scmp.eq.s32.totalorder %s23, 19
    %p189 = por %p187, %p188
    %p190 = scmp.ne.s32.totalorder %s179, %s180
    %p191 = scmp.eq.s32.totalorder %s23, 0
    %p192 = por %p190, %p191
    %p193 = scmp.ne.s32.totalorder %s179, %s180
    %p194 = scmp.eq.s32.totalorder %s24, 19
    %p195 = por %p193, %p194
    %p197 = scmp.ne.s32.totalorder %s180, %s196
    %p198 = scmp.eq.s32.totalorder %s24, 0
    %p199 = por %p197, %p198
    %p200 = scmp.lt.s32.totalorder %s18, 9
    %s201 = scalar_select %p200, %s18, 9
    %p202 = scmp.lt.s32.totalorder %s25, 9
    %s203 = scalar_select %p202, %s25, 9
    %s204 = ssub.s32 %s201, %s203
    %p205 = scmp.eq.s32.totalorder %s204, 0
    %s207 = sadd.s32 %s206, 1
    %s208 = scalar_select %p205, %s206, %s207
    %p211 = pneg %p205
    %p212 = scmp.eq.s32.totalorder %s18, 19
    %p213 = por %p211, %p212
    %p214 = scmp.ne.s32.totalorder %s206, %s209
    %p215 = scmp.eq.s32.totalorder %s18, 0
    %p216 = por %p214, %p215
    %p217 = scmp.ne.s32.totalorder %s206, %s209
    %p218 = scmp.eq.s32.totalorder %s23, 19
    %p219 = por %p217, %p218
    %p220 = scmp.ne.s32.totalorder %s209, %s210
    %p221 = scmp.eq.s32.totalorder %s23, 0
    %p222 = por %p220, %p221
    %p223 = scmp.ne.s32.totalorder %s209, %s210
    %p224 = scmp.eq.s32.totalorder %s24, 19
    %p225 = por %p223, %p224
    %p227 = scmp.ne.s32.totalorder %s210, %s226
    %p228 = scmp.eq.s32.totalorder %s24, 0
    %p229 = por %p227, %p228
    %s230 = ssub.s32 %s18, 10
    %p231 = scmp.gt.s32.totalorder %s230, 0
    %s232 = scalar_select %p231, %s230, 0
    %s233 = ssub.s32 %s25, 10
    %p234 = scmp.gt.s32.totalorder %s233, 0
    %s235 = scalar_select %p234, %s233, 0
    %s236 = ssub.s32 %s232, %s235
    %p237 = scmp.eq.s32.totalorder %s236, 0
    %s239 = sadd.s32 %s238, 1
    %s240 = scalar_select %p237, %s238, %s239
    %p243 = pneg %p237
    %p244 = scmp.eq.s32.totalorder %s18, 19
    %p245 = por %p243, %p244
    %p246 = scmp.ne.s32.totalorder %s238, %s241
    %p247 = scmp.eq.s32.totalorder %s18, 0
    %p248 = por %p246, %p247
    %p249 = scmp.ne.s32.totalorder %s238, %s241
    %p250 = scmp.eq.s32.totalorder %s23, 19
    %p251 = por %p249, %p250
    %p252 = scmp.ne.s32.totalorder %s241, %s242
    %p253 = scmp.eq.s32.totalorder %s23, 0
    %p254 = por %p252, %p253
    %p255 = scmp.ne.s32.totalorder %s241, %s242
    %p256 = scmp.eq.s32.totalorder %s24, 19
    %p257 = por %p255, %p256
    %p259 = scmp.ne.s32.totalorder %s242, %s258
    %p260 = scmp.eq.s32.totalorder %s24, 0
    %p261 = por %p259, %p260
    %s262 = ssub.s32 %s18, 10
    %p263 = scmp.gt.s32.totalorder %s262, 0
    %s264 = scalar_select %p263, %s262, 0
    %s265 = ssub.s32 %s25, 10
    %p266 = scmp.gt.s32.totalorder %s265, 0
    %s267 = scalar_select %p266, %s265, 0
    %s268 = ssub.s32 %s264, %s267
    %p269 = scmp.eq.s32.totalorder %s268, 0
    %s271 = sadd.s32 %s270, 1
    %s272 = scalar_select %p269, %s270, %s271
    %p275 = pneg %p269
    %p276 = scmp.eq.s32.totalorder %s18, 19
    %p277 = por %p275, %p276
    %p278 = scmp.ne.s32.totalorder %s270, %s273
    %p279 = scmp.eq.s32.totalorder %s18, 0
    %p280 = por %p278, %p279
    %p281 = scmp.ne.s32.totalorder %s270, %s273
    %p282 = scmp.eq.s32.totalorder %s23, 19
    %p283 = por %p281, %p282
    %p284 = scmp.ne.s32.totalorder %s273, %s274
    %p285 = scmp.eq.s32.totalorder %s23, 0
    %p286 = por %p284, %p285
    %p287 = scmp.ne.s32.totalorder %s273, %s274
    %p288 = scmp.eq.s32.totalorder %s24, 19
    %p289 = por %p287, %p288
    %p291 = scmp.ne.s32.totalorder %s274, %s290
    %p292 = scmp.eq.s32.totalorder %s24, 0
    %p293 = por %p291, %p292
    %s294 = ssub.s32 %s18, 10
    %p295 = scmp.gt.s32.totalorder %s294, 0
    %s296 = scalar_select %p295, %s294, 0
    %s297 = ssub.s32 %s25, 10
    %p298 = scmp.gt.s32.totalorder %s297, 0
    %s299 = scalar_select %p298, %s297, 0
    %s300 = ssub.s32 %s296, %s299
    %p301 = scmp.eq.s32.totalorder %s300, 0
    %s303 = sadd.s32 %s302, 1
    %s304 = scalar_select %p301, %s302, %s303
    %p307 = pneg %p301
    %p308 = scmp.eq.s32.totalorder %s18, 19
    %p309 = por %p307, %p308
    %p310 = scmp.ne.s32.totalorder %s302, %s305
    %p311 = scmp.eq.s32.totalorder %s18, 0
    %p312 = por %p310, %p311
    %p313 = scmp.ne.s32.totalorder %s302, %s305
    %p314 = scmp.eq.s32.totalorder %s23, 19
    %p315 = por %p313, %p314
    %p316 = scmp.ne.s32.totalorder %s305, %s306
    %p317 = scmp.eq.s32.totalorder %s23, 0
    %p318 = por %p316, %p317
    %p319 = scmp.ne.s32.totalorder %s305, %s306
    %p320 = scmp.eq.s32.totalorder %s24, 19
    %p321 = por %p319, %p320
    %p323 = scmp.ne.s32.totalorder %s306, %s322
    %p324 = scmp.eq.s32.totalorder %s24, 0
    %p325 = por %p323, %p324
    %s326 = ssub.s32 %s18, 10
    %p327 = scmp.gt.s32.totalorder %s326, 0
    %s328 = scalar_select %p327, %s326, 0
    %s329 = ssub.s32 %s25, 10
    %p330 = scmp.gt.s32.totalorder %s329, 0
    %s331 = scalar_select %p330, %s329, 0
    %s332 = ssub.s32 %s328, %s331
    %p333 = scmp.eq.s32.totalorder %s332, 0
    %s335 = sadd.s32 %s334, 1
    %s336 = scalar_select %p333, %s334, %s335
    %p339 = pneg %p333
    %p340 = scmp.eq.s32.totalorder %s18, 19
    %p341 = por %p339, %p340
    %p342 = scmp.ne.s32.totalorder %s334, %s337
    %p343 = scmp.eq.s32.totalorder %s18, 0
    %p344 = por %p342, %p343
    %p345 = scmp.ne.s32.totalorder %s334, %s337
    %p346 = scmp.eq.s32.totalorder %s23, 19
    %p347 = por %p345, %p346
    %p348 = scmp.ne.s32.totalorder %s337, %s338
    %p349 = scmp.eq.s32.totalorder %s23, 0
    %p350 = por %p348, %p349
    %p351 = scmp.ne.s32.totalorder %s337, %s338
    %p352 = scmp.eq.s32.totalorder %s24, 19
    %p353 = por %p351, %p352
    %p355 = scmp.ne.s32.totalorder %s338, %s354
    %p356 = scmp.eq.s32.totalorder %s24, 0
    %p357 = por %p355, %p356
    %s359 = sadd.s32 %s358, 1
    %p362 = scmp.eq.s32.totalorder %s18, 19
    %p363 = scmp.ne.s32.totalorder %s358, %s360
    %p364 = scmp.eq.s32.totalorder %s18, 0
    %p365 = por %p363, %p364
    %p366 = scmp.ne.s32.totalorder %s358, %s360
    %p367 = scmp.eq.s32.totalorder %s23, 19
    %p368 = por %p366, %p367
    %p369 = scmp.ne.s32.totalorder %s360, %s361
    %p370 = scmp.eq.s32.totalorder %s23, 0
    %p371 = por %p369, %p370
    %p372 = scmp.ne.s32.totalorder %s360, %s361
    %p373 = scmp.eq.s32.totalorder %s24, 19
    %p374 = por %p372, %p373
    %p376 = scmp.ne.s32.totalorder %s361, %s375
    %p377 = scmp.eq.s32.totalorder %s24, 0
    %p378 = por %p376, %p377
    %p379 = scmp.le.s32.totalorder 1, %s18
    %p380 = scmp.lt.s32.totalorder %s18, 21
    %p381 = pnand %p379, %p380
    %p382 = pneg %p381
    // Predicated region
    $region9: #{pallas_forward.1} parent=5 // pred_check
      _
    $region10: #{pallas_forward.1} parent=5 // pred_check_branch
      %384 = sbr.rel (%p381) target = $region12
    $region11: #{pallas_forward.1} parent=5 // pred_region
      %s385 = ssub.s32 %s18, 1
      // Predicated region
      $region13: #{pallas_forward.1} parent=11 // pred_check
        %p386 = pneg %p39
      $region14: #{pallas_forward.1} parent=11 // pred_check_branch
        %388 = sbr.rel (%p386) target = $region16
      $region15: #{pallas_forward.1} parent=11 // pred_region
        _
      $region16: #{pallas_forward.1} parent=11 // pred_fallthru
        _
      // Predicated region
      $region17: #{pallas_forward.1} parent=11 // pred_check
        %p389 = pneg %p60
      $region18: #{pallas_forward.1} parent=11 // pred_check_branch
        %391 = sbr.rel (%p389) target = $region20
      $region19: #{pallas_forward.1} parent=11 // pred_region
        _
      $region20: #{pallas_forward.1} parent=11 // pred_fallthru
        _
      // Predicated region
      $region21: #{pallas_forward.1} parent=11 // pred_check
        %p392 = pneg %p81
      $region22: #{pallas_forward.1} parent=11 // pred_check_branch
        %394 = sbr.rel (%p392) target = $region24
      $region23: #{pallas_forward.1} parent=11 // pred_region
        _
      $region24: #{pallas_forward.1} parent=11 // pred_fallthru
        _
      // Predicated region
      $region25: #{pallas_forward.1} parent=11 // pred_check
        %p395 = pneg %p102
      $region26: #{pallas_forward.1} parent=11 // pred_check_branch
        %397 = sbr.rel (%p395) target = $region28
      $region27: #{pallas_forward.1} parent=11 // pred_region
        _
      $region28: #{pallas_forward.1} parent=11 // pred_fallthru
        _
    $region12: #{pallas_forward.1} parent=5 // pred_fallthru
      _
    %p398 = scmp.lt.s32.totalorder %s18, 20
    // Predicated region
    $region29: #{pallas_forward.1} parent=5 // pred_check
      %p399 = pneg %p398
    $region30: #{pallas_forward.1} parent=5 // pred_check_branch
      %401 = sbr.rel (%p399) target = $region32
    $region31: #{pallas_forward.1} parent=5 // pred_region
      // Predicated region
      $region33: #{pallas_forward.1} parent=31 // pred_check
        %p402 = pneg %p126
      $region34: #{pallas_forward.1} parent=31 // pred_check_branch
        %404 = sbr.rel (%p402) target = $region36
      $region35: #{pallas_forward.1} parent=31 // pred_region
        %p405 = scmp.lt.s32.totalorder %s18, 9
        %s406 = scalar_select %p405, %s18, 9
        %p407 = scmp.lt.s32.totalorder %s406, 9
        %s408 = scalar_select %p407, %s406, 9
        %s409 = smul.addr %s408, 5
        %s410 = smul.addr %s409, 8
        %s411 = scalar_lea.vmem %s4, %s410
        %p412 = scmp.lt.s32.totalorder %s18, 9
        %s413 = scalar_select %p412, %s18, 9
      $region36: #{pallas_forward.1} parent=31 // pred_fallthru
        _
      // Predicated region
      $region37: #{pallas_forward.1} parent=31 // pred_check
        %p414 = pneg %p156
      $region38: #{pallas_forward.1} parent=31 // pred_check_branch
        %416 = sbr.rel (%p414) target = $region40
      $region39: #{pallas_forward.1} parent=31 // pred_region
        %p417 = scmp.lt.s32.totalorder %s18, 9
        %s418 = scalar_select %p417, %s18, 9
        %p419 = scmp.lt.s32.totalorder %s418, 9
        %s420 = scalar_select %p419, %s418, 9
        %s421 = smul.addr %s420, 16
        %s422 = scalar_lea.vmem %s5, %s421
        %p423 = scmp.lt.s32.totalorder %s18, 9
        %s424 = scalar_select %p423, %s18, 9
      $region40: #{pallas_forward.1} parent=31 // pred_fallthru
        _
      // Predicated region
      $region41: #{pallas_forward.1} parent=31 // pred_check
        %p425 = pneg %p186
      $region42: #{pallas_forward.1} parent=31 // pred_check_branch
        %427 = sbr.rel (%p425) target = $region44
      $region43: #{pallas_forward.1} parent=31 // pred_region
        %p428 = scmp.lt.s32.totalorder %s18, 9
        %s429 = scalar_select %p428, %s18, 9
        %p430 = scmp.lt.s32.totalorder %s429, 9
        %s431 = scalar_select %p430, %s429, 9
        %s432 = smul.addr %s431, 64
        %s433 = smul.addr %s432, 4
        %s434 = scalar_lea.vmem %s6, %s433
        %p435 = scmp.lt.s32.totalorder %s18, 9
        %s436 = scalar_select %p435, %s18, 9
      $region44: #{pallas_forward.1} parent=31 // pred_fallthru
        _
      // Predicated region
      $region45: #{pallas_forward.1} parent=31 // pred_check
        %p437 = pneg %p216
      $region46: #{pallas_forward.1} parent=31 // pred_check_branch
        %439 = sbr.rel (%p437) target = $region48
      $region47: #{pallas_forward.1} parent=31 // pred_region
        %p440 = scmp.lt.s32.totalorder %s18, 9
        %s441 = scalar_select %p440, %s18, 9
        %p442 = scmp.lt.s32.totalorder %s441, 9
        %s443 = scalar_select %p442, %s441, 9
        %s444 = smul.addr %s443, 256
        %s445 = smul.addr %s444, 4
        %s446 = scalar_lea.vmem %s7, %s445
        %p447 = scmp.lt.s32.totalorder %s18, 9
        %s448 = scalar_select %p447, %s18, 9
      $region48: #{pallas_forward.1} parent=31 // pred_fallthru
        _
      // Predicated region
      $region49: #{pallas_forward.1} parent=31 // pred_check
        %p449 = pneg %p248
      $region50: #{pallas_forward.1} parent=31 // pred_check_branch
        %451 = sbr.rel (%p449) target = $region52
      $region51: #{pallas_forward.1} parent=31 // pred_region
        %s452 = ssub.s32 %s18, 10
        %p453 = scmp.gt.s32.totalorder %s452, 0
        %s454 = scalar_select %p453, %s452, 0
        %p455 = scmp.lt.s32.totalorder %s454, 9
        %s456 = scalar_select %p455, %s454, 9
        %s457 = smul.addr %s456, 10
        %s458 = smul.addr %s457, 8
        %s459 = scalar_lea.vmem %s8, %s458
        %s460 = ssub.s32 %s18, 10
        %p461 = scmp.gt.s32.totalorder %s460, 0
        %s462 = scalar_select %p461, %s460, 0
      $region52: #{pallas_forward.1} parent=31 // pred_fallthru
        _
      // Predicated region
      $region53: #{pallas_forward.1} parent=31 // pred_check
        %p463 = pneg %p280
      $region54: #{pallas_forward.1} parent=31 // pred_check_branch
        %465 = sbr.rel (%p463) target = $region56
      $region55: #{pallas_forward.1} parent=31 // pred_region
        %s466 = ssub.s32 %s18, 10
        %p467 = scmp.gt.s32.totalorder %s466, 0
        %s468 = scalar_select %p467, %s466, 0
        %p469 = scmp.lt.s32.totalorder %s468, 9
        %s470 = scalar_select %p469, %s468, 9
        %s471 = smul.addr %s470, 16
        %s472 = scalar_lea.vmem %s9, %s471
        %s473 = ssub.s32 %s18, 10
        %p474 = scmp.gt.s32.totalorder %s473, 0
        %s475 = scalar_select %p474, %s473, 0
      $region56: #{pallas_forward.1} parent=31 // pred_fallthru
        _
      // Predicated region
      $region57: #{pallas_forward.1} parent=31 // pred_check
        %p476 = pneg %p312
      $region58: #{pallas_forward.1} parent=31 // pred_check_branch
        %478 = sbr.rel (%p476) target = $region60
      $region59: #{pallas_forward.1} parent=31 // pred_region
        %s479 = ssub.s32 %s18, 10
        %p480 = scmp.gt.s32.totalorder %s479, 0
        %s481 = scalar_select %p480, %s479, 0
        %p482 = scmp.lt.s32.totalorder %s481, 9
        %s483 = scalar_select %p482, %s481, 9
        %s484 = smul.addr %s483, 64
        %s485 = smul.addr %s484, 4
        %s486 = scalar_lea.vmem %s10, %s485
        %s487 = ssub.s32 %s18, 10
        %p488 = scmp.gt.s32.totalorder %s487, 0
        %s489 = scalar_select %p488, %s487, 0
      $region60: #{pallas_forward.1} parent=31 // pred_fallthru
        _
      // Predicated region
      $region61: #{pallas_forward.1} parent=31 // pred_check
        %p490 = pneg %p344
      $region62: #{pallas_forward.1} parent=31 // pred_check_branch
        %492 = sbr.rel (%p490) target = $region64
      $region63: #{pallas_forward.1} parent=31 // pred_region
        %s493 = ssub.s32 %s18, 10
        %p494 = scmp.gt.s32.totalorder %s493, 0
        %s495 = scalar_select %p494, %s493, 0
        %p496 = scmp.lt.s32.totalorder %s495, 9
        %s497 = scalar_select %p496, %s495, 9
        %s498 = smul.addr %s497, 256
        %s499 = smul.addr %s498, 4
        %s500 = scalar_lea.vmem %s11, %s499
        %s501 = ssub.s32 %s18, 10
        %p502 = scmp.gt.s32.totalorder %s501, 0
        %s503 = scalar_select %p502, %s501, 0
      $region64: #{pallas_forward.1} parent=31 // pred_fallthru
        _
    $region32: #{pallas_forward.1} parent=5 // pred_fallthru
      _
    %p504 = scmp.le.s32.totalorder 1, %s18
    %p505 = scmp.lt.s32.totalorder %s18, 21
    %p506 = pnand %p504, %p505
    %p507 = pneg %p506
    // Predicated region
    $region65: #{pallas_forward.1} parent=5 // pred_check
      _
    $region66: #{pallas_forward.1} parent=5 // pred_check_branch
      %509 = sbr.rel (%p506) target = $region68
    $region67: #{pallas_forward.1} parent=5 // pred_region
      %s510 = ssub.s32 %s18, 1
      %p511 = pneg %p39
      %p512 = pneg %p36
      %p513 = pneg %p60
      %p514 = pneg %p57
      %p515 = pneg %p81
      %p516 = pneg %p78
      %p517 = pneg %p102
      %p518 = pneg %p99
      %p519 = scmp.lt.s32.totalorder %s23, 9
      %s520 = scalar_select %p519, %s23, 9
      %p521 = scmp.lt.s32.totalorder %s520, 9
      %s522 = scalar_select %p521, %s520, 9
      %s523 = smul.addr %s522, 5
      %s524 = smul.addr %s523, 8
      %s525 = scalar_lea.vmem %s4, %s524
      %p526 = pneg %p132
      %p527 = pneg %p129
      %p528 = scmp.lt.s32.totalorder %s23, 9
      %s529 = scalar_select %p528, %s23, 9
      %p530 = scmp.lt.s32.totalorder %s529, 9
      %s531 = scalar_select %p530, %s529, 9
      %s532 = smul.addr %s531, 16
      %s533 = scalar_lea.vmem %s5, %s532
      %p534 = pneg %p162
      %p535 = pneg %p159
      %p536 = scmp.lt.s32.totalorder %s23, 9
      %s537 = scalar_select %p536, %s23, 9
      %p538 = scmp.lt.s32.totalorder %s537, 9
      %s539 = scalar_select %p538, %s537, 9
      %s540 = smul.addr %s539, 64
      %s541 = smul.addr %s540, 4
      %s542 = scalar_lea.vmem %s6, %s541
      %p543 = pneg %p192
      %p544 = pneg %p189
      %p545 = scmp.lt.s32.totalorder %s23, 9
      %s546 = scalar_select %p545, %s23, 9
      %p547 = scmp.lt.s32.totalorder %s546, 9
      %s548 = scalar_select %p547, %s546, 9
      %s549 = smul.addr %s548, 256
      %s550 = smul.addr %s549, 4
      %s551 = scalar_lea.vmem %s7, %s550
      %p552 = pneg %p222
      %p553 = pneg %p219
      %s554 = ssub.s32 %s23, 10
      %p555 = scmp.gt.s32.totalorder %s554, 0
      %s556 = scalar_select %p555, %s554, 0
      %p557 = scmp.lt.s32.totalorder %s556, 9
      %s558 = scalar_select %p557, %s556, 9
      %s559 = smul.addr %s558, 10
      %s560 = smul.addr %s559, 8
      %s561 = scalar_lea.vmem %s8, %s560
      %p562 = pneg %p254
      %p563 = pneg %p251
      %s564 = ssub.s32 %s23, 10
      %p565 = scmp.gt.s32.totalorder %s564, 0
      %s566 = scalar_select %p565, %s564, 0
      %p567 = scmp.lt.s32.totalorder %s566, 9
      %s568 = scalar_select %p567, %s566, 9
      %s569 = smul.addr %s568, 16
      %s570 = scalar_lea.vmem %s9, %s569
      %p571 = pneg %p286
      %p572 = pneg %p283
      %s573 = ssub.s32 %s23, 10
      %p574 = scmp.gt.s32.totalorder %s573, 0
      %s575 = scalar_select %p574, %s573, 0
      %p576 = scmp.lt.s32.totalorder %s575, 9
      %s577 = scalar_select %p576, %s575, 9
      %s578 = smul.addr %s577, 64
      %s579 = smul.addr %s578, 4
      %s580 = scalar_lea.vmem %s10, %s579
      %p581 = pneg %p318
      %p582 = pneg %p315
      %s583 = ssub.s32 %s23, 10
      %p584 = scmp.gt.s32.totalorder %s583, 0
      %s585 = scalar_select %p584, %s583, 0
      %p586 = scmp.lt.s32.totalorder %s585, 9
      %s587 = scalar_select %p586, %s585, 9
      %s588 = smul.addr %s587, 256
      %s589 = smul.addr %s588, 4
      %s590 = scalar_lea.vmem %s11, %s589
      %p591 = pneg %p350
      %p592 = pneg %p347
      %p593 = pneg %p371
      %p594 = pneg %p368
      %p595 = scmp.lt.s32.totalorder %s23, 9
      %s596 = scalar_select %p595, %s23, 9
      %p597 = scmp.lt.s32.totalorder %s596, 9
      %s598 = scalar_select %p597, %s596, 9
      %s599 = smul.addr %s598, 5
      %s600 = smul.addr %s599, 8
      %s601 = scalar_lea.vmem %s4, %s600
      %p602 = scmp.lt.s32.totalorder %s23, 9
      %s603 = scalar_select %p602, %s23, 9
      %p604 = scmp.lt.s32.totalorder %s23, 9
      %s605 = scalar_select %p604, %s23, 9
      %p606 = scmp.lt.s32.totalorder %s605, 9
      %s607 = scalar_select %p606, %s605, 9
      %s608 = smul.addr %s607, 16
      %s609 = scalar_lea.vmem %s5, %s608
      %p610 = scmp.lt.s32.totalorder %s23, 9
      %s611 = scalar_select %p610, %s23, 9
      %p612 = scmp.lt.s32.totalorder %s23, 9
      %s613 = scalar_select %p612, %s23, 9
      %p614 = scmp.lt.s32.totalorder %s613, 9
      %s615 = scalar_select %p614, %s613, 9
      %s616 = smul.addr %s615, 64
      %s617 = smul.addr %s616, 4
      %s618 = scalar_lea.vmem %s6, %s617
      %p619 = scmp.lt.s32.totalorder %s23, 9
      %s620 = scalar_select %p619, %s23, 9
      %p621 = scmp.lt.s32.totalorder %s23, 9
      %s622 = scalar_select %p621, %s23, 9
      %p623 = scmp.lt.s32.totalorder %s622, 9
      %s624 = scalar_select %p623, %s622, 9
      %s625 = smul.addr %s624, 256
      %s626 = smul.addr %s625, 4
      %s627 = scalar_lea.vmem %s7, %s626
      %p628 = scmp.lt.s32.totalorder %s23, 9
      %s629 = scalar_select %p628, %s23, 9
      %s630 = ssub.s32 %s23, 10
      %p631 = scmp.gt.s32.totalorder %s630, 0
      %s632 = scalar_select %p631, %s630, 0
      %p633 = scmp.lt.s32.totalorder %s632, 9
      %s634 = scalar_select %p633, %s632, 9
      %s635 = smul.addr %s634, 10
      %s636 = smul.addr %s635, 8
      %s637 = scalar_lea.vmem %s8, %s636
      %s638 = ssub.s32 %s23, 10
      %p639 = scmp.gt.s32.totalorder %s638, 0
      %s640 = scalar_select %p639, %s638, 0
      %s641 = ssub.s32 %s23, 10
      %p642 = scmp.gt.s32.totalorder %s641, 0
      %s643 = scalar_select %p642, %s641, 0
      %p644 = scmp.lt.s32.totalorder %s643, 9
      %s645 = scalar_select %p644, %s643, 9
      %s646 = smul.addr %s645, 16
      %s647 = scalar_lea.vmem %s9, %s646
      %s648 = ssub.s32 %s23, 10
      %p649 = scmp.gt.s32.totalorder %s648, 0
      %s650 = scalar_select %p649, %s648, 0
      %s651 = ssub.s32 %s23, 10
      %p652 = scmp.gt.s32.totalorder %s651, 0
      %s653 = scalar_select %p652, %s651, 0
      %p654 = scmp.lt.s32.totalorder %s653, 9
      %s655 = scalar_select %p654, %s653, 9
      %s656 = smul.addr %s655, 64
      %s657 = smul.addr %s656, 4
      %s658 = scalar_lea.vmem %s10, %s657
      %s659 = ssub.s32 %s23, 10
      %p660 = scmp.gt.s32.totalorder %s659, 0
      %s661 = scalar_select %p660, %s659, 0
      %s662 = ssub.s32 %s23, 10
      %p663 = scmp.gt.s32.totalorder %s662, 0
      %s664 = scalar_select %p663, %s662, 0
      %p665 = scmp.lt.s32.totalorder %s664, 9
      %s666 = scalar_select %p665, %s664, 9
      %s667 = smul.addr %s666, 256
      %s668 = smul.addr %s667, 4
      %s669 = scalar_lea.vmem %s11, %s668
      %s670 = ssub.s32 %s23, 10
      %p671 = scmp.gt.s32.totalorder %s670, 0
      %s672 = scalar_select %p671, %s670, 0
      %p674 = scmp.eq.s32.totalorder %s23, 0
      // Predicated region
      $region69: #{pallas_forward.1} parent=67 // pred_check
        %p675 = pneg %p674
      $region70: #{pallas_forward.1} parent=67 // pred_check_branch
        %677 = sbr.rel (%p675) target = $region72
      $region71: #{pallas_forward.1} parent=67 // pred_region
        %v678 = vld [vmem:[%s2] sm:$0x1]
        %v679 = vld [vmem:[%s2 + $0x1] sm:$0x1]
        %v680 = vld [vmem:[%s0] sm:$0xff]
        %v681 = vld [vmem:[%s0 + $0x8] sm:$0xff]
        %683 = vset.pattern.permute.xlu0 0
        %684 = vperm.xlu0 %683, %v680
        %v685 = vpop.permute.xlu0 %684
        %688 = vset.pattern.permute.xlu0 0
        %689 = vperm.xlu0 %688, %v681
        %v690 = vpop.permute.xlu0 %689
        %v692 = vlaneseq
        %v693 = vshrl.u32 %v692, 7
        %v694 = vsub.s32 0, %v693
        %v695 = vrot.slane %v678, %v694
        %v696 = vmul.f32 %v685, %v695
        %v697 = vmul.f32 %v690, %v695
        %v698 = vlaneseq
        %v699 = vshrl.u32 %v698, 7
        %v700 = vsub.s32 0, %v699
        %v701 = vrot.slane %v679, %v700
        %v702 = vadd.f32 %v696, %v701
        %v703 = vadd.f32 %v697, %v701
        %vm704 = vcmask 261120
        %705 = vst.msk [vmem:[#allocation2] sm:$0xff] %vm704, %v702
        %706 = vst.msk [vmem:[#allocation2 + $0x8] sm:$0xff] %vm704, %v703
        %v707 = vld [vmem:[%s1] sm:$0xff]
        %v708 = vld [vmem:[%s1 + $0x8] sm:$0xff]
        %710 = vset.pattern.permute.xlu0 0
        %711 = vperm.xlu0 %710, %v707
        %v712 = vpop.permute.xlu0 %711
        %715 = vset.pattern.permute.xlu0 0
        %716 = vperm.xlu0 %715, %v708
        %v717 = vpop.permute.xlu0 %716
        %v719 = vmul.f32 %v712, %v695
        %v720 = vmul.f32 %v717, %v695
        %v721 = vadd.f32 %v719, %v701
        %v722 = vadd.f32 %v720, %v701
        %723 = vst.msk [vmem:[#allocation3] sm:$0xff] %vm704, %v721
        %724 = vst.msk [vmem:[#allocation3 + $0x8] sm:$0xff] %vm704, %v722
      $region72: #{pallas_forward.1} parent=67 // pred_fallthru
        _
      %p725 = scmp.lt.s32.totalorder %s23, 10
      // Predicated region
      $region73: #{pallas_forward.1} parent=67 // pred_check
        %p726 = pneg %p725
      $region74: #{pallas_forward.1} parent=67 // pred_check_branch
        %728 = sbr.rel (%p726) target = $region76
      $region75: #{pallas_forward.1} parent=67 // pred_region
        %v729 = vld [vmem:[#allocation2] sm:$0xff]
        %v730 = vld [vmem:[#allocation2 + $0x8] sm:$0xff]
        %v731 = vld [vmem:[%s601] sm:$0xff]
        %v732 = vld [vmem:[%s601 + $0x8] sm:$0xff]
        %v733 = vld [vmem:[%s601 + $0x10] sm:$0xff]
        %v734 = vld [vmem:[%s601 + $0x18] sm:$0xff]
        %v735 = vld [vmem:[%s601 + $0x20] sm:$0x1]
        %v736 = vlaneseq
        %v737 = vshrl.u32 %v736, 7
        %v738 = vsub.s32 0, %v737
        %v739 = vrot.slane %v735, %v738
        %vm740 = vcmask 261120
        %v742 = vsel %vm740, %v729, 0
        %v745 = vsel %vm740, %v730, 0
        %747 = vmatprep.subr.mxu0 0.0
        %748 = vmatpush1.msra.mxu0 0.0
        %749 = vmatprep.subr.mxu0 0.0
        %750 = vmatpush1.msra.mxu0 0.0
        %751 = vmatprep.subr.mxu0 0.0
        %752 = vmatpush1.msra.mxu0 0.0
        %753 = vmatprep.subr.mxu0 0.0
        %754 = vmatpush1.msra.mxu0 0.0
        %755 = vmatprep.subr.mxu0 0.0
        %756 = vmatpush1.msra.mxu0 0.0
        %757 = vmatprep.subr.mxu0 0.0
        %758 = vmatpush1.msra.mxu0 0.0
        %759 = vmatprep.subr.mxu0 0.0
        %760 = vmatpush1.msra.mxu0 0.0
        %761 = vmatprep.subr.mxu0 0.0
        %762 = vmatpush1.msra.mxu0 0.0
        %763 = vmatprep.subr.mxu0 0.0
        %764 = vmatpush1.msra.mxu0 0.0
        %765 = vmatprep.subr.mxu0 0.0
        %766 = vmatpush1.msra.mxu0 0.0
        %767 = vmatprep.subr.mxu0 0.0
        %768 = vmatpush1.msra.mxu0 0.0
        %769 = vmatprep.subr.mxu0 0.0
        %770 = vmatpush1.msra.mxu0 0.0
        %771 = vmatprep.subr.mxu0 0.0
        %772 = vmatpush1.msra.mxu0 %v734
        %773 = vmatprep.subr.mxu0 0.0
        %774 = vmatpush1.msra.mxu0 %v733
        %775 = vmatprep.subr.mxu0 0.0
        %776 = vmatpush1.msra.mxu0 %v732
        %777 = vmatprep.subr.mxu0 0.0
        %778 = vmatpush1.msra.mxu0 %v731
        %779 = vmatprep.subr.mxu0 0.0
        %780 = vmatpush2.msra.mxu0 0.0
        %781 = vmatprep.subr.mxu0 0.0
        %782 = vmatpush2.msra.mxu0 0.0
        %783 = vmatprep.subr.mxu0 0.0
        %784 = vmatpush2.msra.mxu0 0.0
        %785 = vmatprep.subr.mxu0 0.0
        %786 = vmatpush2.msra.mxu0 0.0
        %787 = vmatprep.subr.mxu0 0.0
        %788 = vmatpush2.msra.mxu0 0.0
        %789 = vmatprep.subr.mxu0 0.0
        %790 = vmatpush2.msra.mxu0 0.0
        %791 = vmatprep.subr.mxu0 0.0
        %792 = vmatpush2.msra.mxu0 0.0
        %793 = vmatprep.subr.mxu0 0.0
        %794 = vmatpush2.msra.mxu0 0.0
        %795 = vmatprep.subr.mxu0 0.0
        %796 = vmatpush2.msra.mxu0 0.0
        %797 = vmatprep.subr.mxu0 0.0
        %798 = vmatpush2.msra.mxu0 0.0
        %799 = vmatprep.subr.mxu0 0.0
        %800 = vmatpush2.msra.mxu0 0.0
        %801 = vmatprep.subr.mxu0 0.0
        %802 = vmatpush2.msra.mxu0 0.0
        %803 = vmatprep.subr.mxu0 0.0
        %804 = vmatpush2.msra.mxu0 0.0
        %805 = vmatprep.subr.mxu0 0.0
        %806 = vmatpush2.msra.mxu0 0.0
        %807 = vmatprep.subr.mxu0 0.0
        %808 = vmatpush2.msra.mxu0 0.0
        %809 = vmatprep.subr.mxu0 0.0
        %810 = vmatpush2.msra.mxu0 0.0
        %811 = vmatprep.mubr.f32.mxu0 0.0
        %812 = vmatmul.mubr.f32.gmra.mxu0 %v742
        %v813 = vpop.f32.mrf.mxu0
        %v814 = vadd.f32 %v739, %v813
        %v815 = vpop.f32.mrf.mxu0
        %816 = vmatprep.mubr.f32.mxu0 0.0
        %817 = vmatmul.mubr.f32.gmra.mxu0 %v745
        %v818 = vpop.f32.mrf.mxu0
        %v819 = vadd.f32 %v739, %v818
        %v820 = vpop.f32.mrf.mxu0
        %821 = vdwg.mxu0
        %v822 = vadd.f32 %v729, %v814
        %v823 = vadd.f32 %v730, %v819
        %v824 = vld [vmem:[%s601 + $0x22] sm:$0x1]
        %v825 = vld [vmem:[%s601 + $0x23] sm:$0x1]
        %v826 = vsel %vm740, %v822, 0.0
        %827 = vadd.xlane.f32.xlu0 %v826
        %v828 = vpop.xlane.xlu0 %827
        %v829 = vsel %vm740, %v823, 0.0
        %830 = vadd.xlane.f32.xlu0 %v829
        %v831 = vpop.xlane.xlu0 %830
        %v832 = vrcp.pop 32.0
        %v833 = vmul.f32 %v828, %v832
        %v834 = vmul.f32 %v831, %v832
        %v835 = vsub.f32 %v822, %v833
        %v836 = vsub.f32 %v823, %v834
        %v837 = vmul.f32 %v835, %v835
        %v838 = vmul.f32 %v836, %v836
        %v839 = vsel %vm740, %v837, 0.0
        %840 = vadd.xlane.f32.xlu0 %v839
        %v841 = vpop.xlane.xlu0 %840
        %v842 = vsel %vm740, %v838, 0.0
        %843 = vadd.xlane.f32.xlu0 %v842
        %v844 = vpop.xlane.xlu0 %843
        %v845 = vmul.f32 %v841, %v832
        %v846 = vmul.f32 %v844, %v832
        %v847 = vadd.f32 %v845, 1e-05
        %v848 = vadd.f32 %v846, 1e-05
        %v849 = vrsqrt.pop %v847
        %v850 = vrsqrt.pop %v848
        %v851 = vmul.f32 %v835, %v849
        %v852 = vmul.f32 %v836, %v850
        %v853 = vlaneseq
        %v854 = vshrl.u32 %v853, 7
        %v855 = vsub.s32 0, %v854
        %v856 = vrot.slane %v824, %v855
        %v857 = vmul.f32 %v851, %v856
        %v858 = vmul.f32 %v852, %v856
        %v859 = vlaneseq
        %v860 = vshrl.u32 %v859, 7
        %v861 = vsub.s32 0, %v860
        %v862 = vrot.slane %v825, %v861
        %v863 = vadd.f32 %v857, %v862
        %v864 = vadd.f32 %v858, %v862
        %v865 = vpack.c.bf16 %v864, %v863
        %v866 = vld [vmem:[%s618] sm:$0xff]
        %v867 = vld [vmem:[%s618 + $0x8] sm:$0xff]
        %v868 = vld [vmem:[%s618 + $0x10] sm:$0xff]
        %v869 = vld [vmem:[%s618 + $0x18] sm:$0xff]
        %v870 = vld [vmem:[%s618 + $0x20] sm:$0xff]
        %v871 = vld [vmem:[%s618 + $0x28] sm:$0xff]
        %v872 = vld [vmem:[%s618 + $0x30] sm:$0xff]
        %v873 = vld [vmem:[%s618 + $0x38] sm:$0xff]
        %v874 = vld [vmem:[%s618 + $0x40] sm:$0xff]
        %v875 = vld [vmem:[%s618 + $0x48] sm:$0xff]
        %v876 = vld [vmem:[%s618 + $0x50] sm:$0xff]
        %v877 = vld [vmem:[%s618 + $0x58] sm:$0xff]
        %v878 = vld [vmem:[%s618 + $0x60] sm:$0xff]
        %v879 = vld [vmem:[%s618 + $0x68] sm:$0xff]
        %v880 = vld [vmem:[%s618 + $0x70] sm:$0xff]
        %v881 = vld [vmem:[%s618 + $0x78] sm:$0xff]
        %v882 = vld [vmem:[%s618 + $0x80] sm:$0xff]
        %v883 = vld [vmem:[%s618 + $0x88] sm:$0xff]
        %v884 = vld [vmem:[%s618 + $0x90] sm:$0xff]
        %v885 = vld [vmem:[%s618 + $0x98] sm:$0xff]
        %v886 = vld [vmem:[%s618 + $0xa0] sm:$0xff]
        %v887 = vld [vmem:[%s618 + $0xa8] sm:$0xff]
        %v888 = vld [vmem:[%s618 + $0xb0] sm:$0xff]
        %v889 = vld [vmem:[%s618 + $0xb8] sm:$0xff]
        %v890 = vld [vmem:[%s618 + $0xc0] sm:$0xff]
        %v891 = vld [vmem:[%s618 + $0xc8] sm:$0xff]
        %v892 = vld [vmem:[%s618 + $0xd0] sm:$0xff]
        %v893 = vld [vmem:[%s618 + $0xd8] sm:$0xff]
        %v894 = vld [vmem:[%s618 + $0xe0] sm:$0xff]
        %v895 = vld [vmem:[%s618 + $0xe8] sm:$0xff]
        %v896 = vld [vmem:[%s618 + $0xf0] sm:$0xff]
        %v897 = vld [vmem:[%s618 + $0xf8] sm:$0xff]
        %v898 = vld [vmem:[%s609] sm:$0xff]
        %v899 = vld [vmem:[%s609 + $0x8] sm:$0xff]
        %v902 = vlaneseq
        %v903 = vshrl.u32 %v902, 7
        %v904 = vsub.s32 0, %v903
        %v905 = vrot.slane %v898, %v904
        %v906 = vlaneseq
        %v907 = vshrl.u32 %v906, 7
        %v908 = vsub.s32 1, %v907
        %v909 = vrot.slane %v898, %v908
        %v910 = vlaneseq
        %v911 = vshrl.u32 %v910, 7
        %v912 = vsub.s32 2, %v911
        %v913 = vrot.slane %v898, %v912
        %v914 = vlaneseq
        %v915 = vshrl.u32 %v914, 7
        %v916 = vsub.s32 3, %v915
        %v917 = vrot.slane %v898, %v916
        %v918 = vlaneseq
        %v919 = vshrl.u32 %v918, 7
        %v920 = vsub.s32 4, %v919
        %v921 = vrot.slane %v898, %v920
        %v922 = vlaneseq
        %v923 = vshrl.u32 %v922, 7
        %v924 = vsub.s32 5, %v923
        %v925 = vrot.slane %v898, %v924
        %v926 = vlaneseq
        %v927 = vshrl.u32 %v926, 7
        %v928 = vsub.s32 6, %v927
        %v929 = vrot.slane %v898, %v928
        %v930 = vlaneseq
        %v931 = vshrl.u32 %v930, 7
        %v932 = vsub.s32 7, %v931
        %v933 = vrot.slane %v898, %v932
        %v934 = vlaneseq
        %v935 = vshrl.u32 %v934, 7
        %v936 = vsub.s32 0, %v935
        %v937 = vrot.slane %v899, %v936
        %v938 = vlaneseq
        %v939 = vshrl.u32 %v938, 7
        %v940 = vsub.s32 1, %v939
        %v941 = vrot.slane %v899, %v940
        %v942 = vlaneseq
        %v943 = vshrl.u32 %v942, 7
        %v944 = vsub.s32 2, %v943
        %v945 = vrot.slane %v899, %v944
        %v946 = vlaneseq
        %v947 = vshrl.u32 %v946, 7
        %v948 = vsub.s32 3, %v947
        %v949 = vrot.slane %v899, %v948
        %v950 = vlaneseq
        %v951 = vshrl.u32 %v950, 7
        %v952 = vsub.s32 4, %v951
        %v953 = vrot.slane %v899, %v952
        %v954 = vlaneseq
        %v955 = vshrl.u32 %v954, 7
        %v956 = vsub.s32 5, %v955
        %v957 = vrot.slane %v899, %v956
        %v958 = vlaneseq
        %v959 = vshrl.u32 %v958, 7
        %v960 = vsub.s32 6, %v959
        %v961 = vrot.slane %v899, %v960
        %v962 = vlaneseq
        %v963 = vshrl.u32 %v962, 7
        %v964 = vsub.s32 7, %v963
        %v965 = vrot.slane %v899, %v964
        %v1014 = vunpack.c.l.b16 %v866
        %v1015 = vunpack.c.h.b16 %v866
        %v1016 = vunpack.c.l.b16 %v867
        %v1017 = vunpack.c.h.b16 %v867
        %v1018 = vunpack.c.l.b16 %v868
        %v1019 = vunpack.c.h.b16 %v868
        %v1020 = vunpack.c.l.b16 %v869
        %v1021 = vunpack.c.h.b16 %v869
        %v1022 = vunpack.c.l.b16 %v870
        %v1023 = vunpack.c.h.b16 %v870
        %v1024 = vunpack.c.l.b16 %v871
        %v1025 = vunpack.c.h.b16 %v871
        %v1026 = vunpack.c.l.b16 %v872
        %v1027 = vunpack.c.h.b16 %v872
        %v1028 = vunpack.c.l.b16 %v873
        %v1029 = vunpack.c.h.b16 %v873
        %v1030 = vunpack.c.l.b16 %v874
        %v1031 = vunpack.c.h.b16 %v874
        %v1032 = vunpack.c.l.b16 %v875
        %v1033 = vunpack.c.h.b16 %v875
        %v1034 = vunpack.c.l.b16 %v876
        %v1035 = vunpack.c.h.b16 %v876
        %v1036 = vunpack.c.l.b16 %v877
        %v1037 = vunpack.c.h.b16 %v877
        %v1038 = vunpack.c.l.b16 %v878
        %v1039 = vunpack.c.h.b16 %v878
        %v1040 = vunpack.c.l.b16 %v879
        %v1041 = vunpack.c.h.b16 %v879
        %v1042 = vunpack.c.l.b16 %v880
        %v1043 = vunpack.c.h.b16 %v880
        %v1044 = vunpack.c.l.b16 %v881
        %v1045 = vunpack.c.h.b16 %v881
        %v1046 = vunpack.c.l.b16 %v882
        %v1047 = vunpack.c.h.b16 %v882
        %v1048 = vunpack.c.l.b16 %v883
        %v1049 = vunpack.c.h.b16 %v883
        %v1050 = vunpack.c.l.b16 %v884
        %v1051 = vunpack.c.h.b16 %v884
        %v1052 = vunpack.c.l.b16 %v885
        %v1053 = vunpack.c.h.b16 %v885
        %v1054 = vunpack.c.l.b16 %v886
        %v1055 = vunpack.c.h.b16 %v886
        %v1056 = vunpack.c.l.b16 %v887
        %v1057 = vunpack.c.h.b16 %v887
        %v1058 = vunpack.c.l.b16 %v888
        %v1059 = vunpack.c.h.b16 %v888
        %v1060 = vunpack.c.l.b16 %v889
        %v1061 = vunpack.c.h.b16 %v889
        %v1062 = vunpack.c.l.b16 %v890
        %v1063 = vunpack.c.h.b16 %v890
        %v1064 = vunpack.c.l.b16 %v891
        %v1065 = vunpack.c.h.b16 %v891
        %v1066 = vunpack.c.l.b16 %v892
        %v1067 = vunpack.c.h.b16 %v892
        %v1068 = vunpack.c.l.b16 %v893
        %v1069 = vunpack.c.h.b16 %v893
        %v1070 = vunpack.c.l.b16 %v894
        %v1071 = vunpack.c.h.b16 %v894
        %v1072 = vunpack.c.l.b16 %v895
        %v1073 = vunpack.c.h.b16 %v895
        %v1074 = vunpack.c.l.b16 %v896
        %v1075 = vunpack.c.h.b16 %v896
        %v1076 = vunpack.c.l.b16 %v897
        %v1077 = vunpack.c.h.b16 %v897
        %v1078 = vpack.c.b16 %v1030, %v1014
        %v1079 = vpack.c.b16 %v1031, %v1015
        %v1080 = vpack.c.b16 %v1032, %v1016
        %v1081 = vpack.c.b16 %v1033, %v1017
        %v1082 = vpack.c.b16 %v1034, %v1018
        %v1083 = vpack.c.b16 %v1035, %v1019
        %v1084 = vpack.c.b16 %v1036, %v1020
        %v1085 = vpack.c.b16 %v1037, %v1021
        %v1086 = vpack.c.b16 %v1038, %v1022
        %v1087 = vpack.c.b16 %v1039, %v1023
        %v1088 = vpack.c.b16 %v1040, %v1024
        %v1089 = vpack.c.b16 %v1041, %v1025
        %v1090 = vpack.c.b16 %v1042, %v1026
        %v1091 = vpack.c.b16 %v1043, %v1027
        %v1092 = vpack.c.b16 %v1044, %v1028
        %v1093 = vpack.c.b16 %v1045, %v1029
        %v1094 = vpack.c.b16 %v1062, %v1046
        %v1095 = vpack.c.b16 %v1063, %v1047
        %v1096 = vpack.c.b16 %v1064, %v1048
        %v1097 = vpack.c.b16 %v1065, %v1049
        %v1098 = vpack.c.b16 %v1066, %v1050
        %v1099 = vpack.c.b16 %v1067, %v1051
        %v1100 = vpack.c.b16 %v1068, %v1052
        %v1101 = vpack.c.b16 %v1069, %v1053
        %v1102 = vpack.c.b16 %v1070, %v1054
        %v1103 = vpack.c.b16 %v1071, %v1055
        %v1104 = vpack.c.b16 %v1072, %v1056
        %v1105 = vpack.c.b16 %v1073, %v1057
        %v1106 = vpack.c.b16 %v1074, %v1058
        %v1107 = vpack.c.b16 %v1075, %v1059
        %v1108 = vpack.c.b16 %v1076, %v1060
        %v1109 = vpack.c.b16 %v1077, %v1061
        %v1143 = vsel %vm740, %v865, 0
        %1145 = vmatprep.subr.bf16.mxu0 0
        %1146 = vmatpush1.bf16.msra.mxu0 0
        %1147 = vmatprep.subr.bf16.mxu0 0
        %1148 = vmatpush1.bf16.msra.mxu0 0
        %1149 = vmatprep.subr.bf16.mxu0 0
        %1150 = vmatpush1.bf16.msra.mxu0 0
        %1151 = vmatprep.subr.bf16.mxu0 0
        %1152 = vmatpush1.bf16.msra.mxu0 0
        %1153 = vmatprep.subr.bf16.mxu0 0
        %1154 = vmatpush1.bf16.msra.mxu0 0
        %1155 = vmatprep.subr.bf16.mxu0 0
        %1156 = vmatpush1.bf16.msra.mxu0 0
        %1157 = vmatprep.subr.bf16.mxu0 %v1095
        %1158 = vmatpush1.bf16.msra.mxu0 %v1094
        %1159 = vmatprep.subr.bf16.mxu0 %v1079
        %1160 = vmatpush1.bf16.msra.mxu0 %v1078
        %1161 = vmatprep.subr.bf16.mxu0 0
        %1162 = vmatpush2.bf16.msra.mxu0 0
        %1163 = vmatprep.subr.bf16.mxu0 0
        %1164 = vmatpush2.bf16.msra.mxu0 0
        %1165 = vmatprep.subr.bf16.mxu0 0
        %1166 = vmatpush2.bf16.msra.mxu0 0
        %1167 = vmatprep.subr.bf16.mxu0 0
        %1168 = vmatpush2.bf16.msra.mxu0 0
        %1169 = vmatprep.subr.bf16.mxu0 0
        %1170 = vmatpush2.bf16.msra.mxu0 0
        %1171 = vmatprep.subr.bf16.mxu0 0
        %1172 = vmatpush2.bf16.msra.mxu0 0
        %1173 = vmatprep.subr.bf16.mxu0 0
        %1174 = vmatpush2.bf16.msra.mxu0 0
        %1175 = vmatprep.subr.bf16.mxu0 0
        %1176 = vmatpush2.bf16.msra.mxu0 0
        %1177 = vmatprep.mubr.bf16.mxu0 0
        %1178 = vmatmul.mubr.bf16.gmra.mxu0 %v1143
        %v1179 = vpop.f32.mrf.mxu0
        %v1180 = vadd.f32 %v905, %v1179
        %v1181 = vpop.f32.mrf.mxu0
        %v1182 = vadd.f32 %v909, %v1181
        %v1183 = vpop.f32.mrf.mxu0
        %v1184 = vadd.f32 %v905, %v1183
        %v1185 = vpop.f32.mrf.mxu0
        %v1186 = vadd.f32 %v909, %v1185
        %1187 = vdwg.mxu0
        %1188 = vmatprep.subr.bf16.mxu0 0
        %1189 = vmatpush1.bf16.msra.mxu0 0
        %1190 = vmatprep.subr.bf16.mxu0 0
        %1191 = vmatpush1.bf16.msra.mxu0 0
        %1192 = vmatprep.subr.bf16.mxu0 0
        %1193 = vmatpush1.bf16.msra.mxu0 0
        %1194 = vmatprep.subr.bf16.mxu0 0
        %1195 = vmatpush1.bf16.msra.mxu0 0
        %1196 = vmatprep.subr.bf16.mxu0 0
        %1197 = vmatpush1.bf16.msra.mxu0 0
        %1198 = vmatprep.subr.bf16.mxu0 0
        %1199 = vmatpush1.bf16.msra.mxu0 0
        %1200 = vmatprep.subr.bf16.mxu0 %v1097
        %1201 = vmatpush1.bf16.msra.mxu0 %v1096
        %1202 = vmatprep.subr.bf16.mxu0 %v1081
        %1203 = vmatpush1.bf16.msra.mxu0 %v1080
        %1204 = vmatprep.subr.bf16.mxu0 0
        %1205 = vmatpush2.bf16.msra.mxu0 0
        %1206 = vmatprep.subr.bf16.mxu0 0
        %1207 = vmatpush2.bf16.msra.mxu0 0
        %1208 = vmatprep.subr.bf16.mxu0 0
        %1209 = vmatpush2.bf16.msra.mxu0 0
        %1210 = vmatprep.subr.bf16.mxu0 0
        %1211 = vmatpush2.bf16.msra.mxu0 0
        %1212 = vmatprep.subr.bf16.mxu0 0
        %1213 = vmatpush2.bf16.msra.mxu0 0
        %1214 = vmatprep.subr.bf16.mxu0 0
        %1215 = vmatpush2.bf16.msra.mxu0 0
        %1216 = vmatprep.subr.bf16.mxu0 0
        %1217 = vmatpush2.bf16.msra.mxu0 0
        %1218 = vmatprep.subr.bf16.mxu0 0
        %1219 = vmatpush2.bf16.msra.mxu0 0
        %1220 = vmatprep.mubr.bf16.mxu0 0
        %1221 = vmatmul.mubr.bf16.gmra.mxu0 %v1143
        %v1222 = vpop.f32.mrf.mxu0
        %v1223 = vadd.f32 %v913, %v1222
        %v1224 = vpop.f32.mrf.mxu0
        %v1225 = vadd.f32 %v917, %v1224
        %v1226 = vpop.f32.mrf.mxu0
        %v1227 = vadd.f32 %v913, %v1226
        %v1228 = vpop.f32.mrf.mxu0
        %v1229 = vadd.f32 %v917, %v1228
        %1230 = vdwg.mxu0
        %1231 = vmatprep.subr.bf16.mxu0 0
        %1232 = vmatpush1.bf16.msra.mxu0 0
        %1233 = vmatprep.subr.bf16.mxu0 0
        %1234 = vmatpush1.bf16.msra.mxu0 0
        %1235 = vmatprep.subr.bf16.mxu0 0
        %1236 = vmatpush1.bf16.msra.mxu0 0
        %1237 = vmatprep.subr.bf16.mxu0 0
        %1238 = vmatpush1.bf16.msra.mxu0 0
        %1239 = vmatprep.subr.bf16.mxu0 0
        %1240 = vmatpush1.bf16.msra.mxu0 0
        %1241 = vmatprep.subr.bf16.mxu0 0
        %1242 = vmatpush1.bf16.msra.mxu0 0
        %1243 = vmatprep.subr.bf16.mxu0 %v1099
        %1244 = vmatpush1.bf16.msra.mxu0 %v1098
        %1245 = vmatprep.subr.bf16.mxu0 %v1083
        %1246 = vmatpush1.bf16.msra.mxu0 %v1082
        %1247 = vmatprep.subr.bf16.mxu0 0
        %1248 = vmatpush2.bf16.msra.mxu0 0
        %1249 = vmatprep.subr.bf16.mxu0 0
        %1250 = vmatpush2.bf16.msra.mxu0 0
        %1251 = vmatprep.subr.bf16.mxu0 0
        %1252 = vmatpush2.bf16.msra.mxu0 0
        %1253 = vmatprep.subr.bf16.mxu0 0
        %1254 = vmatpush2.bf16.msra.mxu0 0
        %1255 = vmatprep.subr.bf16.mxu0 0
        %1256 = vmatpush2.bf16.msra.mxu0 0
        %1257 = vmatprep.subr.bf16.mxu0 0
        %1258 = vmatpush2.bf16.msra.mxu0 0
        %1259 = vmatprep.subr.bf16.mxu0 0
        %1260 = vmatpush2.bf16.msra.mxu0 0
        %1261 = vmatprep.subr.bf16.mxu0 0
        %1262 = vmatpush2.bf16.msra.mxu0 0
        %1263 = vmatprep.mubr.bf16.mxu0 0
        %1264 = vmatmul.mubr.bf16.gmra.mxu0 %v1143
        %v1265 = vpop.f32.mrf.mxu0
        %v1266 = vadd.f32 %v921, %v1265
        %v1267 = vpop.f32.mrf.mxu0
        %v1268 = vadd.f32 %v925, %v1267
        %v1269 = vpop.f32.mrf.mxu0
        %v1270 = vadd.f32 %v921, %v1269
        %v1271 = vpop.f32.mrf.mxu0
        %v1272 = vadd.f32 %v925, %v1271
        %1273 = vdwg.mxu0
        %1274 = vmatprep.subr.bf16.mxu0 0
        %1275 = vmatpush1.bf16.msra.mxu0 0
        %1276 = vmatprep.subr.bf16.mxu0 0
        %1277 = vmatpush1.bf16.msra.mxu0 0
        %1278 = vmatprep.subr.bf16.mxu0 0
        %1279 = vmatpush1.bf16.msra.mxu0 0
        %1280 = vmatprep.subr.bf16.mxu0 0
        %1281 = vmatpush1.bf16.msra.mxu0 0
        %1282 = vmatprep.subr.bf16.mxu0 0
        %1283 = vmatpush1.bf16.msra.mxu0 0
        %1284 = vmatprep.subr.bf16.mxu0 0
        %1285 = vmatpush1.bf16.msra.mxu0 0
        %1286 = vmatprep.subr.bf16.mxu0 %v1101
        %1287 = vmatpush1.bf16.msra.mxu0 %v1100
        %1288 = vmatprep.subr.bf16.mxu0 %v1085
        %1289 = vmatpush1.bf16.msra.mxu0 %v1084
        %1290 = vmatprep.subr.bf16.mxu0 0
        %1291 = vmatpush2.bf16.msra.mxu0 0
        %1292 = vmatprep.subr.bf16.mxu0 0
        %1293 = vmatpush2.bf16.msra.mxu0 0
        %1294 = vmatprep.subr.bf16.mxu0 0
        %1295 = vmatpush2.bf16.msra.mxu0 0
        %1296 = vmatprep.subr.bf16.mxu0 0
        %1297 = vmatpush2.bf16.msra.mxu0 0
        %1298 = vmatprep.subr.bf16.mxu0 0
        %1299 = vmatpush2.bf16.msra.mxu0 0
        %1300 = vmatprep.subr.bf16.mxu0 0
        %1301 = vmatpush2.bf16.msra.mxu0 0
        %1302 = vmatprep.subr.bf16.mxu0 0
        %1303 = vmatpush2.bf16.msra.mxu0 0
        %1304 = vmatprep.subr.bf16.mxu0 0
        %1305 = vmatpush2.bf16.msra.mxu0 0
        %1306 = vmatprep.mubr.bf16.mxu0 0
        %1307 = vmatmul.mubr.bf16.gmra.mxu0 %v1143
        %v1308 = vpop.f32.mrf.mxu0
        %v1309 = vadd.f32 %v929, %v1308
        %v1310 = vpop.f32.mrf.mxu0
        %v1311 = vadd.f32 %v933, %v1310
        %v1312 = vpop.f32.mrf.mxu0
        %v1313 = vadd.f32 %v929, %v1312
        %v1314 = vpop.f32.mrf.mxu0
        %v1315 = vadd.f32 %v933, %v1314
        %1316 = vdwg.mxu0
        %1317 = vmatprep.subr.bf16.mxu0 0
        %1318 = vmatpush1.bf16.msra.mxu0 0
        %1319 = vmatprep.subr.bf16.mxu0 0
        %1320 = vmatpush1.bf16.msra.mxu0 0
        %1321 = vmatprep.subr.bf16.mxu0 0
        %1322 = vmatpush1.bf16.msra.mxu0 0
        %1323 = vmatprep.subr.bf16.mxu0 0
        %1324 = vmatpush1.bf16.msra.mxu0 0
        %1325 = vmatprep.subr.bf16.mxu0 0
        %1326 = vmatpush1.bf16.msra.mxu0 0
        %1327 = vmatprep.subr.bf16.mxu0 0
        %1328 = vmatpush1.bf16.msra.mxu0 0
        %1329 = vmatprep.subr.bf16.mxu0 %v1103
        %1330 = vmatpush1.bf16.msra.mxu0 %v1102
        %1331 = vmatprep.subr.bf16.mxu0 %v1087
        %1332 = vmatpush1.bf16.msra.mxu0 %v1086
        %1333 = vmatprep.subr.bf16.mxu0 0
        %1334 = vmatpush2.bf16.msra.mxu0 0
        %1335 = vmatprep.subr.bf16.mxu0 0
        %1336 = vmatpush2.bf16.msra.mxu0 0
        %1337 = vmatprep.subr.bf16.mxu0 0
        %1338 = vmatpush2.bf16.msra.mxu0 0
        %1339 = vmatprep.subr.bf16.mxu0 0
        %1340 = vmatpush2.bf16.msra.mxu0 0
        %1341 = vmatprep.subr.bf16.mxu0 0
        %1342 = vmatpush2.bf16.msra.mxu0 0
        %1343 = vmatprep.subr.bf16.mxu0 0
        %1344 = vmatpush2.bf16.msra.mxu0 0
        %1345 = vmatprep.subr.bf16.mxu0 0
        %1346 = vmatpush2.bf16.msra.mxu0 0
        %1347 = vmatprep.subr.bf16.mxu0 0
        %1348 = vmatpush2.bf16.msra.mxu0 0
        %1349 = vmatprep.mubr.bf16.mxu0 0
        %1350 = vmatmul.mubr.bf16.gmra.mxu0 %v1143
        %v1351 = vpop.f32.mrf.mxu0
        %v1352 = vadd.f32 %v937, %v1351
        %v1353 = vpop.f32.mrf.mxu0
        %v1354 = vadd.f32 %v941, %v1353
        %v1355 = vpop.f32.mrf.mxu0
        %v1356 = vadd.f32 %v937, %v1355
        %v1357 = vpop.f32.mrf.mxu0
        %v1358 = vadd.f32 %v941, %v1357
        %1359 = vdwg.mxu0
        %1360 = vmatprep.subr.bf16.mxu0 0
        %1361 = vmatpush1.bf16.msra.mxu0 0
        %1362 = vmatprep.subr.bf16.mxu0 0
        %1363 = vmatpush1.bf16.msra.mxu0 0
        %1364 = vmatprep.subr.bf16.mxu0 0
        %1365 = vmatpush1.bf16.msra.mxu0 0
        %1366 = vmatprep.subr.bf16.mxu0 0
        %1367 = vmatpush1.bf16.msra.mxu0 0
        %1368 = vmatprep.subr.bf16.mxu0 0
        %1369 = vmatpush1.bf16.msra.mxu0 0
        %1370 = vmatprep.subr.bf16.mxu0 0
        %1371 = vmatpush1.bf16.msra.mxu0 0
        %1372 = vmatprep.subr.bf16.mxu0 %v1105
        %1373 = vmatpush1.bf16.msra.mxu0 %v1104
        %1374 = vmatprep.subr.bf16.mxu0 %v1089
        %1375 = vmatpush1.bf16.msra.mxu0 %v1088
        %1376 = vmatprep.subr.bf16.mxu0 0
        %1377 = vmatpush2.bf16.msra.mxu0 0
        %1378 = vmatprep.subr.bf16.mxu0 0
        %1379 = vmatpush2.bf16.msra.mxu0 0
        %1380 = vmatprep.subr.bf16.mxu0 0
        %1381 = vmatpush2.bf16.msra.mxu0 0
        %1382 = vmatprep.subr.bf16.mxu0 0
        %1383 = vmatpush2.bf16.msra.mxu0 0
        %1384 = vmatprep.subr.bf16.mxu0 0
        %1385 = vmatpush2.bf16.msra.mxu0 0
        %1386 = vmatprep.subr.bf16.mxu0 0
        %1387 = vmatpush2.bf16.msra.mxu0 0
        %1388 = vmatprep.subr.bf16.mxu0 0
        %1389 = vmatpush2.bf16.msra.mxu0 0
        %1390 = vmatprep.subr.bf16.mxu0 0
        %1391 = vmatpush2.bf16.msra.mxu0 0
        %1392 = vmatprep.mubr.bf16.mxu0 0
        %1393 = vmatmul.mubr.bf16.gmra.mxu0 %v1143
        %v1394 = vpop.f32.mrf.mxu0
        %v1395 = vadd.f32 %v945, %v1394
        %v1396 = vpop.f32.mrf.mxu0
        %v1397 = vadd.f32 %v949, %v1396
        %v1398 = vpop.f32.mrf.mxu0
        %v1399 = vadd.f32 %v945, %v1398
        %v1400 = vpop.f32.mrf.mxu0
        %v1401 = vadd.f32 %v949, %v1400
        %1402 = vdwg.mxu0
        %1403 = vmatprep.subr.bf16.mxu0 0
        %1404 = vmatpush1.bf16.msra.mxu0 0
        %1405 = vmatprep.subr.bf16.mxu0 0
        %1406 = vmatpush1.bf16.msra.mxu0 0
        %1407 = vmatprep.subr.bf16.mxu0 0
        %1408 = vmatpush1.bf16.msra.mxu0 0
        %1409 = vmatprep.subr.bf16.mxu0 0
        %1410 = vmatpush1.bf16.msra.mxu0 0
        %1411 = vmatprep.subr.bf16.mxu0 0
        %1412 = vmatpush1.bf16.msra.mxu0 0
        %1413 = vmatprep.subr.bf16.mxu0 0
        %1414 = vmatpush1.bf16.msra.mxu0 0
        %1415 = vmatprep.subr.bf16.mxu0 %v1107
        %1416 = vmatpush1.bf16.msra.mxu0 %v1106
        %1417 = vmatprep.subr.bf16.mxu0 %v1091
        %1418 = vmatpush1.bf16.msra.mxu0 %v1090
        %1419 = vmatprep.subr.bf16.mxu0 0
        %1420 = vmatpush2.bf16.msra.mxu0 0
        %1421 = vmatprep.subr.bf16.mxu0 0
        %1422 = vmatpush2.bf16.msra.mxu0 0
        %1423 = vmatprep.subr.bf16.mxu0 0
        %1424 = vmatpush2.bf16.msra.mxu0 0
        %1425 = vmatprep.subr.bf16.mxu0 0
        %1426 = vmatpush2.bf16.msra.mxu0 0
        %1427 = vmatprep.subr.bf16.mxu0 0
        %1428 = vmatpush2.bf16.msra.mxu0 0
        %1429 = vmatprep.subr.bf16.mxu0 0
        %1430 = vmatpush2.bf16.msra.mxu0 0
        %1431 = vmatprep.subr.bf16.mxu0 0
        %1432 = vmatpush2.bf16.msra.mxu0 0
        %1433 = vmatprep.subr.bf16.mxu0 0
        %1434 = vmatpush2.bf16.msra.mxu0 0
        %1435 = vmatprep.mubr.bf16.mxu0 0
        %1436 = vmatmul.mubr.bf16.gmra.mxu0 %v1143
        %v1437 = vpop.f32.mrf.mxu0
        %v1438 = vadd.f32 %v953, %v1437
        %v1439 = vpop.f32.mrf.mxu0
        %v1440 = vadd.f32 %v957, %v1439
        %v1441 = vpop.f32.mrf.mxu0
        %v1442 = vadd.f32 %v953, %v1441
        %v1443 = vpop.f32.mrf.mxu0
        %v1444 = vadd.f32 %v957, %v1443
        %1445 = vdwg.mxu0
        %1446 = vmatprep.subr.bf16.mxu0 0
        %1447 = vmatpush1.bf16.msra.mxu0 0
        %1448 = vmatprep.subr.bf16.mxu0 0
        %1449 = vmatpush1.bf16.msra.mxu0 0
        %1450 = vmatprep.subr.bf16.mxu0 0
        %1451 = vmatpush1.bf16.msra.mxu0 0
        %1452 = vmatprep.subr.bf16.mxu0 0
        %1453 = vmatpush1.bf16.msra.mxu0 0
        %1454 = vmatprep.subr.bf16.mxu0 0
        %1455 = vmatpush1.bf16.msra.mxu0 0
        %1456 = vmatprep.subr.bf16.mxu0 0
        %1457 = vmatpush1.bf16.msra.mxu0 0
        %1458 = vmatprep.subr.bf16.mxu0 %v1109
        %1459 = vmatpush1.bf16.msra.mxu0 %v1108
        %1460 = vmatprep.subr.bf16.mxu0 %v1093
        %1461 = vmatpush1.bf16.msra.mxu0 %v1092
        %1462 = vmatprep.subr.bf16.mxu0 0
        %1463 = vmatpush2.bf16.msra.mxu0 0
        %1464 = vmatprep.subr.bf16.mxu0 0
        %1465 = vmatpush2.bf16.msra.mxu0 0
        %1466 = vmatprep.subr.bf16.mxu0 0
        %1467 = vmatpush2.bf16.msra.mxu0 0
        %1468 = vmatprep.subr.bf16.mxu0 0
        %1469 = vmatpush2.bf16.msra.mxu0 0
        %1470 = vmatprep.subr.bf16.mxu0 0
        %1471 = vmatpush2.bf16.msra.mxu0 0
        %1472 = vmatprep.subr.bf16.mxu0 0
        %1473 = vmatpush2.bf16.msra.mxu0 0
        %1474 = vmatprep.subr.bf16.mxu0 0
        %1475 = vmatpush2.bf16.msra.mxu0 0
        %1476 = vmatprep.subr.bf16.mxu0 0
        %1477 = vmatpush2.bf16.msra.mxu0 0
        %1478 = vmatprep.mubr.bf16.mxu0 0
        %1479 = vmatmul.mubr.bf16.gmra.mxu0 %v1143
        %v1480 = vpop.f32.mrf.mxu0
        %v1481 = vadd.f32 %v961, %v1480
        %v1482 = vpop.f32.mrf.mxu0
        %v1483 = vadd.f32 %v965, %v1482
        %v1484 = vpop.f32.mrf.mxu0
        %v1485 = vadd.f32 %v961, %v1484
        %v1486 = vpop.f32.mrf.mxu0
        %v1487 = vadd.f32 %v965, %v1486
        %1488 = vdwg.mxu0
        %v1489 = vmax.f32 %v1180, 0.0
        %v1490 = vmax.f32 %v1182, 0.0
        %v1491 = vmax.f32 %v1223, 0.0
        %v1492 = vmax.f32 %v1225, 0.0
        %v1493 = vmax.f32 %v1266, 0.0
        %v1494 = vmax.f32 %v1268, 0.0
        %v1495 = vmax.f32 %v1309, 0.0
        %v1496 = vmax.f32 %v1311, 0.0
        %v1497 = vmax.f32 %v1352, 0.0
        %v1498 = vmax.f32 %v1354, 0.0
        %v1499 = vmax.f32 %v1395, 0.0
        %v1500 = vmax.f32 %v1397, 0.0
        %v1501 = vmax.f32 %v1438, 0.0
        %v1502 = vmax.f32 %v1440, 0.0
        %v1503 = vmax.f32 %v1481, 0.0
        %v1504 = vmax.f32 %v1483, 0.0
        %v1505 = vmax.f32 %v1184, 0.0
        %v1506 = vmax.f32 %v1186, 0.0
        %v1507 = vmax.f32 %v1227, 0.0
        %v1508 = vmax.f32 %v1229, 0.0
        %v1509 = vmax.f32 %v1270, 0.0
        %v1510 = vmax.f32 %v1272, 0.0
        %v1511 = vmax.f32 %v1313, 0.0
        %v1512 = vmax.f32 %v1315, 0.0
        %v1513 = vmax.f32 %v1356, 0.0
        %v1514 = vmax.f32 %v1358, 0.0
        %v1515 = vmax.f32 %v1399, 0.0
        %v1516 = vmax.f32 %v1401, 0.0
        %v1517 = vmax.f32 %v1442, 0.0
        %v1518 = vmax.f32 %v1444, 0.0
        %v1519 = vmax.f32 %v1485, 0.0
        %v1520 = vmax.f32 %v1487, 0.0
        %v1521 = vpack.c.bf16 %v1505, %v1489
        %v1522 = vpack.c.bf16 %v1506, %v1490
        %v1523 = vpack.c.bf16 %v1507, %v1491
        %v1524 = vpack.c.bf16 %v1508, %v1492
        %v1525 = vpack.c.bf16 %v1509, %v1493
        %v1526 = vpack.c.bf16 %v1510, %v1494
        %v1527 = vpack.c.bf16 %v1511, %v1495
        %v1528 = vpack.c.bf16 %v1512, %v1496
        %v1529 = vpack.c.bf16 %v1513, %v1497
        %v1530 = vpack.c.bf16 %v1514, %v1498
        %v1531 = vpack.c.bf16 %v1515, %v1499
        %v1532 = vpack.c.bf16 %v1516, %v1500
        %v1533 = vpack.c.bf16 %v1517, %v1501
        %v1534 = vpack.c.bf16 %v1518, %v1502
        %v1535 = vpack.c.bf16 %v1519, %v1503
        %v1536 = vpack.c.bf16 %v1520, %v1504
        %v1537 = vld [vmem:[%s627] sm:$0xf]
        %v1538 = vld [vmem:[%s627 + $0x4] sm:$0xf]
        %v1539 = vld [vmem:[%s627 + $0x8] sm:$0xf]
        %v1540 = vld [vmem:[%s627 + $0xc] sm:$0xf]
        %v1541 = vld [vmem:[%s627 + $0x10] sm:$0xf]
        %v1542 = vld [vmem:[%s627 + $0x14] sm:$0xf]
        %v1543 = vld [vmem:[%s627 + $0x18] sm:$0xf]
        %v1544 = vld [vmem:[%s627 + $0x1c] sm:$0xf]
        %v1545 = vld [vmem:[%s627 + $0x20] sm:$0xf]
        %v1546 = vld [vmem:[%s627 + $0x24] sm:$0xf]
        %v1547 = vld [vmem:[%s627 + $0x28] sm:$0xf]
        %v1548 = vld [vmem:[%s627 + $0x2c] sm:$0xf]
        %v1549 = vld [vmem:[%s627 + $0x30] sm:$0xf]
        %v1550 = vld [vmem:[%s627 + $0x34] sm:$0xf]
        %v1551 = vld [vmem:[%s627 + $0x38] sm:$0xf]
        %v1552 = vld [vmem:[%s627 + $0x3c] sm:$0xf]
        %v1553 = vld [vmem:[%s627 + $0x40] sm:$0xf]
        %v1554 = vld [vmem:[%s627 + $0x44] sm:$0xf]
        %v1555 = vld [vmem:[%s627 + $0x48] sm:$0xf]
        %v1556 = vld [vmem:[%s627 + $0x4c] sm:$0xf]
        %v1557 = vld [vmem:[%s627 + $0x50] sm:$0xf]
        %v1558 = vld [vmem:[%s627 + $0x54] sm:$0xf]
        %v1559 = vld [vmem:[%s627 + $0x58] sm:$0xf]
        %v1560 = vld [vmem:[%s627 + $0x5c] sm:$0xf]
        %v1561 = vld [vmem:[%s627 + $0x60] sm:$0xf]
        %v1562 = vld [vmem:[%s627 + $0x64] sm:$0xf]
        %v1563 = vld [vmem:[%s627 + $0x68] sm:$0xf]
        %v1564 = vld [vmem:[%s627 + $0x6c] sm:$0xf]
        %v1565 = vld [vmem:[%s627 + $0x70] sm:$0xf]
        %v1566 = vld [vmem:[%s627 + $0x74] sm:$0xf]
        %v1567 = vld [vmem:[%s627 + $0x78] sm:$0xf]
        %v1568 = vld [vmem:[%s627 + $0x7c] sm:$0xf]
        %v1569 = vld [vmem:[%s627 + $0x80] sm:$0xf]
        %v1570 = vld [vmem:[%s627 + $0x84] sm:$0xf]
        %v1571 = vld [vmem:[%s627 + $0x88] sm:$0xf]
        %v1572 = vld [vmem:[%s627 + $0x8c] sm:$0xf]
        %v1573 = vld [vmem:[%s627 + $0x90] sm:$0xf]
        %v1574 = vld [vmem:[%s627 + $0x94] sm:$0xf]
        %v1575 = vld [vmem:[%s627 + $0x98] sm:$0xf]
        %v1576 = vld [vmem:[%s627 + $0x9c] sm:$0xf]
        %v1577 = vld [vmem:[%s627 + $0xa0] sm:$0xf]
        %v1578 = vld [vmem:[%s627 + $0xa4] sm:$0xf]
        %v1579 = vld [vmem:[%s627 + $0xa8] sm:$0xf]
        %v1580 = vld [vmem:[%s627 + $0xac] sm:$0xf]
        %v1581 = vld [vmem:[%s627 + $0xb0] sm:$0xf]
        %v1582 = vld [vmem:[%s627 + $0xb4] sm:$0xf]
        %v1583 = vld [vmem:[%s627 + $0xb8] sm:$0xf]
        %v1584 = vld [vmem:[%s627 + $0xbc] sm:$0xf]
        %v1585 = vld [vmem:[%s627 + $0xc0] sm:$0xf]
        %v1586 = vld [vmem:[%s627 + $0xc4] sm:$0xf]
        %v1587 = vld [vmem:[%s627 + $0xc8] sm:$0xf]
        %v1588 = vld [vmem:[%s627 + $0xcc] sm:$0xf]
        %v1589 = vld [vmem:[%s627 + $0xd0] sm:$0xf]
        %v1590 = vld [vmem:[%s627 + $0xd4] sm:$0xf]
        %v1591 = vld [vmem:[%s627 + $0xd8] sm:$0xf]
        %v1592 = vld [vmem:[%s627 + $0xdc] sm:$0xf]
        %v1593 = vld [vmem:[%s627 + $0xe0] sm:$0xf]
        %v1594 = vld [vmem:[%s627 + $0xe4] sm:$0xf]
        %v1595 = vld [vmem:[%s627 + $0xe8] sm:$0xf]
        %v1596 = vld [vmem:[%s627 + $0xec] sm:$0xf]
        %v1597 = vld [vmem:[%s627 + $0xf0] sm:$0xf]
        %v1598 = vld [vmem:[%s627 + $0xf4] sm:$0xf]
        %v1599 = vld [vmem:[%s627 + $0xf8] sm:$0xf]
        %v1600 = vld [vmem:[%s627 + $0xfc] sm:$0xf]
        %v1601 = vld [vmem:[%s627 + $0x100] sm:$0xf]
        %v1602 = vld [vmem:[%s627 + $0x104] sm:$0xf]
        %v1603 = vld [vmem:[%s627 + $0x108] sm:$0xf]
        %v1604 = vld [vmem:[%s627 + $0x10c] sm:$0xf]
        %v1605 = vld [vmem:[%s627 + $0x110] sm:$0xf]
        %v1606 = vld [vmem:[%s627 + $0x114] sm:$0xf]
        %v1607 = vld [vmem:[%s627 + $0x118] sm:$0xf]
        %v1608 = vld [vmem:[%s627 + $0x11c] sm:$0xf]
        %v1609 = vld [vmem:[%s627 + $0x120] sm:$0xf]
        %v1610 = vld [vmem:[%s627 + $0x124] sm:$0xf]
        %v1611 = vld [vmem:[%s627 + $0x128] sm:$0xf]
        %v1612 = vld [vmem:[%s627 + $0x12c] sm:$0xf]
        %v1613 = vld [vmem:[%s627 + $0x130] sm:$0xf]
        %v1614 = vld [vmem:[%s627 + $0x134] sm:$0xf]
        %v1615 = vld [vmem:[%s627 + $0x138] sm:$0xf]
        %v1616 = vld [vmem:[%s627 + $0x13c] sm:$0xf]
        %v1617 = vld [vmem:[%s627 + $0x140] sm:$0xf]
        %v1618 = vld [vmem:[%s627 + $0x144] sm:$0xf]
        %v1619 = vld [vmem:[%s627 + $0x148] sm:$0xf]
        %v1620 = vld [vmem:[%s627 + $0x14c] sm:$0xf]
        %v1621 = vld [vmem:[%s627 + $0x150] sm:$0xf]
        %v1622 = vld [vmem:[%s627 + $0x154] sm:$0xf]
        %v1623 = vld [vmem:[%s627 + $0x158] sm:$0xf]
        %v1624 = vld [vmem:[%s627 + $0x15c] sm:$0xf]
        %v1625 = vld [vmem:[%s627 + $0x160] sm:$0xf]
        %v1626 = vld [vmem:[%s627 + $0x164] sm:$0xf]
        %v1627 = vld [vmem:[%s627 + $0x168] sm:$0xf]
        %v1628 = vld [vmem:[%s627 + $0x16c] sm:$0xf]
        %v1629 = vld [vmem:[%s627 + $0x170] sm:$0xf]
        %v1630 = vld [vmem:[%s627 + $0x174] sm:$0xf]
        %v1631 = vld [vmem:[%s627 + $0x178] sm:$0xf]
        %v1632 = vld [vmem:[%s627 + $0x17c] sm:$0xf]
        %v1633 = vld [vmem:[%s627 + $0x180] sm:$0xf]
        %v1634 = vld [vmem:[%s627 + $0x184] sm:$0xf]
        %v1635 = vld [vmem:[%s627 + $0x188] sm:$0xf]
        %v1636 = vld [vmem:[%s627 + $0x18c] sm:$0xf]
        %v1637 = vld [vmem:[%s627 + $0x190] sm:$0xf]
        %v1638 = vld [vmem:[%s627 + $0x194] sm:$0xf]
        %v1639 = vld [vmem:[%s627 + $0x198] sm:$0xf]
        %v1640 = vld [vmem:[%s627 + $0x19c] sm:$0xf]
        %v1641 = vld [vmem:[%s627 + $0x1a0] sm:$0xf]
        %v1642 = vld [vmem:[%s627 + $0x1a4] sm:$0xf]
        %v1643 = vld [vmem:[%s627 + $0x1a8] sm:$0xf]
        %v1644 = vld [vmem:[%s627 + $0x1ac] sm:$0xf]
        %v1645 = vld [vmem:[%s627 + $0x1b0] sm:$0xf]
        %v1646 = vld [vmem:[%s627 + $0x1b4] sm:$0xf]
        %v1647 = vld [vmem:[%s627 + $0x1b8] sm:$0xf]
        %v1648 = vld [vmem:[%s627 + $0x1bc] sm:$0xf]
        %v1649 = vld [vmem:[%s627 + $0x1c0] sm:$0xf]
        %v1650 = vld [vmem:[%s627 + $0x1c4] sm:$0xf]
        %v1651 = vld [vmem:[%s627 + $0x1c8] sm:$0xf]
        %v1652 = vld [vmem:[%s627 + $0x1cc] sm:$0xf]
        %v1653 = vld [vmem:[%s627 + $0x1d0] sm:$0xf]
        %v1654 = vld [vmem:[%s627 + $0x1d4] sm:$0xf]
        %v1655 = vld [vmem:[%s627 + $0x1d8] sm:$0xf]
        %v1656 = vld [vmem:[%s627 + $0x1dc] sm:$0xf]
        %v1657 = vld [vmem:[%s627 + $0x1e0] sm:$0xf]
        %v1658 = vld [vmem:[%s627 + $0x1e4] sm:$0xf]
        %v1659 = vld [vmem:[%s627 + $0x1e8] sm:$0xf]
        %v1660 = vld [vmem:[%s627 + $0x1ec] sm:$0xf]
        %v1661 = vld [vmem:[%s627 + $0x1f0] sm:$0xf]
        %v1662 = vld [vmem:[%s627 + $0x1f4] sm:$0xf]
        %v1663 = vld [vmem:[%s627 + $0x1f8] sm:$0xf]
        %v1664 = vld [vmem:[%s627 + $0x1fc] sm:$0xf]
        %v1665 = vld [vmem:[%s627 + $0x200] sm:$0xf]
        %v1666 = vld [vmem:[%s627 + $0x204] sm:$0xf]
        %v1667 = vld [vmem:[%s627 + $0x208] sm:$0xf]
        %v1668 = vld [vmem:[%s627 + $0x20c] sm:$0xf]
        %v1669 = vld [vmem:[%s627 + $0x210] sm:$0xf]
        %v1670 = vld [vmem:[%s627 + $0x214] sm:$0xf]
        %v1671 = vld [vmem:[%s627 + $0x218] sm:$0xf]
        %v1672 = vld [vmem:[%s627 + $0x21c] sm:$0xf]
        %v1673 = vld [vmem:[%s627 + $0x220] sm:$0xf]
        %v1674 = vld [vmem:[%s627 + $0x224] sm:$0xf]
        %v1675 = vld [vmem:[%s627 + $0x228] sm:$0xf]
        %v1676 = vld [vmem:[%s627 + $0x22c] sm:$0xf]
        %v1677 = vld [vmem:[%s627 + $0x230] sm:$0xf]
        %v1678 = vld [vmem:[%s627 + $0x234] sm:$0xf]
        %v1679 = vld [vmem:[%s627 + $0x238] sm:$0xf]
        %v1680 = vld [vmem:[%s627 + $0x23c] sm:$0xf]
        %v1681 = vld [vmem:[%s627 + $0x240] sm:$0xf]
        %v1682 = vld [vmem:[%s627 + $0x244] sm:$0xf]
        %v1683 = vld [vmem:[%s627 + $0x248] sm:$0xf]
        %v1684 = vld [vmem:[%s627 + $0x24c] sm:$0xf]
        %v1685 = vld [vmem:[%s627 + $0x250] sm:$0xf]
        %v1686 = vld [vmem:[%s627 + $0x254] sm:$0xf]
        %v1687 = vld [vmem:[%s627 + $0x258] sm:$0xf]
        %v1688 = vld [vmem:[%s627 + $0x25c] sm:$0xf]
        %v1689 = vld [vmem:[%s627 + $0x260] sm:$0xf]
        %v1690 = vld [vmem:[%s627 + $0x264] sm:$0xf]
        %v1691 = vld [vmem:[%s627 + $0x268] sm:$0xf]
        %v1692 = vld [vmem:[%s627 + $0x26c] sm:$0xf]
        %v1693 = vld [vmem:[%s627 + $0x270] sm:$0xf]
        %v1694 = vld [vmem:[%s627 + $0x274] sm:$0xf]
        %v1695 = vld [vmem:[%s627 + $0x278] sm:$0xf]
        %v1696 = vld [vmem:[%s627 + $0x27c] sm:$0xf]
        %v1697 = vld [vmem:[%s627 + $0x280] sm:$0xf]
        %v1698 = vld [vmem:[%s627 + $0x284] sm:$0xf]
        %v1699 = vld [vmem:[%s627 + $0x288] sm:$0xf]
        %v1700 = vld [vmem:[%s627 + $0x28c] sm:$0xf]
        %v1701 = vld [vmem:[%s627 + $0x290] sm:$0xf]
        %v1702 = vld [vmem:[%s627 + $0x294] sm:$0xf]
        %v1703 = vld [vmem:[%s627 + $0x298] sm:$0xf]
        %v1704 = vld [vmem:[%s627 + $0x29c] sm:$0xf]
        %v1705 = vld [vmem:[%s627 + $0x2a0] sm:$0xf]
        %v1706 = vld [vmem:[%s627 + $0x2a4] sm:$0xf]
        %v1707 = vld [vmem:[%s627 + $0x2a8] sm:$0xf]
        %v1708 = vld [vmem:[%s627 + $0x2ac] sm:$0xf]
        %v1709 = vld [vmem:[%s627 + $0x2b0] sm:$0xf]
        %v1710 = vld [vmem:[%s627 + $0x2b4] sm:$0xf]
        %v1711 = vld [vmem:[%s627 + $0x2b8] sm:$0xf]
        %v1712 = vld [vmem:[%s627 + $0x2bc] sm:$0xf]
        %v1713 = vld [vmem:[%s627 + $0x2c0] sm:$0xf]
        %v1714 = vld [vmem:[%s627 + $0x2c4] sm:$0xf]
        %v1715 = vld [vmem:[%s627 + $0x2c8] sm:$0xf]
        %v1716 = vld [vmem:[%s627 + $0x2cc] sm:$0xf]
        %v1717 = vld [vmem:[%s627 + $0x2d0] sm:$0xf]
        %v1718 = vld [vmem:[%s627 + $0x2d4] sm:$0xf]
        %v1719 = vld [vmem:[%s627 + $0x2d8] sm:$0xf]
        %v1720 = vld [vmem:[%s627 + $0x2dc] sm:$0xf]
        %v1721 = vld [vmem:[%s627 + $0x2e0] sm:$0xf]
        %v1722 = vld [vmem:[%s627 + $0x2e4] sm:$0xf]
        %v1723 = vld [vmem:[%s627 + $0x2e8] sm:$0xf]
        %v1724 = vld [vmem:[%s627 + $0x2ec] sm:$0xf]
        %v1725 = vld [vmem:[%s627 + $0x2f0] sm:$0xf]
        %v1726 = vld [vmem:[%s627 + $0x2f4] sm:$0xf]
        %v1727 = vld [vmem:[%s627 + $0x2f8] sm:$0xf]
        %v1728 = vld [vmem:[%s627 + $0x2fc] sm:$0xf]
        %v1729 = vld [vmem:[%s627 + $0x300] sm:$0xf]
        %v1730 = vld [vmem:[%s627 + $0x304] sm:$0xf]
        %v1731 = vld [vmem:[%s627 + $0x308] sm:$0xf]
        %v1732 = vld [vmem:[%s627 + $0x30c] sm:$0xf]
        %v1733 = vld [vmem:[%s627 + $0x310] sm:$0xf]
        %v1734 = vld [vmem:[%s627 + $0x314] sm:$0xf]
        %v1735 = vld [vmem:[%s627 + $0x318] sm:$0xf]
        %v1736 = vld [vmem:[%s627 + $0x31c] sm:$0xf]
        %v1737 = vld [vmem:[%s627 + $0x320] sm:$0xf]
        %v1738 = vld [vmem:[%s627 + $0x324] sm:$0xf]
        %v1739 = vld [vmem:[%s627 + $0x328] sm:$0xf]
        %v1740 = vld [vmem:[%s627 + $0x32c] sm:$0xf]
        %v1741 = vld [vmem:[%s627 + $0x330] sm:$0xf]
        %v1742 = vld [vmem:[%s627 + $0x334] sm:$0xf]
        %v1743 = vld [vmem:[%s627 + $0x338] sm:$0xf]
        %v1744 = vld [vmem:[%s627 + $0x33c] sm:$0xf]
        %v1745 = vld [vmem:[%s627 + $0x340] sm:$0xf]
        %v1746 = vld [vmem:[%s627 + $0x344] sm:$0xf]
        %v1747 = vld [vmem:[%s627 + $0x348] sm:$0xf]
        %v1748 = vld [vmem:[%s627 + $0x34c] sm:$0xf]
        %v1749 = vld [vmem:[%s627 + $0x350] sm:$0xf]
        %v1750 = vld [vmem:[%s627 + $0x354] sm:$0xf]
        %v1751 = vld [vmem:[%s627 + $0x358] sm:$0xf]
        %v1752 = vld [vmem:[%s627 + $0x35c] sm:$0xf]
        %v1753 = vld [vmem:[%s627 + $0x360] sm:$0xf]
        %v1754 = vld [vmem:[%s627 + $0x364] sm:$0xf]
        %v1755 = vld [vmem:[%s627 + $0x368] sm:$0xf]
        %v1756 = vld [vmem:[%s627 + $0x36c] sm:$0xf]
        %v1757 = vld [vmem:[%s627 + $0x370] sm:$0xf]
        %v1758 = vld [vmem:[%s627 + $0x374] sm:$0xf]
        %v1759 = vld [vmem:[%s627 + $0x378] sm:$0xf]
        %v1760 = vld [vmem:[%s627 + $0x37c] sm:$0xf]
        %v1761 = vld [vmem:[%s627 + $0x380] sm:$0xf]
        %v1762 = vld [vmem:[%s627 + $0x384] sm:$0xf]
        %v1763 = vld [vmem:[%s627 + $0x388] sm:$0xf]
        %v1764 = vld [vmem:[%s627 + $0x38c] sm:$0xf]
        %v1765 = vld [vmem:[%s627 + $0x390] sm:$0xf]
        %v1766 = vld [vmem:[%s627 + $0x394] sm:$0xf]
        %v1767 = vld [vmem:[%s627 + $0x398] sm:$0xf]
        %v1768 = vld [vmem:[%s627 + $0x39c] sm:$0xf]
        %v1769 = vld [vmem:[%s627 + $0x3a0] sm:$0xf]
        %v1770 = vld [vmem:[%s627 + $0x3a4] sm:$0xf]
        %v1771 = vld [vmem:[%s627 + $0x3a8] sm:$0xf]
        %v1772 = vld [vmem:[%s627 + $0x3ac] sm:$0xf]
        %v1773 = vld [vmem:[%s627 + $0x3b0] sm:$0xf]
        %v1774 = vld [vmem:[%s627 + $0x3b4] sm:$0xf]
        %v1775 = vld [vmem:[%s627 + $0x3b8] sm:$0xf]
        %v1776 = vld [vmem:[%s627 + $0x3bc] sm:$0xf]
        %v1777 = vld [vmem:[%s627 + $0x3c0] sm:$0xf]
        %v1778 = vld [vmem:[%s627 + $0x3c4] sm:$0xf]
        %v1779 = vld [vmem:[%s627 + $0x3c8] sm:$0xf]
        %v1780 = vld [vmem:[%s627 + $0x3cc] sm:$0xf]
        %v1781 = vld [vmem:[%s627 + $0x3d0] sm:$0xf]
        %v1782 = vld [vmem:[%s627 + $0x3d4] sm:$0xf]
        %v1783 = vld [vmem:[%s627 + $0x3d8] sm:$0xf]
        %v1784 = vld [vmem:[%s627 + $0x3dc] sm:$0xf]
        %v1785 = vld [vmem:[%s627 + $0x3e0] sm:$0xf]
        %v1786 = vld [vmem:[%s627 + $0x3e4] sm:$0xf]
        %v1787 = vld [vmem:[%s627 + $0x3e8] sm:$0xf]
        %v1788 = vld [vmem:[%s627 + $0x3ec] sm:$0xf]
        %v1789 = vld [vmem:[%s627 + $0x3f0] sm:$0xf]
        %v1790 = vld [vmem:[%s627 + $0x3f4] sm:$0xf]
        %v1791 = vld [vmem:[%s627 + $0x3f8] sm:$0xf]
        %v1792 = vld [vmem:[%s627 + $0x3fc] sm:$0xf]
        %v1793 = vld [vmem:[%s601 + $0x21] sm:$0x1]
        %v1794 = vlaneseq
        %v1795 = vshrl.u32 %v1794, 7
        %v1796 = vsub.s32 0, %v1795
        %v1797 = vrot.slane %v1793, %v1796
        %v2054 = vunpack.c.l.b16 %v1537
        %v2055 = vunpack.c.l.b16 %v1538
        %v2056 = vunpack.c.l.b16 %v1539
        %v2057 = vunpack.c.l.b16 %v1540
        %v2058 = vunpack.c.l.b16 %v1541
        %v2059 = vunpack.c.l.b16 %v1542
        %v2060 = vunpack.c.l.b16 %v1543
        %v2061 = vunpack.c.l.b16 %v1544
        %v2062 = vunpack.c.l.b16 %v1545
        %v2063 = vunpack.c.l.b16 %v1546
        %v2064 = vunpack.c.l.b16 %v1547
        %v2065 = vunpack.c.l.b16 %v1548
        %v2066 = vunpack.c.l.b16 %v1549
        %v2067 = vunpack.c.l.b16 %v1550
        %v2068 = vunpack.c.l.b16 %v1551
        %v2069 = vunpack.c.l.b16 %v1552
        %v2070 = vunpack.c.l.b16 %v1553
        %v2071 = vunpack.c.l.b16 %v1554
        %v2072 = vunpack.c.l.b16 %v1555
        %v2073 = vunpack.c.l.b16 %v1556
        %v2074 = vunpack.c.l.b16 %v1557
        %v2075 = vunpack.c.l.b16 %v1558
        %v2076 = vunpack.c.l.b16 %v1559
        %v2077 = vunpack.c.l.b16 %v1560
        %v2078 = vunpack.c.l.b16 %v1561
        %v2079 = vunpack.c.l.b16 %v1562
        %v2080 = vunpack.c.l.b16 %v1563
        %v2081 = vunpack.c.l.b16 %v1564
        %v2082 = vunpack.c.l.b16 %v1565
        %v2083 = vunpack.c.l.b16 %v1566
        %v2084 = vunpack.c.l.b16 %v1567
        %v2085 = vunpack.c.l.b16 %v1568
        %v2086 = vunpack.c.l.b16 %v1569
        %v2087 = vunpack.c.l.b16 %v1570
        %v2088 = vunpack.c.l.b16 %v1571
        %v2089 = vunpack.c.l.b16 %v1572
        %v2090 = vunpack.c.l.b16 %v1573
        %v2091 = vunpack.c.l.b16 %v1574
        %v2092 = vunpack.c.l.b16 %v1575
        %v2093 = vunpack.c.l.b16 %v1576
        %v2094 = vunpack.c.l.b16 %v1577
        %v2095 = vunpack.c.l.b16 %v1578
        %v2096 = vunpack.c.l.b16 %v1579
        %v2097 = vunpack.c.l.b16 %v1580
        %v2098 = vunpack.c.l.b16 %v1581
        %v2099 = vunpack.c.l.b16 %v1582
        %v2100 = vunpack.c.l.b16 %v1583
        %v2101 = vunpack.c.l.b16 %v1584
        %v2102 = vunpack.c.l.b16 %v1585
        %v2103 = vunpack.c.l.b16 %v1586
        %v2104 = vunpack.c.l.b16 %v1587
        %v2105 = vunpack.c.l.b16 %v1588
        %v2106 = vunpack.c.l.b16 %v1589
        %v2107 = vunpack.c.l.b16 %v1590
        %v2108 = vunpack.c.l.b16 %v1591
        %v2109 = vunpack.c.l.b16 %v1592
        %v2110 = vunpack.c.l.b16 %v1593
        %v2111 = vunpack.c.l.b16 %v1594
        %v2112 = vunpack.c.l.b16 %v1595
        %v2113 = vunpack.c.l.b16 %v1596
        %v2114 = vunpack.c.l.b16 %v1597
        %v2115 = vunpack.c.l.b16 %v1598
        %v2116 = vunpack.c.l.b16 %v1599
        %v2117 = vunpack.c.l.b16 %v1600
        %v2118 = vunpack.c.l.b16 %v1601
        %v2119 = vunpack.c.l.b16 %v1602
        %v2120 = vunpack.c.l.b16 %v1603
        %v2121 = vunpack.c.l.b16 %v1604
        %v2122 = vunpack.c.l.b16 %v1605
        %v2123 = vunpack.c.l.b16 %v1606
        %v2124 = vunpack.c.l.b16 %v1607
        %v2125 = vunpack.c.l.b16 %v1608
        %v2126 = vunpack.c.l.b16 %v1609
        %v2127 = vunpack.c.l.b16 %v1610
        %v2128 = vunpack.c.l.b16 %v1611
        %v2129 = vunpack.c.l.b16 %v1612
        %v2130 = vunpack.c.l.b16 %v1613
        %v2131 = vunpack.c.l.b16 %v1614
        %v2132 = vunpack.c.l.b16 %v1615
        %v2133 = vunpack.c.l.b16 %v1616
        %v2134 = vunpack.c.l.b16 %v1617
        %v2135 = vunpack.c.l.b16 %v1618
        %v2136 = vunpack.c.l.b16 %v1619
        %v2137 = vunpack.c.l.b16 %v1620
        %v2138 = vunpack.c.l.b16 %v1621
        %v2139 = vunpack.c.l.b16 %v1622
        %v2140 = vunpack.c.l.b16 %v1623
        %v2141 = vunpack.c.l.b16 %v1624
        %v2142 = vunpack.c.l.b16 %v1625
        %v2143 = vunpack.c.l.b16 %v1626
        %v2144 = vunpack.c.l.b16 %v1627
        %v2145 = vunpack.c.l.b16 %v1628
        %v2146 = vunpack.c.l.b16 %v1629
        %v2147 = vunpack.c.l.b16 %v1630
        %v2148 = vunpack.c.l.b16 %v1631
        %v2149 = vunpack.c.l.b16 %v1632
        %v2150 = vunpack.c.l.b16 %v1633
        %v2151 = vunpack.c.l.b16 %v1634
        %v2152 = vunpack.c.l.b16 %v1635
        %v2153 = vunpack.c.l.b16 %v1636
        %v2154 = vunpack.c.l.b16 %v1637
        %v2155 = vunpack.c.l.b16 %v1638
        %v2156 = vunpack.c.l.b16 %v1639
        %v2157 = vunpack.c.l.b16 %v1640
        %v2158 = vunpack.c.l.b16 %v1641
        %v2159 = vunpack.c.l.b16 %v1642
        %v2160 = vunpack.c.l.b16 %v1643
        %v2161 = vunpack.c.l.b16 %v1644
        %v2162 = vunpack.c.l.b16 %v1645
        %v2163 = vunpack.c.l.b16 %v1646
        %v2164 = vunpack.c.l.b16 %v1647
        %v2165 = vunpack.c.l.b16 %v1648
        %v2166 = vunpack.c.l.b16 %v1649
        %v2167 = vunpack.c.l.b16 %v1650
        %v2168 = vunpack.c.l.b16 %v1651
        %v2169 = vunpack.c.l.b16 %v1652
        %v2170 = vunpack.c.l.b16 %v1653
        %v2171 = vunpack.c.l.b16 %v1654
        %v2172 = vunpack.c.l.b16 %v1655
        %v2173 = vunpack.c.l.b16 %v1656
        %v2174 = vunpack.c.l.b16 %v1657
        %v2175 = vunpack.c.l.b16 %v1658
        %v2176 = vunpack.c.l.b16 %v1659
        %v2177 = vunpack.c.l.b16 %v1660
        %v2178 = vunpack.c.l.b16 %v1661
        %v2179 = vunpack.c.l.b16 %v1662
        %v2180 = vunpack.c.l.b16 %v1663
        %v2181 = vunpack.c.l.b16 %v1664
        %v2182 = vunpack.c.l.b16 %v1665
        %v2183 = vunpack.c.l.b16 %v1666
        %v2184 = vunpack.c.l.b16 %v1667
        %v2185 = vunpack.c.l.b16 %v1668
        %v2186 = vunpack.c.l.b16 %v1669
        %v2187 = vunpack.c.l.b16 %v1670
        %v2188 = vunpack.c.l.b16 %v1671
        %v2189 = vunpack.c.l.b16 %v1672
        %v2190 = vunpack.c.l.b16 %v1673
        %v2191 = vunpack.c.l.b16 %v1674
        %v2192 = vunpack.c.l.b16 %v1675
        %v2193 = vunpack.c.l.b16 %v1676
        %v2194 = vunpack.c.l.b16 %v1677
        %v2195 = vunpack.c.l.b16 %v1678
        %v2196 = vunpack.c.l.b16 %v1679
        %v2197 = vunpack.c.l.b16 %v1680
        %v2198 = vunpack.c.l.b16 %v1681
        %v2199 = vunpack.c.l.b16 %v1682
        %v2200 = vunpack.c.l.b16 %v1683
        %v2201 = vunpack.c.l.b16 %v1684
        %v2202 = vunpack.c.l.b16 %v1685
        %v2203 = vunpack.c.l.b16 %v1686
        %v2204 = vunpack.c.l.b16 %v1687
        %v2205 = vunpack.c.l.b16 %v1688
        %v2206 = vunpack.c.l.b16 %v1689
        %v2207 = vunpack.c.l.b16 %v1690
        %v2208 = vunpack.c.l.b16 %v1691
        %v2209 = vunpack.c.l.b16 %v1692
        %v2210 = vunpack.c.l.b16 %v1693
        %v2211 = vunpack.c.l.b16 %v1694
        %v2212 = vunpack.c.l.b16 %v1695
        %v2213 = vunpack.c.l.b16 %v1696
        %v2214 = vunpack.c.l.b16 %v1697
        %v2215 = vunpack.c.l.b16 %v1698
        %v2216 = vunpack.c.l.b16 %v1699
        %v2217 = vunpack.c.l.b16 %v1700
        %v2218 = vunpack.c.l.b16 %v1701
        %v2219 = vunpack.c.l.b16 %v1702
        %v2220 = vunpack.c.l.b16 %v1703
        %v2221 = vunpack.c.l.b16 %v1704
        %v2222 = vunpack.c.l.b16 %v1705
        %v2223 = vunpack.c.l.b16 %v1706
        %v2224 = vunpack.c.l.b16 %v1707
        %v2225 = vunpack.c.l.b16 %v1708
        %v2226 = vunpack.c.l.b16 %v1709
        %v2227 = vunpack.c.l.b16 %v1710
        %v2228 = vunpack.c.l.b16 %v1711
        %v2229 = vunpack.c.l.b16 %v1712
        %v2230 = vunpack.c.l.b16 %v1713
        %v2231 = vunpack.c.l.b16 %v1714
        %v2232 = vunpack.c.l.b16 %v1715
        %v2233 = vunpack.c.l.b16 %v1716
        %v2234 = vunpack.c.l.b16 %v1717
        %v2235 = vunpack.c.l.b16 %v1718
        %v2236 = vunpack.c.l.b16 %v1719
        %v2237 = vunpack.c.l.b16 %v1720
        %v2238 = vunpack.c.l.b16 %v1721
        %v2239 = vunpack.c.l.b16 %v1722
        %v2240 = vunpack.c.l.b16 %v1723
        %v2241 = vunpack.c.l.b16 %v1724
        %v2242 = vunpack.c.l.b16 %v1725
        %v2243 = vunpack.c.l.b16 %v1726
        %v2244 = vunpack.c.l.b16 %v1727
        %v2245 = vunpack.c.l.b16 %v1728
        %v2246 = vunpack.c.l.b16 %v1729
        %v2247 = vunpack.c.l.b16 %v1730
        %v2248 = vunpack.c.l.b16 %v1731
        %v2249 = vunpack.c.l.b16 %v1732
        %v2250 = vunpack.c.l.b16 %v1733
        %v2251 = vunpack.c.l.b16 %v1734
        %v2252 = vunpack.c.l.b16 %v1735
        %v2253 = vunpack.c.l.b16 %v1736
        %v2254 = vunpack.c.l.b16 %v1737
        %v2255 = vunpack.c.l.b16 %v1738
        %v2256 = vunpack.c.l.b16 %v1739
        %v2257 = vunpack.c.l.b16 %v1740
        %v2258 = vunpack.c.l.b16 %v1741
        %v2259 = vunpack.c.l.b16 %v1742
        %v2260 = vunpack.c.l.b16 %v1743
        %v2261 = vunpack.c.l.b16 %v1744
        %v2262 = vunpack.c.l.b16 %v1745
        %v2263 = vunpack.c.l.b16 %v1746
        %v2264 = vunpack.c.l.b16 %v1747
        %v2265 = vunpack.c.l.b16 %v1748
        %v2266 = vunpack.c.l.b16 %v1749
        %v2267 = vunpack.c.l.b16 %v1750
        %v2268 = vunpack.c.l.b16 %v1751
        %v2269 = vunpack.c.l.b16 %v1752
        %v2270 = vunpack.c.l.b16 %v1753
        %v2271 = vunpack.c.l.b16 %v1754
        %v2272 = vunpack.c.l.b16 %v1755
        %v2273 = vunpack.c.l.b16 %v1756
        %v2274 = vunpack.c.l.b16 %v1757
        %v2275 = vunpack.c.l.b16 %v1758
        %v2276 = vunpack.c.l.b16 %v1759
        %v2277 = vunpack.c.l.b16 %v1760
        %v2278 = vunpack.c.l.b16 %v1761
        %v2279 = vunpack.c.l.b16 %v1762
        %v2280 = vunpack.c.l.b16 %v1763
        %v2281 = vunpack.c.l.b16 %v1764
        %v2282 = vunpack.c.l.b16 %v1765
        %v2283 = vunpack.c.l.b16 %v1766
        %v2284 = vunpack.c.l.b16 %v1767
        %v2285 = vunpack.c.l.b16 %v1768
        %v2286 = vunpack.c.l.b16 %v1769
        %v2287 = vunpack.c.l.b16 %v1770
        %v2288 = vunpack.c.l.b16 %v1771
        %v2289 = vunpack.c.l.b16 %v1772
        %v2290 = vunpack.c.l.b16 %v1773
        %v2291 = vunpack.c.l.b16 %v1774
        %v2292 = vunpack.c.l.b16 %v1775
        %v2293 = vunpack.c.l.b16 %v1776
        %v2294 = vunpack.c.l.b16 %v1777
        %v2295 = vunpack.c.l.b16 %v1778
        %v2296 = vunpack.c.l.b16 %v1779
        %v2297 = vunpack.c.l.b16 %v1780
        %v2298 = vunpack.c.l.b16 %v1781
        %v2299 = vunpack.c.l.b16 %v1782
        %v2300 = vunpack.c.l.b16 %v1783
        %v2301 = vunpack.c.l.b16 %v1784
        %v2302 = vunpack.c.l.b16 %v1785
        %v2303 = vunpack.c.l.b16 %v1786
        %v2304 = vunpack.c.l.b16 %v1787
        %v2305 = vunpack.c.l.b16 %v1788
        %v2306 = vunpack.c.l.b16 %v1789
        %v2307 = vunpack.c.l.b16 %v1790
        %v2308 = vunpack.c.l.b16 %v1791
        %v2309 = vunpack.c.l.b16 %v1792
        %v2310 = vpack.c.b16 %v2055, %v2054
        %v2311 = vpack.c.b16 %v2057, %v2056
        %v2312 = vpack.c.b16 %v2059, %v2058
        %v2313 = vpack.c.b16 %v2061, %v2060
        %v2314 = vpack.c.b16 %v2063, %v2062
        %v2315 = vpack.c.b16 %v2065, %v2064
        %v2316 = vpack.c.b16 %v2067, %v2066
        %v2317 = vpack.c.b16 %v2069, %v2068
        %v2318 = vpack.c.b16 %v2071, %v2070
        %v2319 = vpack.c.b16 %v2073, %v2072
        %v2320 = vpack.c.b16 %v2075, %v2074
        %v2321 = vpack.c.b16 %v2077, %v2076
        %v2322 = vpack.c.b16 %v2079, %v2078
        %v2323 = vpack.c.b16 %v2081, %v2080
        %v2324 = vpack.c.b16 %v2083, %v2082
        %v2325 = vpack.c.b16 %v2085, %v2084
        %v2326 = vpack.c.b16 %v2087, %v2086
        %v2327 = vpack.c.b16 %v2089, %v2088
        %v2328 = vpack.c.b16 %v2091, %v2090
        %v2329 = vpack.c.b16 %v2093, %v2092
        %v2330 = vpack.c.b16 %v2095, %v2094
        %v2331 = vpack.c.b16 %v2097, %v2096
        %v2332 = vpack.c.b16 %v2099, %v2098
        %v2333 = vpack.c.b16 %v2101, %v2100
        %v2334 = vpack.c.b16 %v2103, %v2102
        %v2335 = vpack.c.b16 %v2105, %v2104
        %v2336 = vpack.c.b16 %v2107, %v2106
        %v2337 = vpack.c.b16 %v2109, %v2108
        %v2338 = vpack.c.b16 %v2111, %v2110
        %v2339 = vpack.c.b16 %v2113, %v2112
        %v2340 = vpack.c.b16 %v2115, %v2114
        %v2341 = vpack.c.b16 %v2117, %v2116
        %v2342 = vpack.c.b16 %v2119, %v2118
        %v2343 = vpack.c.b16 %v2121, %v2120
        %v2344 = vpack.c.b16 %v2123, %v2122
        %v2345 = vpack.c.b16 %v2125, %v2124
        %v2346 = vpack.c.b16 %v2127, %v2126
        %v2347 = vpack.c.b16 %v2129, %v2128
        %v2348 = vpack.c.b16 %v2131, %v2130
        %v2349 = vpack.c.b16 %v2133, %v2132
        %v2350 = vpack.c.b16 %v2135, %v2134
        %v2351 = vpack.c.b16 %v2137, %v2136
        %v2352 = vpack.c.b16 %v2139, %v2138
        %v2353 = vpack.c.b16 %v2141, %v2140
        %v2354 = vpack.c.b16 %v2143, %v2142
        %v2355 = vpack.c.b16 %v2145, %v2144
        %v2356 = vpack.c.b16 %v2147, %v2146
        %v2357 = vpack.c.b16 %v2149, %v2148
        %v2358 = vpack.c.b16 %v2151, %v2150
        %v2359 = vpack.c.b16 %v2153, %v2152
        %v2360 = vpack.c.b16 %v2155, %v2154
        %v2361 = vpack.c.b16 %v2157, %v2156
        %v2362 = vpack.c.b16 %v2159, %v2158
        %v2363 = vpack.c.b16 %v2161, %v2160
        %v2364 = vpack.c.b16 %v2163, %v2162
        %v2365 = vpack.c.b16 %v2165, %v2164
        %v2366 = vpack.c.b16 %v2167, %v2166
        %v2367 = vpack.c.b16 %v2169, %v2168
        %v2368 = vpack.c.b16 %v2171, %v2170
        %v2369 = vpack.c.b16 %v2173, %v2172
        %v2370 = vpack.c.b16 %v2175, %v2174
        %v2371 = vpack.c.b16 %v2177, %v2176
        %v2372 = vpack.c.b16 %v2179, %v2178
        %v2373 = vpack.c.b16 %v2181, %v2180
        %v2374 = vpack.c.b16 %v2183, %v2182
        %v2375 = vpack.c.b16 %v2185, %v2184
        %v2376 = vpack.c.b16 %v2187, %v2186
        %v2377 = vpack.c.b16 %v2189, %v2188
        %v2378 = vpack.c.b16 %v2191, %v2190
        %v2379 = vpack.c.b16 %v2193, %v2192
        %v2380 = vpack.c.b16 %v2195, %v2194
        %v2381 = vpack.c.b16 %v2197, %v2196
        %v2382 = vpack.c.b16 %v2199, %v2198
        %v2383 = vpack.c.b16 %v2201, %v2200
        %v2384 = vpack.c.b16 %v2203, %v2202
        %v2385 = vpack.c.b16 %v2205, %v2204
        %v2386 = vpack.c.b16 %v2207, %v2206
        %v2387 = vpack.c.b16 %v2209, %v2208
        %v2388 = vpack.c.b16 %v2211, %v2210
        %v2389 = vpack.c.b16 %v2213, %v2212
        %v2390 = vpack.c.b16 %v2215, %v2214
        %v2391 = vpack.c.b16 %v2217, %v2216
        %v2392 = vpack.c.b16 %v2219, %v2218
        %v2393 = vpack.c.b16 %v2221, %v2220
        %v2394 = vpack.c.b16 %v2223, %v2222
        %v2395 = vpack.c.b16 %v2225, %v2224
        %v2396 = vpack.c.b16 %v2227, %v2226
        %v2397 = vpack.c.b16 %v2229, %v2228
        %v2398 = vpack.c.b16 %v2231, %v2230
        %v2399 = vpack.c.b16 %v2233, %v2232
        %v2400 = vpack.c.b16 %v2235, %v2234
        %v2401 = vpack.c.b16 %v2237, %v2236
        %v2402 = vpack.c.b16 %v2239, %v2238
        %v2403 = vpack.c.b16 %v2241, %v2240
        %v2404 = vpack.c.b16 %v2243, %v2242
        %v2405 = vpack.c.b16 %v2245, %v2244
        %v2406 = vpack.c.b16 %v2247, %v2246
        %v2407 = vpack.c.b16 %v2249, %v2248
        %v2408 = vpack.c.b16 %v2251, %v2250
        %v2409 = vpack.c.b16 %v2253, %v2252
        %v2410 = vpack.c.b16 %v2255, %v2254
        %v2411 = vpack.c.b16 %v2257, %v2256
        %v2412 = vpack.c.b16 %v2259, %v2258
        %v2413 = vpack.c.b16 %v2261, %v2260
        %v2414 = vpack.c.b16 %v2263, %v2262
        %v2415 = vpack.c.b16 %v2265, %v2264
        %v2416 = vpack.c.b16 %v2267, %v2266
        %v2417 = vpack.c.b16 %v2269, %v2268
        %v2418 = vpack.c.b16 %v2271, %v2270
        %v2419 = vpack.c.b16 %v2273, %v2272
        %v2420 = vpack.c.b16 %v2275, %v2274
        %v2421 = vpack.c.b16 %v2277, %v2276
        %v2422 = vpack.c.b16 %v2279, %v2278
        %v2423 = vpack.c.b16 %v2281, %v2280
        %v2424 = vpack.c.b16 %v2283, %v2282
        %v2425 = vpack.c.b16 %v2285, %v2284
        %v2426 = vpack.c.b16 %v2287, %v2286
        %v2427 = vpack.c.b16 %v2289, %v2288
        %v2428 = vpack.c.b16 %v2291, %v2290
        %v2429 = vpack.c.b16 %v2293, %v2292
        %v2430 = vpack.c.b16 %v2295, %v2294
        %v2431 = vpack.c.b16 %v2297, %v2296
        %v2432 = vpack.c.b16 %v2299, %v2298
        %v2433 = vpack.c.b16 %v2301, %v2300
        %v2434 = vpack.c.b16 %v2303, %v2302
        %v2435 = vpack.c.b16 %v2305, %v2304
        %v2436 = vpack.c.b16 %v2307, %v2306
        %v2437 = vpack.c.b16 %v2309, %v2308
        %2566 = vmatprep.subr.bf16.mxu0 0
        %2567 = vmatpush1.bf16.msra.mxu0 %v2317
        %2568 = vmatprep.subr.bf16.mxu0 0
        %2569 = vmatpush1.bf16.msra.mxu0 %v2316
        %2570 = vmatprep.subr.bf16.mxu0 0
        %2571 = vmatpush1.bf16.msra.mxu0 %v2315
        %2572 = vmatprep.subr.bf16.mxu0 0
        %2573 = vmatpush1.bf16.msra.mxu0 %v2314
        %2574 = vmatprep.subr.bf16.mxu0 0
        %2575 = vmatpush1.bf16.msra.mxu0 %v2313
        %2576 = vmatprep.subr.bf16.mxu0 0
        %2577 = vmatpush1.bf16.msra.mxu0 %v2312
        %2578 = vmatprep.subr.bf16.mxu0 0
        %2579 = vmatpush1.bf16.msra.mxu0 %v2311
        %2580 = vmatprep.subr.bf16.mxu0 0
        %2581 = vmatpush1.bf16.msra.mxu0 %v2310
        %2582 = vmatprep.subr.bf16.mxu0 0
        %2583 = vmatpush2.bf16.msra.mxu0 %v2325
        %2584 = vmatprep.subr.bf16.mxu0 0
        %2585 = vmatpush2.bf16.msra.mxu0 %v2324
        %2586 = vmatprep.subr.bf16.mxu0 0
        %2587 = vmatpush2.bf16.msra.mxu0 %v2323
        %2588 = vmatprep.subr.bf16.mxu0 0
        %2589 = vmatpush2.bf16.msra.mxu0 %v2322
        %2590 = vmatprep.subr.bf16.mxu0 0
        %2591 = vmatpush2.bf16.msra.mxu0 %v2321
        %2592 = vmatprep.subr.bf16.mxu0 0
        %2593 = vmatpush2.bf16.msra.mxu0 %v2320
        %2594 = vmatprep.subr.bf16.mxu0 0
        %2595 = vmatpush2.bf16.msra.mxu0 %v2319
        %2596 = vmatprep.subr.bf16.mxu0 0
        %2597 = vmatpush2.bf16.msra.mxu0 %v2318
        %2598 = vmatprep.mubr.bf16.mxu0 %v1522
        %2599 = vmatmul.mubr.bf16.gmra.mxu0 %v1521
        %v2600 = vpop.f32.mrf.mxu0
        %v2601 = vadd.f32 %v1797, %v2600
        %v2602 = vpop.f32.mrf.mxu0
        %v2603 = vpop.f32.mrf.mxu0
        %v2604 = vadd.f32 %v1797, %v2603
        %v2605 = vpop.f32.mrf.mxu0
        %2606 = vdwg.mxu0
        %2607 = vmatprep.subr.bf16.mxu0 0
        %2608 = vmatpush1.bf16.msra.mxu0 %v2333
        %2609 = vmatprep.subr.bf16.mxu0 0
        %2610 = vmatpush1.bf16.msra.mxu0 %v2332
        %2611 = vmatprep.subr.bf16.mxu0 0
        %2612 = vmatpush1.bf16.msra.mxu0 %v2331
        %2613 = vmatprep.subr.bf16.mxu0 0
        %2614 = vmatpush1.bf16.msra.mxu0 %v2330
        %2615 = vmatprep.subr.bf16.mxu0 0
        %2616 = vmatpush1.bf16.msra.mxu0 %v2329
        %2617 = vmatprep.subr.bf16.mxu0 0
        %2618 = vmatpush1.bf16.msra.mxu0 %v2328
        %2619 = vmatprep.subr.bf16.mxu0 0
        %2620 = vmatpush1.bf16.msra.mxu0 %v2327
        %2621 = vmatprep.subr.bf16.mxu0 0
        %2622 = vmatpush1.bf16.msra.mxu0 %v2326
        %2623 = vmatprep.subr.bf16.mxu0 0
        %2624 = vmatpush2.bf16.msra.mxu0 %v2341
        %2625 = vmatprep.subr.bf16.mxu0 0
        %2626 = vmatpush2.bf16.msra.mxu0 %v2340
        %2627 = vmatprep.subr.bf16.mxu0 0
        %2628 = vmatpush2.bf16.msra.mxu0 %v2339
        %2629 = vmatprep.subr.bf16.mxu0 0
        %2630 = vmatpush2.bf16.msra.mxu0 %v2338
        %2631 = vmatprep.subr.bf16.mxu0 0
        %2632 = vmatpush2.bf16.msra.mxu0 %v2337
        %2633 = vmatprep.subr.bf16.mxu0 0
        %2634 = vmatpush2.bf16.msra.mxu0 %v2336
        %2635 = vmatprep.subr.bf16.mxu0 0
        %2636 = vmatpush2.bf16.msra.mxu0 %v2335
        %2637 = vmatprep.subr.bf16.mxu0 0
        %2638 = vmatpush2.bf16.msra.mxu0 %v2334
        %2639 = vmatprep.mubr.bf16.mxu0 %v1524
        %2640 = vmatmul.mubr.bf16.gmra.mxu0 %v1523
        %v2641 = vpop.f32.mrf.mxu0
        %v2642 = vadd.f32 %v2601, %v2641
        %v2643 = vpop.f32.mrf.mxu0
        %v2644 = vpop.f32.mrf.mxu0
        %v2645 = vadd.f32 %v2604, %v2644
        %v2646 = vpop.f32.mrf.mxu0
        %2647 = vdwg.mxu0
        %2648 = vmatprep.subr.bf16.mxu0 0
        %2649 = vmatpush1.bf16.msra.mxu0 %v2349
        %2650 = vmatprep.subr.bf16.mxu0 0
        %2651 = vmatpush1.bf16.msra.mxu0 %v2348
        %2652 = vmatprep.subr.bf16.mxu0 0
        %2653 = vmatpush1.bf16.msra.mxu0 %v2347
        %2654 = vmatprep.subr.bf16.mxu0 0
        %2655 = vmatpush1.bf16.msra.mxu0 %v2346
        %2656 = vmatprep.subr.bf16.mxu0 0
        %2657 = vmatpush1.bf16.msra.mxu0 %v2345
        %2658 = vmatprep.subr.bf16.mxu0 0
        %2659 = vmatpush1.bf16.msra.mxu0 %v2344
        %2660 = vmatprep.subr.bf16.mxu0 0
        %2661 = vmatpush1.bf16.msra.mxu0 %v2343
        %2662 = vmatprep.subr.bf16.mxu0 0
        %2663 = vmatpush1.bf16.msra.mxu0 %v2342
        %2664 = vmatprep.subr.bf16.mxu0 0
        %2665 = vmatpush2.bf16.msra.mxu0 %v2357
        %2666 = vmatprep.subr.bf16.mxu0 0
        %2667 = vmatpush2.bf16.msra.mxu0 %v2356
        %2668 = vmatprep.subr.bf16.mxu0 0
        %2669 = vmatpush2.bf16.msra.mxu0 %v2355
        %2670 = vmatprep.subr.bf16.mxu0 0
        %2671 = vmatpush2.bf16.msra.mxu0 %v2354
        %2672 = vmatprep.subr.bf16.mxu0 0
        %2673 = vmatpush2.bf16.msra.mxu0 %v2353
        %2674 = vmatprep.subr.bf16.mxu0 0
        %2675 = vmatpush2.bf16.msra.mxu0 %v2352
        %2676 = vmatprep.subr.bf16.mxu0 0
        %2677 = vmatpush2.bf16.msra.mxu0 %v2351
        %2678 = vmatprep.subr.bf16.mxu0 0
        %2679 = vmatpush2.bf16.msra.mxu0 %v2350
        %2680 = vmatprep.mubr.bf16.mxu0 %v1526
        %2681 = vmatmul.mubr.bf16.gmra.mxu0 %v1525
        %v2682 = vpop.f32.mrf.mxu0
        %v2683 = vadd.f32 %v2642, %v2682
        %v2684 = vpop.f32.mrf.mxu0
        %v2685 = vpop.f32.mrf.mxu0
        %v2686 = vadd.f32 %v2645, %v2685
        %v2687 = vpop.f32.mrf.mxu0
        %2688 = vdwg.mxu0
        %2689 = vmatprep.subr.bf16.mxu0 0
        %2690 = vmatpush1.bf16.msra.mxu0 %v2365
        %2691 = vmatprep.subr.bf16.mxu0 0
        %2692 = vmatpush1.bf16.msra.mxu0 %v2364
        %2693 = vmatprep.subr.bf16.mxu0 0
        %2694 = vmatpush1.bf16.msra.mxu0 %v2363
        %2695 = vmatprep.subr.bf16.mxu0 0
        %2696 = vmatpush1.bf16.msra.mxu0 %v2362
        %2697 = vmatprep.subr.bf16.mxu0 0
        %2698 = vmatpush1.bf16.msra.mxu0 %v2361
        %2699 = vmatprep.subr.bf16.mxu0 0
        %2700 = vmatpush1.bf16.msra.mxu0 %v2360
        %2701 = vmatprep.subr.bf16.mxu0 0
        %2702 = vmatpush1.bf16.msra.mxu0 %v2359
        %2703 = vmatprep.subr.bf16.mxu0 0
        %2704 = vmatpush1.bf16.msra.mxu0 %v2358
        %2705 = vmatprep.subr.bf16.mxu0 0
        %2706 = vmatpush2.bf16.msra.mxu0 %v2373
        %2707 = vmatprep.subr.bf16.mxu0 0
        %2708 = vmatpush2.bf16.msra.mxu0 %v2372
        %2709 = vmatprep.subr.bf16.mxu0 0
        %2710 = vmatpush2.bf16.msra.mxu0 %v2371
        %2711 = vmatprep.subr.bf16.mxu0 0
        %2712 = vmatpush2.bf16.msra.mxu0 %v2370
        %2713 = vmatprep.subr.bf16.mxu0 0
        %2714 = vmatpush2.bf16.msra.mxu0 %v2369
        %2715 = vmatprep.subr.bf16.mxu0 0
        %2716 = vmatpush2.bf16.msra.mxu0 %v2368
        %2717 = vmatprep.subr.bf16.mxu0 0
        %2718 = vmatpush2.bf16.msra.mxu0 %v2367
        %2719 = vmatprep.subr.bf16.mxu0 0
        %2720 = vmatpush2.bf16.msra.mxu0 %v2366
        %2721 = vmatprep.mubr.bf16.mxu0 %v1528
        %2722 = vmatmul.mubr.bf16.gmra.mxu0 %v1527
        %v2723 = vpop.f32.mrf.mxu0
        %v2724 = vadd.f32 %v2683, %v2723
        %v2725 = vpop.f32.mrf.mxu0
        %v2726 = vpop.f32.mrf.mxu0
        %v2727 = vadd.f32 %v2686, %v2726
        %v2728 = vpop.f32.mrf.mxu0
        %2729 = vdwg.mxu0
        %2730 = vmatprep.subr.bf16.mxu0 0
        %2731 = vmatpush1.bf16.msra.mxu0 %v2381
        %2732 = vmatprep.subr.bf16.mxu0 0
        %2733 = vmatpush1.bf16.msra.mxu0 %v2380
        %2734 = vmatprep.subr.bf16.mxu0 0
        %2735 = vmatpush1.bf16.msra.mxu0 %v2379
        %2736 = vmatprep.subr.bf16.mxu0 0
        %2737 = vmatpush1.bf16.msra.mxu0 %v2378
        %2738 = vmatprep.subr.bf16.mxu0 0
        %2739 = vmatpush1.bf16.msra.mxu0 %v2377
        %2740 = vmatprep.subr.bf16.mxu0 0
        %2741 = vmatpush1.bf16.msra.mxu0 %v2376
        %2742 = vmatprep.subr.bf16.mxu0 0
        %2743 = vmatpush1.bf16.msra.mxu0 %v2375
        %2744 = vmatprep.subr.bf16.mxu0 0
        %2745 = vmatpush1.bf16.msra.mxu0 %v2374
        %2746 = vmatprep.subr.bf16.mxu0 0
        %2747 = vmatpush2.bf16.msra.mxu0 %v2389
        %2748 = vmatprep.subr.bf16.mxu0 0
        %2749 = vmatpush2.bf16.msra.mxu0 %v2388
        %2750 = vmatprep.subr.bf16.mxu0 0
        %2751 = vmatpush2.bf16.msra.mxu0 %v2387
        %2752 = vmatprep.subr.bf16.mxu0 0
        %2753 = vmatpush2.bf16.msra.mxu0 %v2386
        %2754 = vmatprep.subr.bf16.mxu0 0
        %2755 = vmatpush2.bf16.msra.mxu0 %v2385
        %2756 = vmatprep.subr.bf16.mxu0 0
        %2757 = vmatpush2.bf16.msra.mxu0 %v2384
        %2758 = vmatprep.subr.bf16.mxu0 0
        %2759 = vmatpush2.bf16.msra.mxu0 %v2383
        %2760 = vmatprep.subr.bf16.mxu0 0
        %2761 = vmatpush2.bf16.msra.mxu0 %v2382
        %2762 = vmatprep.mubr.bf16.mxu0 %v1530
        %2763 = vmatmul.mubr.bf16.gmra.mxu0 %v1529
        %v2764 = vpop.f32.mrf.mxu0
        %v2765 = vadd.f32 %v2724, %v2764
        %v2766 = vpop.f32.mrf.mxu0
        %v2767 = vpop.f32.mrf.mxu0
        %v2768 = vadd.f32 %v2727, %v2767
        %v2769 = vpop.f32.mrf.mxu0
        %2770 = vdwg.mxu0
        %2771 = vmatprep.subr.bf16.mxu0 0
        %2772 = vmatpush1.bf16.msra.mxu0 %v2397
        %2773 = vmatprep.subr.bf16.mxu0 0
        %2774 = vmatpush1.bf16.msra.mxu0 %v2396
        %2775 = vmatprep.subr.bf16.mxu0 0
        %2776 = vmatpush1.bf16.msra.mxu0 %v2395
        %2777 = vmatprep.subr.bf16.mxu0 0
        %2778 = vmatpush1.bf16.msra.mxu0 %v2394
        %2779 = vmatprep.subr.bf16.mxu0 0
        %2780 = vmatpush1.bf16.msra.mxu0 %v2393
        %2781 = vmatprep.subr.bf16.mxu0 0
        %2782 = vmatpush1.bf16.msra.mxu0 %v2392
        %2783 = vmatprep.subr.bf16.mxu0 0
        %2784 = vmatpush1.bf16.msra.mxu0 %v2391
        %2785 = vmatprep.subr.bf16.mxu0 0
        %2786 = vmatpush1.bf16.msra.mxu0 %v2390
        %2787 = vmatprep.subr.bf16.mxu0 0
        %2788 = vmatpush2.bf16.msra.mxu0 %v2405
        %2789 = vmatprep.subr.bf16.mxu0 0
        %2790 = vmatpush2.bf16.msra.mxu0 %v2404
        %2791 = vmatprep.subr.bf16.mxu0 0
        %2792 = vmatpush2.bf16.msra.mxu0 %v2403
        %2793 = vmatprep.subr.bf16.mxu0 0
        %2794 = vmatpush2.bf16.msra.mxu0 %v2402
        %2795 = vmatprep.subr.bf16.mxu0 0
        %2796 = vmatpush2.bf16.msra.mxu0 %v2401
        %2797 = vmatprep.subr.bf16.mxu0 0
        %2798 = vmatpush2.bf16.msra.mxu0 %v2400
        %2799 = vmatprep.subr.bf16.mxu0 0
        %2800 = vmatpush2.bf16.msra.mxu0 %v2399
        %2801 = vmatprep.subr.bf16.mxu0 0
        %2802 = vmatpush2.bf16.msra.mxu0 %v2398
        %2803 = vmatprep.mubr.bf16.mxu0 %v1532
        %2804 = vmatmul.mubr.bf16.gmra.mxu0 %v1531
        %v2805 = vpop.f32.mrf.mxu0
        %v2806 = vadd.f32 %v2765, %v2805
        %v2807 = vpop.f32.mrf.mxu0
        %v2808 = vpop.f32.mrf.mxu0
        %v2809 = vadd.f32 %v2768, %v2808
        %v2810 = vpop.f32.mrf.mxu0
        %2811 = vdwg.mxu0
        %2812 = vmatprep.subr.bf16.mxu0 0
        %2813 = vmatpush1.bf16.msra.mxu0 %v2413
        %2814 = vmatprep.subr.bf16.mxu0 0
        %2815 = vmatpush1.bf16.msra.mxu0 %v2412
        %2816 = vmatprep.subr.bf16.mxu0 0
        %2817 = vmatpush1.bf16.msra.mxu0 %v2411
        %2818 = vmatprep.subr.bf16.mxu0 0
        %2819 = vmatpush1.bf16.msra.mxu0 %v2410
        %2820 = vmatprep.subr.bf16.mxu0 0
        %2821 = vmatpush1.bf16.msra.mxu0 %v2409
        %2822 = vmatprep.subr.bf16.mxu0 0
        %2823 = vmatpush1.bf16.msra.mxu0 %v2408
        %2824 = vmatprep.subr.bf16.mxu0 0
        %2825 = vmatpush1.bf16.msra.mxu0 %v2407
        %2826 = vmatprep.subr.bf16.mxu0 0
        %2827 = vmatpush1.bf16.msra.mxu0 %v2406
        %2828 = vmatprep.subr.bf16.mxu0 0
        %2829 = vmatpush2.bf16.msra.mxu0 %v2421
        %2830 = vmatprep.subr.bf16.mxu0 0
        %2831 = vmatpush2.bf16.msra.mxu0 %v2420
        %2832 = vmatprep.subr.bf16.mxu0 0
        %2833 = vmatpush2.bf16.msra.mxu0 %v2419
        %2834 = vmatprep.subr.bf16.mxu0 0
        %2835 = vmatpush2.bf16.msra.mxu0 %v2418
        %2836 = vmatprep.subr.bf16.mxu0 0
        %2837 = vmatpush2.bf16.msra.mxu0 %v2417
        %2838 = vmatprep.subr.bf16.mxu0 0
        %2839 = vmatpush2.bf16.msra.mxu0 %v2416
        %2840 = vmatprep.subr.bf16.mxu0 0
        %2841 = vmatpush2.bf16.msra.mxu0 %v2415
        %2842 = vmatprep.subr.bf16.mxu0 0
        %2843 = vmatpush2.bf16.msra.mxu0 %v2414
        %2844 = vmatprep.mubr.bf16.mxu0 %v1534
        %2845 = vmatmul.mubr.bf16.gmra.mxu0 %v1533
        %v2846 = vpop.f32.mrf.mxu0
        %v2847 = vadd.f32 %v2806, %v2846
        %v2848 = vpop.f32.mrf.mxu0
        %v2849 = vpop.f32.mrf.mxu0
        %v2850 = vadd.f32 %v2809, %v2849
        %v2851 = vpop.f32.mrf.mxu0
        %2852 = vdwg.mxu0
        %2853 = vmatprep.subr.bf16.mxu0 0
        %2854 = vmatpush1.bf16.msra.mxu0 %v2429
        %2855 = vmatprep.subr.bf16.mxu0 0
        %2856 = vmatpush1.bf16.msra.mxu0 %v2428
        %2857 = vmatprep.subr.bf16.mxu0 0
        %2858 = vmatpush1.bf16.msra.mxu0 %v2427
        %2859 = vmatprep.subr.bf16.mxu0 0
        %2860 = vmatpush1.bf16.msra.mxu0 %v2426
        %2861 = vmatprep.subr.bf16.mxu0 0
        %2862 = vmatpush1.bf16.msra.mxu0 %v2425
        %2863 = vmatprep.subr.bf16.mxu0 0
        %2864 = vmatpush1.bf16.msra.mxu0 %v2424
        %2865 = vmatprep.subr.bf16.mxu0 0
        %2866 = vmatpush1.bf16.msra.mxu0 %v2423
        %2867 = vmatprep.subr.bf16.mxu0 0
        %2868 = vmatpush1.bf16.msra.mxu0 %v2422
        %2869 = vmatprep.subr.bf16.mxu0 0
        %2870 = vmatpush2.bf16.msra.mxu0 %v2437
        %2871 = vmatprep.subr.bf16.mxu0 0
        %2872 = vmatpush2.bf16.msra.mxu0 %v2436
        %2873 = vmatprep.subr.bf16.mxu0 0
        %2874 = vmatpush2.bf16.msra.mxu0 %v2435
        %2875 = vmatprep.subr.bf16.mxu0 0
        %2876 = vmatpush2.bf16.msra.mxu0 %v2434
        %2877 = vmatprep.subr.bf16.mxu0 0
        %2878 = vmatpush2.bf16.msra.mxu0 %v2433
        %2879 = vmatprep.subr.bf16.mxu0 0
        %2880 = vmatpush2.bf16.msra.mxu0 %v2432
        %2881 = vmatprep.subr.bf16.mxu0 0
        %2882 = vmatpush2.bf16.msra.mxu0 %v2431
        %2883 = vmatprep.subr.bf16.mxu0 0
        %2884 = vmatpush2.bf16.msra.mxu0 %v2430
        %2885 = vmatprep.mubr.bf16.mxu0 %v1536
        %2886 = vmatmul.mubr.bf16.gmra.mxu0 %v1535
        %v2887 = vpop.f32.mrf.mxu0
        %v2888 = vadd.f32 %v2847, %v2887
        %v2889 = vpop.f32.mrf.mxu0
        %v2890 = vpop.f32.mrf.mxu0
        %v2891 = vadd.f32 %v2850, %v2890
        %v2892 = vpop.f32.mrf.mxu0
        %2893 = vdwg.mxu0
        %v2894 = vadd.f32 %v863, %v2888
        %v2895 = vadd.f32 %v864, %v2891
        %v2896 = vld [vmem:[%s601 + $0x24] sm:$0x1]
        %v2897 = vld [vmem:[%s601 + $0x25] sm:$0x1]
        %v2898 = vsel %vm740, %v2894, 0.0
        %2899 = vadd.xlane.f32.xlu0 %v2898
        %v2900 = vpop.xlane.xlu0 %2899
        %v2901 = vsel %vm740, %v2895, 0.0
        %2902 = vadd.xlane.f32.xlu0 %v2901
        %v2903 = vpop.xlane.xlu0 %2902
        %v2904 = vmul.f32 %v2900, %v832
        %v2905 = vmul.f32 %v2903, %v832
        %v2906 = vsub.f32 %v2894, %v2904
        %v2907 = vsub.f32 %v2895, %v2905
        %v2908 = vmul.f32 %v2906, %v2906
        %v2909 = vmul.f32 %v2907, %v2907
        %v2910 = vsel %vm740, %v2908, 0.0
        %2911 = vadd.xlane.f32.xlu0 %v2910
        %v2912 = vpop.xlane.xlu0 %2911
        %v2913 = vsel %vm740, %v2909, 0.0
        %2914 = vadd.xlane.f32.xlu0 %v2913
        %v2915 = vpop.xlane.xlu0 %2914
        %v2916 = vmul.f32 %v2912, %v832
        %v2917 = vmul.f32 %v2915, %v832
        %v2918 = vadd.f32 %v2916, 1e-05
        %v2919 = vadd.f32 %v2917, 1e-05
        %v2920 = vrsqrt.pop %v2918
        %v2921 = vrsqrt.pop %v2919
        %v2922 = vmul.f32 %v2906, %v2920
        %v2923 = vmul.f32 %v2907, %v2921
        %v2924 = vlaneseq
        %v2925 = vshrl.u32 %v2924, 7
        %v2926 = vsub.s32 0, %v2925
        %v2927 = vrot.slane %v2896, %v2926
        %v2928 = vmul.f32 %v2922, %v2927
        %v2929 = vmul.f32 %v2923, %v2927
        %v2930 = vlaneseq
        %v2931 = vshrl.u32 %v2930, 7
        %v2932 = vsub.s32 0, %v2931
        %v2933 = vrot.slane %v2897, %v2932
        %v2934 = vadd.f32 %v2928, %v2933
        %v2935 = vadd.f32 %v2929, %v2933
        %2936 = vst.msk [vmem:[#allocation2] sm:$0xff] %vm740, %v2934
        %2937 = vst.msk [vmem:[#allocation2 + $0x8] sm:$0xff] %vm740, %v2935
      $region76: #{pallas_forward.1} parent=67 // pred_fallthru
        _
      %p2938 = scmp.ge.s32.totalorder %s23, 10
      // Predicated region
      $region77: #{pallas_forward.1} parent=67 // pred_check
        %p2939 = pneg %p2938
      $region78: #{pallas_forward.1} parent=67 // pred_check_branch
        %2941 = sbr.rel (%p2939) target = $region80
      $region79: #{pallas_forward.1} parent=67 // pred_region
        %v2942 = vld [vmem:[#allocation2] sm:$0xff]
        %v2943 = vld [vmem:[#allocation2 + $0x8] sm:$0xff]
        %v2944 = vld [vmem:[%s2 + $0x2] sm:$0x1]
        %v2945 = vld [vmem:[%s2 + $0x3] sm:$0x1]
        %vm2946 = vcmask 261120
        %v2947 = vsel %vm2946, %v2942, 0.0
        %2948 = vadd.xlane.f32.xlu0 %v2947
        %v2949 = vpop.xlane.xlu0 %2948
        %v2950 = vsel %vm2946, %v2943, 0.0
        %2951 = vadd.xlane.f32.xlu0 %v2950
        %v2952 = vpop.xlane.xlu0 %2951
        %v2953 = vrcp.pop 32.0
        %v2954 = vmul.f32 %v2949, %v2953
        %v2955 = vmul.f32 %v2952, %v2953
        %v2956 = vsub.f32 %v2942, %v2954
        %v2957 = vsub.f32 %v2943, %v2955
        %v2958 = vmul.f32 %v2956, %v2956
        %v2959 = vmul.f32 %v2957, %v2957
        %v2960 = vsel %vm2946, %v2958, 0.0
        %2961 = vadd.xlane.f32.xlu0 %v2960
        %v2962 = vpop.xlane.xlu0 %2961
        %v2963 = vsel %vm2946, %v2959, 0.0
        %2964 = vadd.xlane.f32.xlu0 %v2963
        %v2965 = vpop.xlane.xlu0 %2964
        %v2966 = vmul.f32 %v2962, %v2953
        %v2967 = vmul.f32 %v2965, %v2953
        %v2968 = vadd.f32 %v2966, 1e-05
        %v2969 = vadd.f32 %v2967, 1e-05
        %v2970 = vrsqrt.pop %v2968
        %v2971 = vrsqrt.pop %v2969
        %v2972 = vmul.f32 %v2956, %v2970
        %v2973 = vmul.f32 %v2957, %v2971
        %v2974 = vlaneseq
        %v2975 = vshrl.u32 %v2974, 7
        %v2976 = vsub.s32 0, %v2975
        %v2977 = vrot.slane %v2944, %v2976
        %v2978 = vmul.f32 %v2972, %v2977
        %v2979 = vmul.f32 %v2973, %v2977
        %v2980 = vlaneseq
        %v2981 = vshrl.u32 %v2980, 7
        %v2982 = vsub.s32 0, %v2981
        %v2983 = vrot.slane %v2945, %v2982
        %v2984 = vadd.f32 %v2978, %v2983
        %v2985 = vadd.f32 %v2979, %v2983
        %v2986 = vld [vmem:[#allocation3] sm:$0xff]
        %v2987 = vld [vmem:[#allocation3 + $0x8] sm:$0xff]
        %v2988 = vld [vmem:[%s637] sm:$0xff]
        %v2989 = vld [vmem:[%s637 + $0x8] sm:$0xff]
        %v2990 = vld [vmem:[%s637 + $0x10] sm:$0xff]
        %v2991 = vld [vmem:[%s637 + $0x18] sm:$0xff]
        %v2992 = vld [vmem:[%s637 + $0x40] sm:$0x1]
        %v2993 = vlaneseq
        %v2994 = vshrl.u32 %v2993, 7
        %v2995 = vsub.s32 0, %v2994
        %v2996 = vrot.slane %v2992, %v2995
        %v2998 = vsel %vm2946, %v2986, 0
        %v3001 = vsel %vm2946, %v2987, 0
        %3003 = vmatprep.subr.mxu0 0.0
        %3004 = vmatpush1.msra.mxu0 0.0
        %3005 = vmatprep.subr.mxu0 0.0
        %3006 = vmatpush1.msra.mxu0 0.0
        %3007 = vmatprep.subr.mxu0 0.0
        %3008 = vmatpush1.msra.mxu0 0.0
        %3009 = vmatprep.subr.mxu0 0.0
        %3010 = vmatpush1.msra.mxu0 0.0
        %3011 = vmatprep.subr.mxu0 0.0
        %3012 = vmatpush1.msra.mxu0 0.0
        %3013 = vmatprep.subr.mxu0 0.0
        %3014 = vmatpush1.msra.mxu0 0.0
        %3015 = vmatprep.subr.mxu0 0.0
        %3016 = vmatpush1.msra.mxu0 0.0
        %3017 = vmatprep.subr.mxu0 0.0
        %3018 = vmatpush1.msra.mxu0 0.0
        %3019 = vmatprep.subr.mxu0 0.0
        %3020 = vmatpush1.msra.mxu0 0.0
        %3021 = vmatprep.subr.mxu0 0.0
        %3022 = vmatpush1.msra.mxu0 0.0
        %3023 = vmatprep.subr.mxu0 0.0
        %3024 = vmatpush1.msra.mxu0 0.0
        %3025 = vmatprep.subr.mxu0 0.0
        %3026 = vmatpush1.msra.mxu0 0.0
        %3027 = vmatprep.subr.mxu0 0.0
        %3028 = vmatpush1.msra.mxu0 %v2991
        %3029 = vmatprep.subr.mxu0 0.0
        %3030 = vmatpush1.msra.mxu0 %v2990
        %3031 = vmatprep.subr.mxu0 0.0
        %3032 = vmatpush1.msra.mxu0 %v2989
        %3033 = vmatprep.subr.mxu0 0.0
        %3034 = vmatpush1.msra.mxu0 %v2988
        %3035 = vmatprep.subr.mxu0 0.0
        %3036 = vmatpush2.msra.mxu0 0.0
        %3037 = vmatprep.subr.mxu0 0.0
        %3038 = vmatpush2.msra.mxu0 0.0
        %3039 = vmatprep.subr.mxu0 0.0
        %3040 = vmatpush2.msra.mxu0 0.0
        %3041 = vmatprep.subr.mxu0 0.0
        %3042 = vmatpush2.msra.mxu0 0.0
        %3043 = vmatprep.subr.mxu0 0.0
        %3044 = vmatpush2.msra.mxu0 0.0
        %3045 = vmatprep.subr.mxu0 0.0
        %3046 = vmatpush2.msra.mxu0 0.0
        %3047 = vmatprep.subr.mxu0 0.0
        %3048 = vmatpush2.msra.mxu0 0.0
        %3049 = vmatprep.subr.mxu0 0.0
        %3050 = vmatpush2.msra.mxu0 0.0
        %3051 = vmatprep.subr.mxu0 0.0
        %3052 = vmatpush2.msra.mxu0 0.0
        %3053 = vmatprep.subr.mxu0 0.0
        %3054 = vmatpush2.msra.mxu0 0.0
        %3055 = vmatprep.subr.mxu0 0.0
        %3056 = vmatpush2.msra.mxu0 0.0
        %3057 = vmatprep.subr.mxu0 0.0
        %3058 = vmatpush2.msra.mxu0 0.0
        %3059 = vmatprep.subr.mxu0 0.0
        %3060 = vmatpush2.msra.mxu0 0.0
        %3061 = vmatprep.subr.mxu0 0.0
        %3062 = vmatpush2.msra.mxu0 0.0
        %3063 = vmatprep.subr.mxu0 0.0
        %3064 = vmatpush2.msra.mxu0 0.0
        %3065 = vmatprep.subr.mxu0 0.0
        %3066 = vmatpush2.msra.mxu0 0.0
        %3067 = vmatprep.mubr.f32.mxu0 0.0
        %3068 = vmatmul.mubr.f32.gmra.mxu0 %v2998
        %v3069 = vpop.f32.mrf.mxu0
        %v3070 = vadd.f32 %v2996, %v3069
        %v3071 = vpop.f32.mrf.mxu0
        %3072 = vmatprep.mubr.f32.mxu0 0.0
        %3073 = vmatmul.mubr.f32.gmra.mxu0 %v3001
        %v3074 = vpop.f32.mrf.mxu0
        %v3075 = vadd.f32 %v2996, %v3074
        %v3076 = vpop.f32.mrf.mxu0
        %3077 = vdwg.mxu0
        %v3078 = vadd.f32 %v2986, %v3070
        %v3079 = vadd.f32 %v2987, %v3075
        %v3080 = vld [vmem:[%s637 + $0x43] sm:$0x1]
        %v3081 = vld [vmem:[%s637 + $0x44] sm:$0x1]
        %v3082 = vsel %vm2946, %v3078, 0.0
        %3083 = vadd.xlane.f32.xlu0 %v3082
        %v3084 = vpop.xlane.xlu0 %3083
        %v3085 = vsel %vm2946, %v3079, 0.0
        %3086 = vadd.xlane.f32.xlu0 %v3085
        %v3087 = vpop.xlane.xlu0 %3086
        %v3088 = vmul.f32 %v3084, %v2953
        %v3089 = vmul.f32 %v3087, %v2953
        %v3090 = vsub.f32 %v3078, %v3088
        %v3091 = vsub.f32 %v3079, %v3089
        %v3092 = vmul.f32 %v3090, %v3090
        %v3093 = vmul.f32 %v3091, %v3091
        %v3094 = vsel %vm2946, %v3092, 0.0
        %3095 = vadd.xlane.f32.xlu0 %v3094
        %v3096 = vpop.xlane.xlu0 %3095
        %v3097 = vsel %vm2946, %v3093, 0.0
        %3098 = vadd.xlane.f32.xlu0 %v3097
        %v3099 = vpop.xlane.xlu0 %3098
        %v3100 = vmul.f32 %v3096, %v2953
        %v3101 = vmul.f32 %v3099, %v2953
        %v3102 = vadd.f32 %v3100, 1e-05
        %v3103 = vadd.f32 %v3101, 1e-05
        %v3104 = vrsqrt.pop %v3102
        %v3105 = vrsqrt.pop %v3103
        %v3106 = vmul.f32 %v3090, %v3104
        %v3107 = vmul.f32 %v3091, %v3105
        %v3108 = vlaneseq
        %v3109 = vshrl.u32 %v3108, 7
        %v3110 = vsub.s32 0, %v3109
        %v3111 = vrot.slane %v3080, %v3110
        %v3112 = vmul.f32 %v3106, %v3111
        %v3113 = vmul.f32 %v3107, %v3111
        %v3114 = vlaneseq
        %v3115 = vshrl.u32 %v3114, 7
        %v3116 = vsub.s32 0, %v3115
        %v3117 = vrot.slane %v3081, %v3116
        %v3118 = vadd.f32 %v3112, %v3117
        %v3119 = vadd.f32 %v3113, %v3117
        %v3120 = vld [vmem:[%s637 + $0x20] sm:$0xff]
        %v3121 = vld [vmem:[%s637 + $0x28] sm:$0xff]
        %v3122 = vld [vmem:[%s637 + $0x30] sm:$0xff]
        %v3123 = vld [vmem:[%s637 + $0x38] sm:$0xff]
        %v3124 = vld [vmem:[%s637 + $0x41] sm:$0x1]
        %v3125 = vlaneseq
        %v3126 = vshrl.u32 %v3125, 7
        %v3127 = vsub.s32 0, %v3126
        %v3128 = vrot.slane %v3124, %v3127
        %v3130 = vsel %vm2946, %v2984, 0
        %v3133 = vsel %vm2946, %v2985, 0
        %3135 = vmatprep.subr.mxu0 0.0
        %3136 = vmatpush1.msra.mxu0 0.0
        %3137 = vmatprep.subr.mxu0 0.0
        %3138 = vmatpush1.msra.mxu0 0.0
        %3139 = vmatprep.subr.mxu0 0.0
        %3140 = vmatpush1.msra.mxu0 0.0
        %3141 = vmatprep.subr.mxu0 0.0
        %3142 = vmatpush1.msra.mxu0 0.0
        %3143 = vmatprep.subr.mxu0 0.0
        %3144 = vmatpush1.msra.mxu0 0.0
        %3145 = vmatprep.subr.mxu0 0.0
        %3146 = vmatpush1.msra.mxu0 0.0
        %3147 = vmatprep.subr.mxu0 0.0
        %3148 = vmatpush1.msra.mxu0 0.0
        %3149 = vmatprep.subr.mxu0 0.0
        %3150 = vmatpush1.msra.mxu0 0.0
        %3151 = vmatprep.subr.mxu0 0.0
        %3152 = vmatpush1.msra.mxu0 0.0
        %3153 = vmatprep.subr.mxu0 0.0
        %3154 = vmatpush1.msra.mxu0 0.0
        %3155 = vmatprep.subr.mxu0 0.0
        %3156 = vmatpush1.msra.mxu0 0.0
        %3157 = vmatprep.subr.mxu0 0.0
        %3158 = vmatpush1.msra.mxu0 0.0
        %3159 = vmatprep.subr.mxu0 0.0
        %3160 = vmatpush1.msra.mxu0 %v3123
        %3161 = vmatprep.subr.mxu0 0.0
        %3162 = vmatpush1.msra.mxu0 %v3122
        %3163 = vmatprep.subr.mxu0 0.0
        %3164 = vmatpush1.msra.mxu0 %v3121
        %3165 = vmatprep.subr.mxu0 0.0
        %3166 = vmatpush1.msra.mxu0 %v3120
        %3167 = vmatprep.subr.mxu0 0.0
        %3168 = vmatpush2.msra.mxu0 0.0
        %3169 = vmatprep.subr.mxu0 0.0
        %3170 = vmatpush2.msra.mxu0 0.0
        %3171 = vmatprep.subr.mxu0 0.0
        %3172 = vmatpush2.msra.mxu0 0.0
        %3173 = vmatprep.subr.mxu0 0.0
        %3174 = vmatpush2.msra.mxu0 0.0
        %3175 = vmatprep.subr.mxu0 0.0
        %3176 = vmatpush2.msra.mxu0 0.0
        %3177 = vmatprep.subr.mxu0 0.0
        %3178 = vmatpush2.msra.mxu0 0.0
        %3179 = vmatprep.subr.mxu0 0.0
        %3180 = vmatpush2.msra.mxu0 0.0
        %3181 = vmatprep.subr.mxu0 0.0
        %3182 = vmatpush2.msra.mxu0 0.0
        %3183 = vmatprep.subr.mxu0 0.0
        %3184 = vmatpush2.msra.mxu0 0.0
        %3185 = vmatprep.subr.mxu0 0.0
        %3186 = vmatpush2.msra.mxu0 0.0
        %3187 = vmatprep.subr.mxu0 0.0
        %3188 = vmatpush2.msra.mxu0 0.0
        %3189 = vmatprep.subr.mxu0 0.0
        %3190 = vmatpush2.msra.mxu0 0.0
        %3191 = vmatprep.subr.mxu0 0.0
        %3192 = vmatpush2.msra.mxu0 0.0
        %3193 = vmatprep.subr.mxu0 0.0
        %3194 = vmatpush2.msra.mxu0 0.0
        %3195 = vmatprep.subr.mxu0 0.0
        %3196 = vmatpush2.msra.mxu0 0.0
        %3197 = vmatprep.subr.mxu0 0.0
        %3198 = vmatpush2.msra.mxu0 0.0
        %3199 = vmatprep.mubr.f32.mxu0 0.0
        %3200 = vmatmul.mubr.f32.gmra.mxu0 %v3130
        %v3201 = vpop.f32.mrf.mxu0
        %v3202 = vadd.f32 %v3128, %v3201
        %v3203 = vpop.f32.mrf.mxu0
        %3204 = vmatprep.mubr.f32.mxu0 0.0
        %3205 = vmatmul.mubr.f32.gmra.mxu0 %v3133
        %v3206 = vpop.f32.mrf.mxu0
        %v3207 = vadd.f32 %v3128, %v3206
        %v3208 = vpop.f32.mrf.mxu0
        %3209 = vdwg.mxu0
        %v3210 = vadd.f32 %v3118, %v3202
        %v3211 = vadd.f32 %v3119, %v3207
        %v3212 = vld [vmem:[%s637 + $0x45] sm:$0x1]
        %v3213 = vld [vmem:[%s637 + $0x46] sm:$0x1]
        %v3214 = vsel %vm2946, %v3210, 0.0
        %3215 = vadd.xlane.f32.xlu0 %v3214
        %v3216 = vpop.xlane.xlu0 %3215
        %v3217 = vsel %vm2946, %v3211, 0.0
        %3218 = vadd.xlane.f32.xlu0 %v3217
        %v3219 = vpop.xlane.xlu0 %3218
        %v3220 = vmul.f32 %v3216, %v2953
        %v3221 = vmul.f32 %v3219, %v2953
        %v3222 = vsub.f32 %v3210, %v3220
        %v3223 = vsub.f32 %v3211, %v3221
        %v3224 = vmul.f32 %v3222, %v3222
        %v3225 = vmul.f32 %v3223, %v3223
        %v3226 = vsel %vm2946, %v3224, 0.0
        %3227 = vadd.xlane.f32.xlu0 %v3226
        %v3228 = vpop.xlane.xlu0 %3227
        %v3229 = vsel %vm2946, %v3225, 0.0
        %3230 = vadd.xlane.f32.xlu0 %v3229
        %v3231 = vpop.xlane.xlu0 %3230
        %v3232 = vmul.f32 %v3228, %v2953
        %v3233 = vmul.f32 %v3231, %v2953
        %v3234 = vadd.f32 %v3232, 1e-05
        %v3235 = vadd.f32 %v3233, 1e-05
        %v3236 = vrsqrt.pop %v3234
        %v3237 = vrsqrt.pop %v3235
        %v3238 = vmul.f32 %v3222, %v3236
        %v3239 = vmul.f32 %v3223, %v3237
        %v3240 = vlaneseq
        %v3241 = vshrl.u32 %v3240, 7
        %v3242 = vsub.s32 0, %v3241
        %v3243 = vrot.slane %v3212, %v3242
        %v3244 = vmul.f32 %v3238, %v3243
        %v3245 = vmul.f32 %v3239, %v3243
        %v3246 = vlaneseq
        %v3247 = vshrl.u32 %v3246, 7
        %v3248 = vsub.s32 0, %v3247
        %v3249 = vrot.slane %v3213, %v3248
        %v3250 = vadd.f32 %v3244, %v3249
        %v3251 = vadd.f32 %v3245, %v3249
        %v3252 = vpack.c.bf16 %v3251, %v3250
        %v3253 = vld [vmem:[%s658] sm:$0xff]
        %v3254 = vld [vmem:[%s658 + $0x8] sm:$0xff]
        %v3255 = vld [vmem:[%s658 + $0x10] sm:$0xff]
        %v3256 = vld [vmem:[%s658 + $0x18] sm:$0xff]
        %v3257 = vld [vmem:[%s658 + $0x20] sm:$0xff]
        %v3258 = vld [vmem:[%s658 + $0x28] sm:$0xff]
        %v3259 = vld [vmem:[%s658 + $0x30] sm:$0xff]
        %v3260 = vld [vmem:[%s658 + $0x38] sm:$0xff]
        %v3261 = vld [vmem:[%s658 + $0x40] sm:$0xff]
        %v3262 = vld [vmem:[%s658 + $0x48] sm:$0xff]
        %v3263 = vld [vmem:[%s658 + $0x50] sm:$0xff]
        %v3264 = vld [vmem:[%s658 + $0x58] sm:$0xff]
        %v3265 = vld [vmem:[%s658 + $0x60] sm:$0xff]
        %v3266 = vld [vmem:[%s658 + $0x68] sm:$0xff]
        %v3267 = vld [vmem:[%s658 + $0x70] sm:$0xff]
        %v3268 = vld [vmem:[%s658 + $0x78] sm:$0xff]
        %v3269 = vld [vmem:[%s658 + $0x80] sm:$0xff]
        %v3270 = vld [vmem:[%s658 + $0x88] sm:$0xff]
        %v3271 = vld [vmem:[%s658 + $0x90] sm:$0xff]
        %v3272 = vld [vmem:[%s658 + $0x98] sm:$0xff]
        %v3273 = vld [vmem:[%s658 + $0xa0] sm:$0xff]
        %v3274 = vld [vmem:[%s658 + $0xa8] sm:$0xff]
        %v3275 = vld [vmem:[%s658 + $0xb0] sm:$0xff]
        %v3276 = vld [vmem:[%s658 + $0xb8] sm:$0xff]
        %v3277 = vld [vmem:[%s658 + $0xc0] sm:$0xff]
        %v3278 = vld [vmem:[%s658 + $0xc8] sm:$0xff]
        %v3279 = vld [vmem:[%s658 + $0xd0] sm:$0xff]
        %v3280 = vld [vmem:[%s658 + $0xd8] sm:$0xff]
        %v3281 = vld [vmem:[%s658 + $0xe0] sm:$0xff]
        %v3282 = vld [vmem:[%s658 + $0xe8] sm:$0xff]
        %v3283 = vld [vmem:[%s658 + $0xf0] sm:$0xff]
        %v3284 = vld [vmem:[%s658 + $0xf8] sm:$0xff]
        %v3285 = vld [vmem:[%s647] sm:$0xff]
        %v3286 = vld [vmem:[%s647 + $0x8] sm:$0xff]
        %v3289 = vlaneseq
        %v3290 = vshrl.u32 %v3289, 7
        %v3291 = vsub.s32 0, %v3290
        %v3292 = vrot.slane %v3285, %v3291
        %v3293 = vlaneseq
        %v3294 = vshrl.u32 %v3293, 7
        %v3295 = vsub.s32 1, %v3294
        %v3296 = vrot.slane %v3285, %v3295
        %v3297 = vlaneseq
        %v3298 = vshrl.u32 %v3297, 7
        %v3299 = vsub.s32 2, %v3298
        %v3300 = vrot.slane %v3285, %v3299
        %v3301 = vlaneseq
        %v3302 = vshrl.u32 %v3301, 7
        %v3303 = vsub.s32 3, %v3302
        %v3304 = vrot.slane %v3285, %v3303
        %v3305 = vlaneseq
        %v3306 = vshrl.u32 %v3305, 7
        %v3307 = vsub.s32 4, %v3306
        %v3308 = vrot.slane %v3285, %v3307
        %v3309 = vlaneseq
        %v3310 = vshrl.u32 %v3309, 7
        %v3311 = vsub.s32 5, %v3310
        %v3312 = vrot.slane %v3285, %v3311
        %v3313 = vlaneseq
        %v3314 = vshrl.u32 %v3313, 7
        %v3315 = vsub.s32 6, %v3314
        %v3316 = vrot.slane %v3285, %v3315
        %v3317 = vlaneseq
        %v3318 = vshrl.u32 %v3317, 7
        %v3319 = vsub.s32 7, %v3318
        %v3320 = vrot.slane %v3285, %v3319
        %v3321 = vlaneseq
        %v3322 = vshrl.u32 %v3321, 7
        %v3323 = vsub.s32 0, %v3322
        %v3324 = vrot.slane %v3286, %v3323
        %v3325 = vlaneseq
        %v3326 = vshrl.u32 %v3325, 7
        %v3327 = vsub.s32 1, %v3326
        %v3328 = vrot.slane %v3286, %v3327
        %v3329 = vlaneseq
        %v3330 = vshrl.u32 %v3329, 7
        %v3331 = vsub.s32 2, %v3330
        %v3332 = vrot.slane %v3286, %v3331
        %v3333 = vlaneseq
        %v3334 = vshrl.u32 %v3333, 7
        %v3335 = vsub.s32 3, %v3334
        %v3336 = vrot.slane %v3286, %v3335
        %v3337 = vlaneseq
        %v3338 = vshrl.u32 %v3337, 7
        %v3339 = vsub.s32 4, %v3338
        %v3340 = vrot.slane %v3286, %v3339
        %v3341 = vlaneseq
        %v3342 = vshrl.u32 %v3341, 7
        %v3343 = vsub.s32 5, %v3342
        %v3344 = vrot.slane %v3286, %v3343
        %v3345 = vlaneseq
        %v3346 = vshrl.u32 %v3345, 7
        %v3347 = vsub.s32 6, %v3346
        %v3348 = vrot.slane %v3286, %v3347
        %v3349 = vlaneseq
        %v3350 = vshrl.u32 %v3349, 7
        %v3351 = vsub.s32 7, %v3350
        %v3352 = vrot.slane %v3286, %v3351
        %v3401 = vunpack.c.l.b16 %v3253
        %v3402 = vunpack.c.h.b16 %v3253
        %v3403 = vunpack.c.l.b16 %v3254
        %v3404 = vunpack.c.h.b16 %v3254
        %v3405 = vunpack.c.l.b16 %v3255
        %v3406 = vunpack.c.h.b16 %v3255
        %v3407 = vunpack.c.l.b16 %v3256
        %v3408 = vunpack.c.h.b16 %v3256
        %v3409 = vunpack.c.l.b16 %v3257
        %v3410 = vunpack.c.h.b16 %v3257
        %v3411 = vunpack.c.l.b16 %v3258
        %v3412 = vunpack.c.h.b16 %v3258
        %v3413 = vunpack.c.l.b16 %v3259
        %v3414 = vunpack.c.h.b16 %v3259
        %v3415 = vunpack.c.l.b16 %v3260
        %v3416 = vunpack.c.h.b16 %v3260
        %v3417 = vunpack.c.l.b16 %v3261
        %v3418 = vunpack.c.h.b16 %v3261
        %v3419 = vunpack.c.l.b16 %v3262
        %v3420 = vunpack.c.h.b16 %v3262
        %v3421 = vunpack.c.l.b16 %v3263
        %v3422 = vunpack.c.h.b16 %v3263
        %v3423 = vunpack.c.l.b16 %v3264
        %v3424 = vunpack.c.h.b16 %v3264
        %v3425 = vunpack.c.l.b16 %v3265
        %v3426 = vunpack.c.h.b16 %v3265
        %v3427 = vunpack.c.l.b16 %v3266
        %v3428 = vunpack.c.h.b16 %v3266
        %v3429 = vunpack.c.l.b16 %v3267
        %v3430 = vunpack.c.h.b16 %v3267
        %v3431 = vunpack.c.l.b16 %v3268
        %v3432 = vunpack.c.h.b16 %v3268
        %v3433 = vunpack.c.l.b16 %v3269
        %v3434 = vunpack.c.h.b16 %v3269
        %v3435 = vunpack.c.l.b16 %v3270
        %v3436 = vunpack.c.h.b16 %v3270
        %v3437 = vunpack.c.l.b16 %v3271
        %v3438 = vunpack.c.h.b16 %v3271
        %v3439 = vunpack.c.l.b16 %v3272
        %v3440 = vunpack.c.h.b16 %v3272
        %v3441 = vunpack.c.l.b16 %v3273
        %v3442 = vunpack.c.h.b16 %v3273
        %v3443 = vunpack.c.l.b16 %v3274
        %v3444 = vunpack.c.h.b16 %v3274
        %v3445 = vunpack.c.l.b16 %v3275
        %v3446 = vunpack.c.h.b16 %v3275
        %v3447 = vunpack.c.l.b16 %v3276
        %v3448 = vunpack.c.h.b16 %v3276
        %v3449 = vunpack.c.l.b16 %v3277
        %v3450 = vunpack.c.h.b16 %v3277
        %v3451 = vunpack.c.l.b16 %v3278
        %v3452 = vunpack.c.h.b16 %v3278
        %v3453 = vunpack.c.l.b16 %v3279
        %v3454 = vunpack.c.h.b16 %v3279
        %v3455 = vunpack.c.l.b16 %v3280
        %v3456 = vunpack.c.h.b16 %v3280
        %v3457 = vunpack.c.l.b16 %v3281
        %v3458 = vunpack.c.h.b16 %v3281
        %v3459 = vunpack.c.l.b16 %v3282
        %v3460 = vunpack.c.h.b16 %v3282
        %v3461 = vunpack.c.l.b16 %v3283
        %v3462 = vunpack.c.h.b16 %v3283
        %v3463 = vunpack.c.l.b16 %v3284
        %v3464 = vunpack.c.h.b16 %v3284
        %v3465 = vpack.c.b16 %v3417, %v3401
        %v3466 = vpack.c.b16 %v3418, %v3402
        %v3467 = vpack.c.b16 %v3419, %v3403
        %v3468 = vpack.c.b16 %v3420, %v3404
        %v3469 = vpack.c.b16 %v3421, %v3405
        %v3470 = vpack.c.b16 %v3422, %v3406
        %v3471 = vpack.c.b16 %v3423, %v3407
        %v3472 = vpack.c.b16 %v3424, %v3408
        %v3473 = vpack.c.b16 %v3425, %v3409
        %v3474 = vpack.c.b16 %v3426, %v3410
        %v3475 = vpack.c.b16 %v3427, %v3411
        %v3476 = vpack.c.b16 %v3428, %v3412
        %v3477 = vpack.c.b16 %v3429, %v3413
        %v3478 = vpack.c.b16 %v3430, %v3414
        %v3479 = vpack.c.b16 %v3431, %v3415
        %v3480 = vpack.c.b16 %v3432, %v3416
        %v3481 = vpack.c.b16 %v3449, %v3433
        %v3482 = vpack.c.b16 %v3450, %v3434
        %v3483 = vpack.c.b16 %v3451, %v3435
        %v3484 = vpack.c.b16 %v3452, %v3436
        %v3485 = vpack.c.b16 %v3453, %v3437
        %v3486 = vpack.c.b16 %v3454, %v3438
        %v3487 = vpack.c.b16 %v3455, %v3439
        %v3488 = vpack.c.b16 %v3456, %v3440
        %v3489 = vpack.c.b16 %v3457, %v3441
        %v3490 = vpack.c.b16 %v3458, %v3442
        %v3491 = vpack.c.b16 %v3459, %v3443
        %v3492 = vpack.c.b16 %v3460, %v3444
        %v3493 = vpack.c.b16 %v3461, %v3445
        %v3494 = vpack.c.b16 %v3462, %v3446
        %v3495 = vpack.c.b16 %v3463, %v3447
        %v3496 = vpack.c.b16 %v3464, %v3448
        %v3530 = vsel %vm2946, %v3252, 0
        %3532 = vmatprep.subr.bf16.mxu0 0
        %3533 = vmatpush1.bf16.msra.mxu0 0
        %3534 = vmatprep.subr.bf16.mxu0 0
        %3535 = vmatpush1.bf16.msra.mxu0 0
        %3536 = vmatprep.subr.bf16.mxu0 0
        %3537 = vmatpush1.bf16.msra.mxu0 0
        %3538 = vmatprep.subr.bf16.mxu0 0
        %3539 = vmatpush1.bf16.msra.mxu0 0
        %3540 = vmatprep.subr.bf16.mxu0 0
        %3541 = vmatpush1.bf16.msra.mxu0 0
        %3542 = vmatprep.subr.bf16.mxu0 0
        %3543 = vmatpush1.bf16.msra.mxu0 0
        %3544 = vmatprep.subr.bf16.mxu0 %v3482
        %3545 = vmatpush1.bf16.msra.mxu0 %v3481
        %3546 = vmatprep.subr.bf16.mxu0 %v3466
        %3547 = vmatpush1.bf16.msra.mxu0 %v3465
        %3548 = vmatprep.subr.bf16.mxu0 0
        %3549 = vmatpush2.bf16.msra.mxu0 0
        %3550 = vmatprep.subr.bf16.mxu0 0
        %3551 = vmatpush2.bf16.msra.mxu0 0
        %3552 = vmatprep.subr.bf16.mxu0 0
        %3553 = vmatpush2.bf16.msra.mxu0 0
        %3554 = vmatprep.subr.bf16.mxu0 0
        %3555 = vmatpush2.bf16.msra.mxu0 0
        %3556 = vmatprep.subr.bf16.mxu0 0
        %3557 = vmatpush2.bf16.msra.mxu0 0
        %3558 = vmatprep.subr.bf16.mxu0 0
        %3559 = vmatpush2.bf16.msra.mxu0 0
        %3560 = vmatprep.subr.bf16.mxu0 0
        %3561 = vmatpush2.bf16.msra.mxu0 0
        %3562 = vmatprep.subr.bf16.mxu0 0
        %3563 = vmatpush2.bf16.msra.mxu0 0
        %3564 = vmatprep.mubr.bf16.mxu0 0
        %3565 = vmatmul.mubr.bf16.gmra.mxu0 %v3530
        %v3566 = vpop.f32.mrf.mxu0
        %v3567 = vadd.f32 %v3292, %v3566
        %v3568 = vpop.f32.mrf.mxu0
        %v3569 = vadd.f32 %v3296, %v3568
        %v3570 = vpop.f32.mrf.mxu0
        %v3571 = vadd.f32 %v3292, %v3570
        %v3572 = vpop.f32.mrf.mxu0
        %v3573 = vadd.f32 %v3296, %v3572
        %3574 = vdwg.mxu0
        %3575 = vmatprep.subr.bf16.mxu0 0
        %3576 = vmatpush1.bf16.msra.mxu0 0
        %3577 = vmatprep.subr.bf16.mxu0 0
        %3578 = vmatpush1.bf16.msra.mxu0 0
        %3579 = vmatprep.subr.bf16.mxu0 0
        %3580 = vmatpush1.bf16.msra.mxu0 0
        %3581 = vmatprep.subr.bf16.mxu0 0
        %3582 = vmatpush1.bf16.msra.mxu0 0
        %3583 = vmatprep.subr.bf16.mxu0 0
        %3584 = vmatpush1.bf16.msra.mxu0 0
        %3585 = vmatprep.subr.bf16.mxu0 0
        %3586 = vmatpush1.bf16.msra.mxu0 0
        %3587 = vmatprep.subr.bf16.mxu0 %v3484
        %3588 = vmatpush1.bf16.msra.mxu0 %v3483
        %3589 = vmatprep.subr.bf16.mxu0 %v3468
        %3590 = vmatpush1.bf16.msra.mxu0 %v3467
        %3591 = vmatprep.subr.bf16.mxu0 0
        %3592 = vmatpush2.bf16.msra.mxu0 0
        %3593 = vmatprep.subr.bf16.mxu0 0
        %3594 = vmatpush2.bf16.msra.mxu0 0
        %3595 = vmatprep.subr.bf16.mxu0 0
        %3596 = vmatpush2.bf16.msra.mxu0 0
        %3597 = vmatprep.subr.bf16.mxu0 0
        %3598 = vmatpush2.bf16.msra.mxu0 0
        %3599 = vmatprep.subr.bf16.mxu0 0
        %3600 = vmatpush2.bf16.msra.mxu0 0
        %3601 = vmatprep.subr.bf16.mxu0 0
        %3602 = vmatpush2.bf16.msra.mxu0 0
        %3603 = vmatprep.subr.bf16.mxu0 0
        %3604 = vmatpush2.bf16.msra.mxu0 0
        %3605 = vmatprep.subr.bf16.mxu0 0
        %3606 = vmatpush2.bf16.msra.mxu0 0
        %3607 = vmatprep.mubr.bf16.mxu0 0
        %3608 = vmatmul.mubr.bf16.gmra.mxu0 %v3530
        %v3609 = vpop.f32.mrf.mxu0
        %v3610 = vadd.f32 %v3300, %v3609
        %v3611 = vpop.f32.mrf.mxu0
        %v3612 = vadd.f32 %v3304, %v3611
        %v3613 = vpop.f32.mrf.mxu0
        %v3614 = vadd.f32 %v3300, %v3613
        %v3615 = vpop.f32.mrf.mxu0
        %v3616 = vadd.f32 %v3304, %v3615
        %3617 = vdwg.mxu0
        %3618 = vmatprep.subr.bf16.mxu0 0
        %3619 = vmatpush1.bf16.msra.mxu0 0
        %3620 = vmatprep.subr.bf16.mxu0 0
        %3621 = vmatpush1.bf16.msra.mxu0 0
        %3622 = vmatprep.subr.bf16.mxu0 0
        %3623 = vmatpush1.bf16.msra.mxu0 0
        %3624 = vmatprep.subr.bf16.mxu0 0
        %3625 = vmatpush1.bf16.msra.mxu0 0
        %3626 = vmatprep.subr.bf16.mxu0 0
        %3627 = vmatpush1.bf16.msra.mxu0 0
        %3628 = vmatprep.subr.bf16.mxu0 0
        %3629 = vmatpush1.bf16.msra.mxu0 0
        %3630 = vmatprep.subr.bf16.mxu0 %v3486
        %3631 = vmatpush1.bf16.msra.mxu0 %v3485
        %3632 = vmatprep.subr.bf16.mxu0 %v3470
        %3633 = vmatpush1.bf16.msra.mxu0 %v3469
        %3634 = vmatprep.subr.bf16.mxu0 0
        %3635 = vmatpush2.bf16.msra.mxu0 0
        %3636 = vmatprep.subr.bf16.mxu0 0
        %3637 = vmatpush2.bf16.msra.mxu0 0
        %3638 = vmatprep.subr.bf16.mxu0 0
        %3639 = vmatpush2.bf16.msra.mxu0 0
        %3640 = vmatprep.subr.bf16.mxu0 0
        %3641 = vmatpush2.bf16.msra.mxu0 0
        %3642 = vmatprep.subr.bf16.mxu0 0
        %3643 = vmatpush2.bf16.msra.mxu0 0
        %3644 = vmatprep.subr.bf16.mxu0 0
        %3645 = vmatpush2.bf16.msra.mxu0 0
        %3646 = vmatprep.subr.bf16.mxu0 0
        %3647 = vmatpush2.bf16.msra.mxu0 0
        %3648 = vmatprep.subr.bf16.mxu0 0
        %3649 = vmatpush2.bf16.msra.mxu0 0
        %3650 = vmatprep.mubr.bf16.mxu0 0
        %3651 = vmatmul.mubr.bf16.gmra.mxu0 %v3530
        %v3652 = vpop.f32.mrf.mxu0
        %v3653 = vadd.f32 %v3308, %v3652
        %v3654 = vpop.f32.mrf.mxu0
        %v3655 = vadd.f32 %v3312, %v3654
        %v3656 = vpop.f32.mrf.mxu0
        %v3657 = vadd.f32 %v3308, %v3656
        %v3658 = vpop.f32.mrf.mxu0
        %v3659 = vadd.f32 %v3312, %v3658
        %3660 = vdwg.mxu0
        %3661 = vmatprep.subr.bf16.mxu0 0
        %3662 = vmatpush1.bf16.msra.mxu0 0
        %3663 = vmatprep.subr.bf16.mxu0 0
        %3664 = vmatpush1.bf16.msra.mxu0 0
        %3665 = vmatprep.subr.bf16.mxu0 0
        %3666 = vmatpush1.bf16.msra.mxu0 0
        %3667 = vmatprep.subr.bf16.mxu0 0
        %3668 = vmatpush1.bf16.msra.mxu0 0
        %3669 = vmatprep.subr.bf16.mxu0 0
        %3670 = vmatpush1.bf16.msra.mxu0 0
        %3671 = vmatprep.subr.bf16.mxu0 0
        %3672 = vmatpush1.bf16.msra.mxu0 0
        %3673 = vmatprep.subr.bf16.mxu0 %v3488
        %3674 = vmatpush1.bf16.msra.mxu0 %v3487
        %3675 = vmatprep.subr.bf16.mxu0 %v3472
        %3676 = vmatpush1.bf16.msra.mxu0 %v3471
        %3677 = vmatprep.subr.bf16.mxu0 0
        %3678 = vmatpush2.bf16.msra.mxu0 0
        %3679 = vmatprep.subr.bf16.mxu0 0
        %3680 = vmatpush2.bf16.msra.mxu0 0
        %3681 = vmatprep.subr.bf16.mxu0 0
        %3682 = vmatpush2.bf16.msra.mxu0 0
        %3683 = vmatprep.subr.bf16.mxu0 0
        %3684 = vmatpush2.bf16.msra.mxu0 0
        %3685 = vmatprep.subr.bf16.mxu0 0
        %3686 = vmatpush2.bf16.msra.mxu0 0
        %3687 = vmatprep.subr.bf16.mxu0 0
        %3688 = vmatpush2.bf16.msra.mxu0 0
        %3689 = vmatprep.subr.bf16.mxu0 0
        %3690 = vmatpush2.bf16.msra.mxu0 0
        %3691 = vmatprep.subr.bf16.mxu0 0
        %3692 = vmatpush2.bf16.msra.mxu0 0
        %3693 = vmatprep.mubr.bf16.mxu0 0
        %3694 = vmatmul.mubr.bf16.gmra.mxu0 %v3530
        %v3695 = vpop.f32.mrf.mxu0
        %v3696 = vadd.f32 %v3316, %v3695
        %v3697 = vpop.f32.mrf.mxu0
        %v3698 = vadd.f32 %v3320, %v3697
        %v3699 = vpop.f32.mrf.mxu0
        %v3700 = vadd.f32 %v3316, %v3699
        %v3701 = vpop.f32.mrf.mxu0
        %v3702 = vadd.f32 %v3320, %v3701
        %3703 = vdwg.mxu0
        %3704 = vmatprep.subr.bf16.mxu0 0
        %3705 = vmatpush1.bf16.msra.mxu0 0
        %3706 = vmatprep.subr.bf16.mxu0 0
        %3707 = vmatpush1.bf16.msra.mxu0 0
        %3708 = vmatprep.subr.bf16.mxu0 0
        %3709 = vmatpush1.bf16.msra.mxu0 0
        %3710 = vmatprep.subr.bf16.mxu0 0
        %3711 = vmatpush1.bf16.msra.mxu0 0
        %3712 = vmatprep.subr.bf16.mxu0 0
        %3713 = vmatpush1.bf16.msra.mxu0 0
        %3714 = vmatprep.subr.bf16.mxu0 0
        %3715 = vmatpush1.bf16.msra.mxu0 0
        %3716 = vmatprep.subr.bf16.mxu0 %v3490
        %3717 = vmatpush1.bf16.msra.mxu0 %v3489
        %3718 = vmatprep.subr.bf16.mxu0 %v3474
        %3719 = vmatpush1.bf16.msra.mxu0 %v3473
        %3720 = vmatprep.subr.bf16.mxu0 0
        %3721 = vmatpush2.bf16.msra.mxu0 0
        %3722 = vmatprep.subr.bf16.mxu0 0
        %3723 = vmatpush2.bf16.msra.mxu0 0
        %3724 = vmatprep.subr.bf16.mxu0 0
        %3725 = vmatpush2.bf16.msra.mxu0 0
        %3726 = vmatprep.subr.bf16.mxu0 0
        %3727 = vmatpush2.bf16.msra.mxu0 0
        %3728 = vmatprep.subr.bf16.mxu0 0
        %3729 = vmatpush2.bf16.msra.mxu0 0
        %3730 = vmatprep.subr.bf16.mxu0 0
        %3731 = vmatpush2.bf16.msra.mxu0 0
        %3732 = vmatprep.subr.bf16.mxu0 0
        %3733 = vmatpush2.bf16.msra.mxu0 0
        %3734 = vmatprep.subr.bf16.mxu0 0
        %3735 = vmatpush2.bf16.msra.mxu0 0
        %3736 = vmatprep.mubr.bf16.mxu0 0
        %3737 = vmatmul.mubr.bf16.gmra.mxu0 %v3530
        %v3738 = vpop.f32.mrf.mxu0
        %v3739 = vadd.f32 %v3324, %v3738
        %v3740 = vpop.f32.mrf.mxu0
        %v3741 = vadd.f32 %v3328, %v3740
        %v3742 = vpop.f32.mrf.mxu0
        %v3743 = vadd.f32 %v3324, %v3742
        %v3744 = vpop.f32.mrf.mxu0
        %v3745 = vadd.f32 %v3328, %v3744
        %3746 = vdwg.mxu0
        %3747 = vmatprep.subr.bf16.mxu0 0
        %3748 = vmatpush1.bf16.msra.mxu0 0
        %3749 = vmatprep.subr.bf16.mxu0 0
        %3750 = vmatpush1.bf16.msra.mxu0 0
        %3751 = vmatprep.subr.bf16.mxu0 0
        %3752 = vmatpush1.bf16.msra.mxu0 0
        %3753 = vmatprep.subr.bf16.mxu0 0
        %3754 = vmatpush1.bf16.msra.mxu0 0
        %3755 = vmatprep.subr.bf16.mxu0 0
        %3756 = vmatpush1.bf16.msra.mxu0 0
        %3757 = vmatprep.subr.bf16.mxu0 0
        %3758 = vmatpush1.bf16.msra.mxu0 0
        %3759 = vmatprep.subr.bf16.mxu0 %v3492
        %3760 = vmatpush1.bf16.msra.mxu0 %v3491
        %3761 = vmatprep.subr.bf16.mxu0 %v3476
        %3762 = vmatpush1.bf16.msra.mxu0 %v3475
        %3763 = vmatprep.subr.bf16.mxu0 0
        %3764 = vmatpush2.bf16.msra.mxu0 0
        %3765 = vmatprep.subr.bf16.mxu0 0
        %3766 = vmatpush2.bf16.msra.mxu0 0
        %3767 = vmatprep.subr.bf16.mxu0 0
        %3768 = vmatpush2.bf16.msra.mxu0 0
        %3769 = vmatprep.subr.bf16.mxu0 0
        %3770 = vmatpush2.bf16.msra.mxu0 0
        %3771 = vmatprep.subr.bf16.mxu0 0
        %3772 = vmatpush2.bf16.msra.mxu0 0
        %3773 = vmatprep.subr.bf16.mxu0 0
        %3774 = vmatpush2.bf16.msra.mxu0 0
        %3775 = vmatprep.subr.bf16.mxu0 0
        %3776 = vmatpush2.bf16.msra.mxu0 0
        %3777 = vmatprep.subr.bf16.mxu0 0
        %3778 = vmatpush2.bf16.msra.mxu0 0
        %3779 = vmatprep.mubr.bf16.mxu0 0
        %3780 = vmatmul.mubr.bf16.gmra.mxu0 %v3530
        %v3781 = vpop.f32.mrf.mxu0
        %v3782 = vadd.f32 %v3332, %v3781
        %v3783 = vpop.f32.mrf.mxu0
        %v3784 = vadd.f32 %v3336, %v3783
        %v3785 = vpop.f32.mrf.mxu0
        %v3786 = vadd.f32 %v3332, %v3785
        %v3787 = vpop.f32.mrf.mxu0
        %v3788 = vadd.f32 %v3336, %v3787
        %3789 = vdwg.mxu0
        %3790 = vmatprep.subr.bf16.mxu0 0
        %3791 = vmatpush1.bf16.msra.mxu0 0
        %3792 = vmatprep.subr.bf16.mxu0 0
        %3793 = vmatpush1.bf16.msra.mxu0 0
        %3794 = vmatprep.subr.bf16.mxu0 0
        %3795 = vmatpush1.bf16.msra.mxu0 0
        %3796 = vmatprep.subr.bf16.mxu0 0
        %3797 = vmatpush1.bf16.msra.mxu0 0
        %3798 = vmatprep.subr.bf16.mxu0 0
        %3799 = vmatpush1.bf16.msra.mxu0 0
        %3800 = vmatprep.subr.bf16.mxu0 0
        %3801 = vmatpush1.bf16.msra.mxu0 0
        %3802 = vmatprep.subr.bf16.mxu0 %v3494
        %3803 = vmatpush1.bf16.msra.mxu0 %v3493
        %3804 = vmatprep.subr.bf16.mxu0 %v3478
        %3805 = vmatpush1.bf16.msra.mxu0 %v3477
        %3806 = vmatprep.subr.bf16.mxu0 0
        %3807 = vmatpush2.bf16.msra.mxu0 0
        %3808 = vmatprep.subr.bf16.mxu0 0
        %3809 = vmatpush2.bf16.msra.mxu0 0
        %3810 = vmatprep.subr.bf16.mxu0 0
        %3811 = vmatpush2.bf16.msra.mxu0 0
        %3812 = vmatprep.subr.bf16.mxu0 0
        %3813 = vmatpush2.bf16.msra.mxu0 0
        %3814 = vmatprep.subr.bf16.mxu0 0
        %3815 = vmatpush2.bf16.msra.mxu0 0
        %3816 = vmatprep.subr.bf16.mxu0 0
        %3817 = vmatpush2.bf16.msra.mxu0 0
        %3818 = vmatprep.subr.bf16.mxu0 0
        %3819 = vmatpush2.bf16.msra.mxu0 0
        %3820 = vmatprep.subr.bf16.mxu0 0
        %3821 = vmatpush2.bf16.msra.mxu0 0
        %3822 = vmatprep.mubr.bf16.mxu0 0
        %3823 = vmatmul.mubr.bf16.gmra.mxu0 %v3530
        %v3824 = vpop.f32.mrf.mxu0
        %v3825 = vadd.f32 %v3340, %v3824
        %v3826 = vpop.f32.mrf.mxu0
        %v3827 = vadd.f32 %v3344, %v3826
        %v3828 = vpop.f32.mrf.mxu0
        %v3829 = vadd.f32 %v3340, %v3828
        %v3830 = vpop.f32.mrf.mxu0
        %v3831 = vadd.f32 %v3344, %v3830
        %3832 = vdwg.mxu0
        %3833 = vmatprep.subr.bf16.mxu0 0
        %3834 = vmatpush1.bf16.msra.mxu0 0
        %3835 = vmatprep.subr.bf16.mxu0 0
        %3836 = vmatpush1.bf16.msra.mxu0 0
        %3837 = vmatprep.subr.bf16.mxu0 0
        %3838 = vmatpush1.bf16.msra.mxu0 0
        %3839 = vmatprep.subr.bf16.mxu0 0
        %3840 = vmatpush1.bf16.msra.mxu0 0
        %3841 = vmatprep.subr.bf16.mxu0 0
        %3842 = vmatpush1.bf16.msra.mxu0 0
        %3843 = vmatprep.subr.bf16.mxu0 0
        %3844 = vmatpush1.bf16.msra.mxu0 0
        %3845 = vmatprep.subr.bf16.mxu0 %v3496
        %3846 = vmatpush1.bf16.msra.mxu0 %v3495
        %3847 = vmatprep.subr.bf16.mxu0 %v3480
        %3848 = vmatpush1.bf16.msra.mxu0 %v3479
        %3849 = vmatprep.subr.bf16.mxu0 0
        %3850 = vmatpush2.bf16.msra.mxu0 0
        %3851 = vmatprep.subr.bf16.mxu0 0
        %3852 = vmatpush2.bf16.msra.mxu0 0
        %3853 = vmatprep.subr.bf16.mxu0 0
        %3854 = vmatpush2.bf16.msra.mxu0 0
        %3855 = vmatprep.subr.bf16.mxu0 0
        %3856 = vmatpush2.bf16.msra.mxu0 0
        %3857 = vmatprep.subr.bf16.mxu0 0
        %3858 = vmatpush2.bf16.msra.mxu0 0
        %3859 = vmatprep.subr.bf16.mxu0 0
        %3860 = vmatpush2.bf16.msra.mxu0 0
        %3861 = vmatprep.subr.bf16.mxu0 0
        %3862 = vmatpush2.bf16.msra.mxu0 0
        %3863 = vmatprep.subr.bf16.mxu0 0
        %3864 = vmatpush2.bf16.msra.mxu0 0
        %3865 = vmatprep.mubr.bf16.mxu0 0
        %3866 = vmatmul.mubr.bf16.gmra.mxu0 %v3530
        %v3867 = vpop.f32.mrf.mxu0
        %v3868 = vadd.f32 %v3348, %v3867
        %v3869 = vpop.f32.mrf.mxu0
        %v3870 = vadd.f32 %v3352, %v3869
        %v3871 = vpop.f32.mrf.mxu0
        %v3872 = vadd.f32 %v3348, %v3871
        %v3873 = vpop.f32.mrf.mxu0
        %v3874 = vadd.f32 %v3352, %v3873
        %3875 = vdwg.mxu0
        %v3876 = vmax.f32 %v3567, 0.0
        %v3877 = vmax.f32 %v3569, 0.0
        %v3878 = vmax.f32 %v3610, 0.0
        %v3879 = vmax.f32 %v3612, 0.0
        %v3880 = vmax.f32 %v3653, 0.0
        %v3881 = vmax.f32 %v3655, 0.0
        %v3882 = vmax.f32 %v3696, 0.0
        %v3883 = vmax.f32 %v3698, 0.0
        %v3884 = vmax.f32 %v3739, 0.0
        %v3885 = vmax.f32 %v3741, 0.0
        %v3886 = vmax.f32 %v3782, 0.0
        %v3887 = vmax.f32 %v3784, 0.0
        %v3888 = vmax.f32 %v3825, 0.0
        %v3889 = vmax.f32 %v3827, 0.0
        %v3890 = vmax.f32 %v3868, 0.0
        %v3891 = vmax.f32 %v3870, 0.0
        %v3892 = vmax.f32 %v3571, 0.0
        %v3893 = vmax.f32 %v3573, 0.0
        %v3894 = vmax.f32 %v3614, 0.0
        %v3895 = vmax.f32 %v3616, 0.0
        %v3896 = vmax.f32 %v3657, 0.0
        %v3897 = vmax.f32 %v3659, 0.0
        %v3898 = vmax.f32 %v3700, 0.0
        %v3899 = vmax.f32 %v3702, 0.0
        %v3900 = vmax.f32 %v3743, 0.0
        %v3901 = vmax.f32 %v3745, 0.0
        %v3902 = vmax.f32 %v3786, 0.0
        %v3903 = vmax.f32 %v3788, 0.0
        %v3904 = vmax.f32 %v3829, 0.0
        %v3905 = vmax.f32 %v3831, 0.0
        %v3906 = vmax.f32 %v3872, 0.0
        %v3907 = vmax.f32 %v3874, 0.0
        %v3908 = vpack.c.bf16 %v3892, %v3876
        %v3909 = vpack.c.bf16 %v3893, %v3877
        %v3910 = vpack.c.bf16 %v3894, %v3878
        %v3911 = vpack.c.bf16 %v3895, %v3879
        %v3912 = vpack.c.bf16 %v3896, %v3880
        %v3913 = vpack.c.bf16 %v3897, %v3881
        %v3914 = vpack.c.bf16 %v3898, %v3882
        %v3915 = vpack.c.bf16 %v3899, %v3883
        %v3916 = vpack.c.bf16 %v3900, %v3884
        %v3917 = vpack.c.bf16 %v3901, %v3885
        %v3918 = vpack.c.bf16 %v3902, %v3886
        %v3919 = vpack.c.bf16 %v3903, %v3887
        %v3920 = vpack.c.bf16 %v3904, %v3888
        %v3921 = vpack.c.bf16 %v3905, %v3889
        %v3922 = vpack.c.bf16 %v3906, %v3890
        %v3923 = vpack.c.bf16 %v3907, %v3891
        %v3924 = vld [vmem:[%s669] sm:$0xf]
        %v3925 = vld [vmem:[%s669 + $0x4] sm:$0xf]
        %v3926 = vld [vmem:[%s669 + $0x8] sm:$0xf]
        %v3927 = vld [vmem:[%s669 + $0xc] sm:$0xf]
        %v3928 = vld [vmem:[%s669 + $0x10] sm:$0xf]
        %v3929 = vld [vmem:[%s669 + $0x14] sm:$0xf]
        %v3930 = vld [vmem:[%s669 + $0x18] sm:$0xf]
        %v3931 = vld [vmem:[%s669 + $0x1c] sm:$0xf]
        %v3932 = vld [vmem:[%s669 + $0x20] sm:$0xf]
        %v3933 = vld [vmem:[%s669 + $0x24] sm:$0xf]
        %v3934 = vld [vmem:[%s669 + $0x28] sm:$0xf]
        %v3935 = vld [vmem:[%s669 + $0x2c] sm:$0xf]
        %v3936 = vld [vmem:[%s669 + $0x30] sm:$0xf]
        %v3937 = vld [vmem:[%s669 + $0x34] sm:$0xf]
        %v3938 = vld [vmem:[%s669 + $0x38] sm:$0xf]
        %v3939 = vld [vmem:[%s669 + $0x3c] sm:$0xf]
        %v3940 = vld [vmem:[%s669 + $0x40] sm:$0xf]
        %v3941 = vld [vmem:[%s669 + $0x44] sm:$0xf]
        %v3942 = vld [vmem:[%s669 + $0x48] sm:$0xf]
        %v3943 = vld [vmem:[%s669 + $0x4c] sm:$0xf]
        %v3944 = vld [vmem:[%s669 + $0x50] sm:$0xf]
        %v3945 = vld [vmem:[%s669 + $0x54] sm:$0xf]
        %v3946 = vld [vmem:[%s669 + $0x58] sm:$0xf]
        %v3947 = vld [vmem:[%s669 + $0x5c] sm:$0xf]
        %v3948 = vld [vmem:[%s669 + $0x60] sm:$0xf]
        %v3949 = vld [vmem:[%s669 + $0x64] sm:$0xf]
        %v3950 = vld [vmem:[%s669 + $0x68] sm:$0xf]
        %v3951 = vld [vmem:[%s669 + $0x6c] sm:$0xf]
        %v3952 = vld [vmem:[%s669 + $0x70] sm:$0xf]
        %v3953 = vld [vmem:[%s669 + $0x74] sm:$0xf]
        %v3954 = vld [vmem:[%s669 + $0x78] sm:$0xf]
        %v3955 = vld [vmem:[%s669 + $0x7c] sm:$0xf]
        %v3956 = vld [vmem:[%s669 + $0x80] sm:$0xf]
        %v3957 = vld [vmem:[%s669 + $0x84] sm:$0xf]
        %v3958 = vld [vmem:[%s669 + $0x88] sm:$0xf]
        %v3959 = vld [vmem:[%s669 + $0x8c] sm:$0xf]
        %v3960 = vld [vmem:[%s669 + $0x90] sm:$0xf]
        %v3961 = vld [vmem:[%s669 + $0x94] sm:$0xf]
        %v3962 = vld [vmem:[%s669 + $0x98] sm:$0xf]
        %v3963 = vld [vmem:[%s669 + $0x9c] sm:$0xf]
        %v3964 = vld [vmem:[%s669 + $0xa0] sm:$0xf]
        %v3965 = vld [vmem:[%s669 + $0xa4] sm:$0xf]
        %v3966 = vld [vmem:[%s669 + $0xa8] sm:$0xf]
        %v3967 = vld [vmem:[%s669 + $0xac] sm:$0xf]
        %v3968 = vld [vmem:[%s669 + $0xb0] sm:$0xf]
        %v3969 = vld [vmem:[%s669 + $0xb4] sm:$0xf]
        %v3970 = vld [vmem:[%s669 + $0xb8] sm:$0xf]
        %v3971 = vld [vmem:[%s669 + $0xbc] sm:$0xf]
        %v3972 = vld [vmem:[%s669 + $0xc0] sm:$0xf]
        %v3973 = vld [vmem:[%s669 + $0xc4] sm:$0xf]
        %v3974 = vld [vmem:[%s669 + $0xc8] sm:$0xf]
        %v3975 = vld [vmem:[%s669 + $0xcc] sm:$0xf]
        %v3976 = vld [vmem:[%s669 + $0xd0] sm:$0xf]
        %v3977 = vld [vmem:[%s669 + $0xd4] sm:$0xf]
        %v3978 = vld [vmem:[%s669 + $0xd8] sm:$0xf]
        %v3979 = vld [vmem:[%s669 + $0xdc] sm:$0xf]
        %v3980 = vld [vmem:[%s669 + $0xe0] sm:$0xf]
        %v3981 = vld [vmem:[%s669 + $0xe4] sm:$0xf]
        %v3982 = vld [vmem:[%s669 + $0xe8] sm:$0xf]
        %v3983 = vld [vmem:[%s669 + $0xec] sm:$0xf]
        %v3984 = vld [vmem:[%s669 + $0xf0] sm:$0xf]
        %v3985 = vld [vmem:[%s669 + $0xf4] sm:$0xf]
        %v3986 = vld [vmem:[%s669 + $0xf8] sm:$0xf]
        %v3987 = vld [vmem:[%s669 + $0xfc] sm:$0xf]
        %v3988 = vld [vmem:[%s669 + $0x100] sm:$0xf]
        %v3989 = vld [vmem:[%s669 + $0x104] sm:$0xf]
        %v3990 = vld [vmem:[%s669 + $0x108] sm:$0xf]
        %v3991 = vld [vmem:[%s669 + $0x10c] sm:$0xf]
        %v3992 = vld [vmem:[%s669 + $0x110] sm:$0xf]
        %v3993 = vld [vmem:[%s669 + $0x114] sm:$0xf]
        %v3994 = vld [vmem:[%s669 + $0x118] sm:$0xf]
        %v3995 = vld [vmem:[%s669 + $0x11c] sm:$0xf]
        %v3996 = vld [vmem:[%s669 + $0x120] sm:$0xf]
        %v3997 = vld [vmem:[%s669 + $0x124] sm:$0xf]
        %v3998 = vld [vmem:[%s669 + $0x128] sm:$0xf]
        %v3999 = vld [vmem:[%s669 + $0x12c] sm:$0xf]
        %v4000 = vld [vmem:[%s669 + $0x130] sm:$0xf]
        %v4001 = vld [vmem:[%s669 + $0x134] sm:$0xf]
        %v4002 = vld [vmem:[%s669 + $0x138] sm:$0xf]
        %v4003 = vld [vmem:[%s669 + $0x13c] sm:$0xf]
        %v4004 = vld [vmem:[%s669 + $0x140] sm:$0xf]
        %v4005 = vld [vmem:[%s669 + $0x144] sm:$0xf]
        %v4006 = vld [vmem:[%s669 + $0x148] sm:$0xf]
        %v4007 = vld [vmem:[%s669 + $0x14c] sm:$0xf]
        %v4008 = vld [vmem:[%s669 + $0x150] sm:$0xf]
        %v4009 = vld [vmem:[%s669 + $0x154] sm:$0xf]
        %v4010 = vld [vmem:[%s669 + $0x158] sm:$0xf]
        %v4011 = vld [vmem:[%s669 + $0x15c] sm:$0xf]
        %v4012 = vld [vmem:[%s669 + $0x160] sm:$0xf]
        %v4013 = vld [vmem:[%s669 + $0x164] sm:$0xf]
        %v4014 = vld [vmem:[%s669 + $0x168] sm:$0xf]
        %v4015 = vld [vmem:[%s669 + $0x16c] sm:$0xf]
        %v4016 = vld [vmem:[%s669 + $0x170] sm:$0xf]
        %v4017 = vld [vmem:[%s669 + $0x174] sm:$0xf]
        %v4018 = vld [vmem:[%s669 + $0x178] sm:$0xf]
        %v4019 = vld [vmem:[%s669 + $0x17c] sm:$0xf]
        %v4020 = vld [vmem:[%s669 + $0x180] sm:$0xf]
        %v4021 = vld [vmem:[%s669 + $0x184] sm:$0xf]
        %v4022 = vld [vmem:[%s669 + $0x188] sm:$0xf]
        %v4023 = vld [vmem:[%s669 + $0x18c] sm:$0xf]
        %v4024 = vld [vmem:[%s669 + $0x190] sm:$0xf]
        %v4025 = vld [vmem:[%s669 + $0x194] sm:$0xf]
        %v4026 = vld [vmem:[%s669 + $0x198] sm:$0xf]
        %v4027 = vld [vmem:[%s669 + $0x19c] sm:$0xf]
        %v4028 = vld [vmem:[%s669 + $0x1a0] sm:$0xf]
        %v4029 = vld [vmem:[%s669 + $0x1a4] sm:$0xf]
        %v4030 = vld [vmem:[%s669 + $0x1a8] sm:$0xf]
        %v4031 = vld [vmem:[%s669 + $0x1ac] sm:$0xf]
        %v4032 = vld [vmem:[%s669 + $0x1b0] sm:$0xf]
        %v4033 = vld [vmem:[%s669 + $0x1b4] sm:$0xf]
        %v4034 = vld [vmem:[%s669 + $0x1b8] sm:$0xf]
        %v4035 = vld [vmem:[%s669 + $0x1bc] sm:$0xf]
        %v4036 = vld [vmem:[%s669 + $0x1c0] sm:$0xf]
        %v4037 = vld [vmem:[%s669 + $0x1c4] sm:$0xf]
        %v4038 = vld [vmem:[%s669 + $0x1c8] sm:$0xf]
        %v4039 = vld [vmem:[%s669 + $0x1cc] sm:$0xf]
        %v4040 = vld [vmem:[%s669 + $0x1d0] sm:$0xf]
        %v4041 = vld [vmem:[%s669 + $0x1d4] sm:$0xf]
        %v4042 = vld [vmem:[%s669 + $0x1d8] sm:$0xf]
        %v4043 = vld [vmem:[%s669 + $0x1dc] sm:$0xf]
        %v4044 = vld [vmem:[%s669 + $0x1e0] sm:$0xf]
        %v4045 = vld [vmem:[%s669 + $0x1e4] sm:$0xf]
        %v4046 = vld [vmem:[%s669 + $0x1e8] sm:$0xf]
        %v4047 = vld [vmem:[%s669 + $0x1ec] sm:$0xf]
        %v4048 = vld [vmem:[%s669 + $0x1f0] sm:$0xf]
        %v4049 = vld [vmem:[%s669 + $0x1f4] sm:$0xf]
        %v4050 = vld [vmem:[%s669 + $0x1f8] sm:$0xf]
        %v4051 = vld [vmem:[%s669 + $0x1fc] sm:$0xf]
        %v4052 = vld [vmem:[%s669 + $0x200] sm:$0xf]
        %v4053 = vld [vmem:[%s669 + $0x204] sm:$0xf]
        %v4054 = vld [vmem:[%s669 + $0x208] sm:$0xf]
        %v4055 = vld [vmem:[%s669 + $0x20c] sm:$0xf]
        %v4056 = vld [vmem:[%s669 + $0x210] sm:$0xf]
        %v4057 = vld [vmem:[%s669 + $0x214] sm:$0xf]
        %v4058 = vld [vmem:[%s669 + $0x218] sm:$0xf]
        %v4059 = vld [vmem:[%s669 + $0x21c] sm:$0xf]
        %v4060 = vld [vmem:[%s669 + $0x220] sm:$0xf]
        %v4061 = vld [vmem:[%s669 + $0x224] sm:$0xf]
        %v4062 = vld [vmem:[%s669 + $0x228] sm:$0xf]
        %v4063 = vld [vmem:[%s669 + $0x22c] sm:$0xf]
        %v4064 = vld [vmem:[%s669 + $0x230] sm:$0xf]
        %v4065 = vld [vmem:[%s669 + $0x234] sm:$0xf]
        %v4066 = vld [vmem:[%s669 + $0x238] sm:$0xf]
        %v4067 = vld [vmem:[%s669 + $0x23c] sm:$0xf]
        %v4068 = vld [vmem:[%s669 + $0x240] sm:$0xf]
        %v4069 = vld [vmem:[%s669 + $0x244] sm:$0xf]
        %v4070 = vld [vmem:[%s669 + $0x248] sm:$0xf]
        %v4071 = vld [vmem:[%s669 + $0x24c] sm:$0xf]
        %v4072 = vld [vmem:[%s669 + $0x250] sm:$0xf]
        %v4073 = vld [vmem:[%s669 + $0x254] sm:$0xf]
        %v4074 = vld [vmem:[%s669 + $0x258] sm:$0xf]
        %v4075 = vld [vmem:[%s669 + $0x25c] sm:$0xf]
        %v4076 = vld [vmem:[%s669 + $0x260] sm:$0xf]
        %v4077 = vld [vmem:[%s669 + $0x264] sm:$0xf]
        %v4078 = vld [vmem:[%s669 + $0x268] sm:$0xf]
        %v4079 = vld [vmem:[%s669 + $0x26c] sm:$0xf]
        %v4080 = vld [vmem:[%s669 + $0x270] sm:$0xf]
        %v4081 = vld [vmem:[%s669 + $0x274] sm:$0xf]
        %v4082 = vld [vmem:[%s669 + $0x278] sm:$0xf]
        %v4083 = vld [vmem:[%s669 + $0x27c] sm:$0xf]
        %v4084 = vld [vmem:[%s669 + $0x280] sm:$0xf]
        %v4085 = vld [vmem:[%s669 + $0x284] sm:$0xf]
        %v4086 = vld [vmem:[%s669 + $0x288] sm:$0xf]
        %v4087 = vld [vmem:[%s669 + $0x28c] sm:$0xf]
        %v4088 = vld [vmem:[%s669 + $0x290] sm:$0xf]
        %v4089 = vld [vmem:[%s669 + $0x294] sm:$0xf]
        %v4090 = vld [vmem:[%s669 + $0x298] sm:$0xf]
        %v4091 = vld [vmem:[%s669 + $0x29c] sm:$0xf]
        %v4092 = vld [vmem:[%s669 + $0x2a0] sm:$0xf]
        %v4093 = vld [vmem:[%s669 + $0x2a4] sm:$0xf]
        %v4094 = vld [vmem:[%s669 + $0x2a8] sm:$0xf]
        %v4095 = vld [vmem:[%s669 + $0x2ac] sm:$0xf]
        %v4096 = vld [vmem:[%s669 + $0x2b0] sm:$0xf]
        %v4097 = vld [vmem:[%s669 + $0x2b4] sm:$0xf]
        %v4098 = vld [vmem:[%s669 + $0x2b8] sm:$0xf]
        %v4099 = vld [vmem:[%s669 + $0x2bc] sm:$0xf]
        %v4100 = vld [vmem:[%s669 + $0x2c0] sm:$0xf]
        %v4101 = vld [vmem:[%s669 + $0x2c4] sm:$0xf]
        %v4102 = vld [vmem:[%s669 + $0x2c8] sm:$0xf]
        %v4103 = vld [vmem:[%s669 + $0x2cc] sm:$0xf]
        %v4104 = vld [vmem:[%s669 + $0x2d0] sm:$0xf]
        %v4105 = vld [vmem:[%s669 + $0x2d4] sm:$0xf]
        %v4106 = vld [vmem:[%s669 + $0x2d8] sm:$0xf]
        %v4107 = vld [vmem:[%s669 + $0x2dc] sm:$0xf]
        %v4108 = vld [vmem:[%s669 + $0x2e0] sm:$0xf]
        %v4109 = vld [vmem:[%s669 + $0x2e4] sm:$0xf]
        %v4110 = vld [vmem:[%s669 + $0x2e8] sm:$0xf]
        %v4111 = vld [vmem:[%s669 + $0x2ec] sm:$0xf]
        %v4112 = vld [vmem:[%s669 + $0x2f0] sm:$0xf]
        %v4113 = vld [vmem:[%s669 + $0x2f4] sm:$0xf]
        %v4114 = vld [vmem:[%s669 + $0x2f8] sm:$0xf]
        %v4115 = vld [vmem:[%s669 + $0x2fc] sm:$0xf]
        %v4116 = vld [vmem:[%s669 + $0x300] sm:$0xf]
        %v4117 = vld [vmem:[%s669 + $0x304] sm:$0xf]
        %v4118 = vld [vmem:[%s669 + $0x308] sm:$0xf]
        %v4119 = vld [vmem:[%s669 + $0x30c] sm:$0xf]
        %v4120 = vld [vmem:[%s669 + $0x310] sm:$0xf]
        %v4121 = vld [vmem:[%s669 + $0x314] sm:$0xf]
        %v4122 = vld [vmem:[%s669 + $0x318] sm:$0xf]
        %v4123 = vld [vmem:[%s669 + $0x31c] sm:$0xf]
        %v4124 = vld [vmem:[%s669 + $0x320] sm:$0xf]
        %v4125 = vld [vmem:[%s669 + $0x324] sm:$0xf]
        %v4126 = vld [vmem:[%s669 + $0x328] sm:$0xf]
        %v4127 = vld [vmem:[%s669 + $0x32c] sm:$0xf]
        %v4128 = vld [vmem:[%s669 + $0x330] sm:$0xf]
        %v4129 = vld [vmem:[%s669 + $0x334] sm:$0xf]
        %v4130 = vld [vmem:[%s669 + $0x338] sm:$0xf]
        %v4131 = vld [vmem:[%s669 + $0x33c] sm:$0xf]
        %v4132 = vld [vmem:[%s669 + $0x340] sm:$0xf]
        %v4133 = vld [vmem:[%s669 + $0x344] sm:$0xf]
        %v4134 = vld [vmem:[%s669 + $0x348] sm:$0xf]
        %v4135 = vld [vmem:[%s669 + $0x34c] sm:$0xf]
        %v4136 = vld [vmem:[%s669 + $0x350] sm:$0xf]
        %v4137 = vld [vmem:[%s669 + $0x354] sm:$0xf]
        %v4138 = vld [vmem:[%s669 + $0x358] sm:$0xf]
        %v4139 = vld [vmem:[%s669 + $0x35c] sm:$0xf]
        %v4140 = vld [vmem:[%s669 + $0x360] sm:$0xf]
        %v4141 = vld [vmem:[%s669 + $0x364] sm:$0xf]
        %v4142 = vld [vmem:[%s669 + $0x368] sm:$0xf]
        %v4143 = vld [vmem:[%s669 + $0x36c] sm:$0xf]
        %v4144 = vld [vmem:[%s669 + $0x370] sm:$0xf]
        %v4145 = vld [vmem:[%s669 + $0x374] sm:$0xf]
        %v4146 = vld [vmem:[%s669 + $0x378] sm:$0xf]
        %v4147 = vld [vmem:[%s669 + $0x37c] sm:$0xf]
        %v4148 = vld [vmem:[%s669 + $0x380] sm:$0xf]
        %v4149 = vld [vmem:[%s669 + $0x384] sm:$0xf]
        %v4150 = vld [vmem:[%s669 + $0x388] sm:$0xf]
        %v4151 = vld [vmem:[%s669 + $0x38c] sm:$0xf]
        %v4152 = vld [vmem:[%s669 + $0x390] sm:$0xf]
        %v4153 = vld [vmem:[%s669 + $0x394] sm:$0xf]
        %v4154 = vld [vmem:[%s669 + $0x398] sm:$0xf]
        %v4155 = vld [vmem:[%s669 + $0x39c] sm:$0xf]
        %v4156 = vld [vmem:[%s669 + $0x3a0] sm:$0xf]
        %v4157 = vld [vmem:[%s669 + $0x3a4] sm:$0xf]
        %v4158 = vld [vmem:[%s669 + $0x3a8] sm:$0xf]
        %v4159 = vld [vmem:[%s669 + $0x3ac] sm:$0xf]
        %v4160 = vld [vmem:[%s669 + $0x3b0] sm:$0xf]
        %v4161 = vld [vmem:[%s669 + $0x3b4] sm:$0xf]
        %v4162 = vld [vmem:[%s669 + $0x3b8] sm:$0xf]
        %v4163 = vld [vmem:[%s669 + $0x3bc] sm:$0xf]
        %v4164 = vld [vmem:[%s669 + $0x3c0] sm:$0xf]
        %v4165 = vld [vmem:[%s669 + $0x3c4] sm:$0xf]
        %v4166 = vld [vmem:[%s669 + $0x3c8] sm:$0xf]
        %v4167 = vld [vmem:[%s669 + $0x3cc] sm:$0xf]
        %v4168 = vld [vmem:[%s669 + $0x3d0] sm:$0xf]
        %v4169 = vld [vmem:[%s669 + $0x3d4] sm:$0xf]
        %v4170 = vld [vmem:[%s669 + $0x3d8] sm:$0xf]
        %v4171 = vld [vmem:[%s669 + $0x3dc] sm:$0xf]
        %v4172 = vld [vmem:[%s669 + $0x3e0] sm:$0xf]
        %v4173 = vld [vmem:[%s669 + $0x3e4] sm:$0xf]
        %v4174 = vld [vmem:[%s669 + $0x3e8] sm:$0xf]
        %v4175 = vld [vmem:[%s669 + $0x3ec] sm:$0xf]
        %v4176 = vld [vmem:[%s669 + $0x3f0] sm:$0xf]
        %v4177 = vld [vmem:[%s669 + $0x3f4] sm:$0xf]
        %v4178 = vld [vmem:[%s669 + $0x3f8] sm:$0xf]
        %v4179 = vld [vmem:[%s669 + $0x3fc] sm:$0xf]
        %v4180 = vld [vmem:[%s637 + $0x42] sm:$0x1]
        %v4181 = vlaneseq
        %v4182 = vshrl.u32 %v4181, 7
        %v4183 = vsub.s32 0, %v4182
        %v4184 = vrot.slane %v4180, %v4183
        %v4441 = vunpack.c.l.b16 %v3924
        %v4442 = vunpack.c.l.b16 %v3925
        %v4443 = vunpack.c.l.b16 %v3926
        %v4444 = vunpack.c.l.b16 %v3927
        %v4445 = vunpack.c.l.b16 %v3928
        %v4446 = vunpack.c.l.b16 %v3929
        %v4447 = vunpack.c.l.b16 %v3930
        %v4448 = vunpack.c.l.b16 %v3931
        %v4449 = vunpack.c.l.b16 %v3932
        %v4450 = vunpack.c.l.b16 %v3933
        %v4451 = vunpack.c.l.b16 %v3934
        %v4452 = vunpack.c.l.b16 %v3935
        %v4453 = vunpack.c.l.b16 %v3936
        %v4454 = vunpack.c.l.b16 %v3937
        %v4455 = vunpack.c.l.b16 %v3938
        %v4456 = vunpack.c.l.b16 %v3939
        %v4457 = vunpack.c.l.b16 %v3940
        %v4458 = vunpack.c.l.b16 %v3941
        %v4459 = vunpack.c.l.b16 %v3942
        %v4460 = vunpack.c.l.b16 %v3943
        %v4461 = vunpack.c.l.b16 %v3944
        %v4462 = vunpack.c.l.b16 %v3945
        %v4463 = vunpack.c.l.b16 %v3946
        %v4464 = vunpack.c.l.b16 %v3947
        %v4465 = vunpack.c.l.b16 %v3948
        %v4466 = vunpack.c.l.b16 %v3949
        %v4467 = vunpack.c.l.b16 %v3950
        %v4468 = vunpack.c.l.b16 %v3951
        %v4469 = vunpack.c.l.b16 %v3952
        %v4470 = vunpack.c.l.b16 %v3953
        %v4471 = vunpack.c.l.b16 %v3954
        %v4472 = vunpack.c.l.b16 %v3955
        %v4473 = vunpack.c.l.b16 %v3956
        %v4474 = vunpack.c.l.b16 %v3957
        %v4475 = vunpack.c.l.b16 %v3958
        %v4476 = vunpack.c.l.b16 %v3959
        %v4477 = vunpack.c.l.b16 %v3960
        %v4478 = vunpack.c.l.b16 %v3961
        %v4479 = vunpack.c.l.b16 %v3962
        %v4480 = vunpack.c.l.b16 %v3963
        %v4481 = vunpack.c.l.b16 %v3964
        %v4482 = vunpack.c.l.b16 %v3965
        %v4483 = vunpack.c.l.b16 %v3966
        %v4484 = vunpack.c.l.b16 %v3967
        %v4485 = vunpack.c.l.b16 %v3968
        %v4486 = vunpack.c.l.b16 %v3969
        %v4487 = vunpack.c.l.b16 %v3970
        %v4488 = vunpack.c.l.b16 %v3971
        %v4489 = vunpack.c.l.b16 %v3972
        %v4490 = vunpack.c.l.b16 %v3973
        %v4491 = vunpack.c.l.b16 %v3974
        %v4492 = vunpack.c.l.b16 %v3975
        %v4493 = vunpack.c.l.b16 %v3976
        %v4494 = vunpack.c.l.b16 %v3977
        %v4495 = vunpack.c.l.b16 %v3978
        %v4496 = vunpack.c.l.b16 %v3979
        %v4497 = vunpack.c.l.b16 %v3980
        %v4498 = vunpack.c.l.b16 %v3981
        %v4499 = vunpack.c.l.b16 %v3982
        %v4500 = vunpack.c.l.b16 %v3983
        %v4501 = vunpack.c.l.b16 %v3984
        %v4502 = vunpack.c.l.b16 %v3985
        %v4503 = vunpack.c.l.b16 %v3986
        %v4504 = vunpack.c.l.b16 %v3987
        %v4505 = vunpack.c.l.b16 %v3988
        %v4506 = vunpack.c.l.b16 %v3989
        %v4507 = vunpack.c.l.b16 %v3990
        %v4508 = vunpack.c.l.b16 %v3991
        %v4509 = vunpack.c.l.b16 %v3992
        %v4510 = vunpack.c.l.b16 %v3993
        %v4511 = vunpack.c.l.b16 %v3994
        %v4512 = vunpack.c.l.b16 %v3995
        %v4513 = vunpack.c.l.b16 %v3996
        %v4514 = vunpack.c.l.b16 %v3997
        %v4515 = vunpack.c.l.b16 %v3998
        %v4516 = vunpack.c.l.b16 %v3999
        %v4517 = vunpack.c.l.b16 %v4000
        %v4518 = vunpack.c.l.b16 %v4001
        %v4519 = vunpack.c.l.b16 %v4002
        %v4520 = vunpack.c.l.b16 %v4003
        %v4521 = vunpack.c.l.b16 %v4004
        %v4522 = vunpack.c.l.b16 %v4005
        %v4523 = vunpack.c.l.b16 %v4006
        %v4524 = vunpack.c.l.b16 %v4007
        %v4525 = vunpack.c.l.b16 %v4008
        %v4526 = vunpack.c.l.b16 %v4009
        %v4527 = vunpack.c.l.b16 %v4010
        %v4528 = vunpack.c.l.b16 %v4011
        %v4529 = vunpack.c.l.b16 %v4012
        %v4530 = vunpack.c.l.b16 %v4013
        %v4531 = vunpack.c.l.b16 %v4014
        %v4532 = vunpack.c.l.b16 %v4015
        %v4533 = vunpack.c.l.b16 %v4016
        %v4534 = vunpack.c.l.b16 %v4017
        %v4535 = vunpack.c.l.b16 %v4018
        %v4536 = vunpack.c.l.b16 %v4019
        %v4537 = vunpack.c.l.b16 %v4020
        %v4538 = vunpack.c.l.b16 %v4021
        %v4539 = vunpack.c.l.b16 %v4022
        %v4540 = vunpack.c.l.b16 %v4023
        %v4541 = vunpack.c.l.b16 %v4024
        %v4542 = vunpack.c.l.b16 %v4025
        %v4543 = vunpack.c.l.b16 %v4026
        %v4544 = vunpack.c.l.b16 %v4027
        %v4545 = vunpack.c.l.b16 %v4028
        %v4546 = vunpack.c.l.b16 %v4029
        %v4547 = vunpack.c.l.b16 %v4030
        %v4548 = vunpack.c.l.b16 %v4031
        %v4549 = vunpack.c.l.b16 %v4032
        %v4550 = vunpack.c.l.b16 %v4033
        %v4551 = vunpack.c.l.b16 %v4034
        %v4552 = vunpack.c.l.b16 %v4035
        %v4553 = vunpack.c.l.b16 %v4036
        %v4554 = vunpack.c.l.b16 %v4037
        %v4555 = vunpack.c.l.b16 %v4038
        %v4556 = vunpack.c.l.b16 %v4039
        %v4557 = vunpack.c.l.b16 %v4040
        %v4558 = vunpack.c.l.b16 %v4041
        %v4559 = vunpack.c.l.b16 %v4042
        %v4560 = vunpack.c.l.b16 %v4043
        %v4561 = vunpack.c.l.b16 %v4044
        %v4562 = vunpack.c.l.b16 %v4045
        %v4563 = vunpack.c.l.b16 %v4046
        %v4564 = vunpack.c.l.b16 %v4047
        %v4565 = vunpack.c.l.b16 %v4048
        %v4566 = vunpack.c.l.b16 %v4049
        %v4567 = vunpack.c.l.b16 %v4050
        %v4568 = vunpack.c.l.b16 %v4051
        %v4569 = vunpack.c.l.b16 %v4052
        %v4570 = vunpack.c.l.b16 %v4053
        %v4571 = vunpack.c.l.b16 %v4054
        %v4572 = vunpack.c.l.b16 %v4055
        %v4573 = vunpack.c.l.b16 %v4056
        %v4574 = vunpack.c.l.b16 %v4057
        %v4575 = vunpack.c.l.b16 %v4058
        %v4576 = vunpack.c.l.b16 %v4059
        %v4577 = vunpack.c.l.b16 %v4060
        %v4578 = vunpack.c.l.b16 %v4061
        %v4579 = vunpack.c.l.b16 %v4062
        %v4580 = vunpack.c.l.b16 %v4063
        %v4581 = vunpack.c.l.b16 %v4064
        %v4582 = vunpack.c.l.b16 %v4065
        %v4583 = vunpack.c.l.b16 %v4066
        %v4584 = vunpack.c.l.b16 %v4067
        %v4585 = vunpack.c.l.b16 %v4068
        %v4586 = vunpack.c.l.b16 %v4069
        %v4587 = vunpack.c.l.b16 %v4070
        %v4588 = vunpack.c.l.b16 %v4071
        %v4589 = vunpack.c.l.b16 %v4072
        %v4590 = vunpack.c.l.b16 %v4073
        %v4591 = vunpack.c.l.b16 %v4074
        %v4592 = vunpack.c.l.b16 %v4075
        %v4593 = vunpack.c.l.b16 %v4076
        %v4594 = vunpack.c.l.b16 %v4077
        %v4595 = vunpack.c.l.b16 %v4078
        %v4596 = vunpack.c.l.b16 %v4079
        %v4597 = vunpack.c.l.b16 %v4080
        %v4598 = vunpack.c.l.b16 %v4081
        %v4599 = vunpack.c.l.b16 %v4082
        %v4600 = vunpack.c.l.b16 %v4083
        %v4601 = vunpack.c.l.b16 %v4084
        %v4602 = vunpack.c.l.b16 %v4085
        %v4603 = vunpack.c.l.b16 %v4086
        %v4604 = vunpack.c.l.b16 %v4087
        %v4605 = vunpack.c.l.b16 %v4088
        %v4606 = vunpack.c.l.b16 %v4089
        %v4607 = vunpack.c.l.b16 %v4090
        %v4608 = vunpack.c.l.b16 %v4091
        %v4609 = vunpack.c.l.b16 %v4092
        %v4610 = vunpack.c.l.b16 %v4093
        %v4611 = vunpack.c.l.b16 %v4094
        %v4612 = vunpack.c.l.b16 %v4095
        %v4613 = vunpack.c.l.b16 %v4096
        %v4614 = vunpack.c.l.b16 %v4097
        %v4615 = vunpack.c.l.b16 %v4098
        %v4616 = vunpack.c.l.b16 %v4099
        %v4617 = vunpack.c.l.b16 %v4100
        %v4618 = vunpack.c.l.b16 %v4101
        %v4619 = vunpack.c.l.b16 %v4102
        %v4620 = vunpack.c.l.b16 %v4103
        %v4621 = vunpack.c.l.b16 %v4104
        %v4622 = vunpack.c.l.b16 %v4105
        %v4623 = vunpack.c.l.b16 %v4106
        %v4624 = vunpack.c.l.b16 %v4107
        %v4625 = vunpack.c.l.b16 %v4108
        %v4626 = vunpack.c.l.b16 %v4109
        %v4627 = vunpack.c.l.b16 %v4110
        %v4628 = vunpack.c.l.b16 %v4111
        %v4629 = vunpack.c.l.b16 %v4112
        %v4630 = vunpack.c.l.b16 %v4113
        %v4631 = vunpack.c.l.b16 %v4114
        %v4632 = vunpack.c.l.b16 %v4115
        %v4633 = vunpack.c.l.b16 %v4116
        %v4634 = vunpack.c.l.b16 %v4117
        %v4635 = vunpack.c.l.b16 %v4118
        %v4636 = vunpack.c.l.b16 %v4119
        %v4637 = vunpack.c.l.b16 %v4120
        %v4638 = vunpack.c.l.b16 %v4121
        %v4639 = vunpack.c.l.b16 %v4122
        %v4640 = vunpack.c.l.b16 %v4123
        %v4641 = vunpack.c.l.b16 %v4124
        %v4642 = vunpack.c.l.b16 %v4125
        %v4643 = vunpack.c.l.b16 %v4126
        %v4644 = vunpack.c.l.b16 %v4127
        %v4645 = vunpack.c.l.b16 %v4128
        %v4646 = vunpack.c.l.b16 %v4129
        %v4647 = vunpack.c.l.b16 %v4130
        %v4648 = vunpack.c.l.b16 %v4131
        %v4649 = vunpack.c.l.b16 %v4132
        %v4650 = vunpack.c.l.b16 %v4133
        %v4651 = vunpack.c.l.b16 %v4134
        %v4652 = vunpack.c.l.b16 %v4135
        %v4653 = vunpack.c.l.b16 %v4136
        %v4654 = vunpack.c.l.b16 %v4137
        %v4655 = vunpack.c.l.b16 %v4138
        %v4656 = vunpack.c.l.b16 %v4139
        %v4657 = vunpack.c.l.b16 %v4140
        %v4658 = vunpack.c.l.b16 %v4141
        %v4659 = vunpack.c.l.b16 %v4142
        %v4660 = vunpack.c.l.b16 %v4143
        %v4661 = vunpack.c.l.b16 %v4144
        %v4662 = vunpack.c.l.b16 %v4145
        %v4663 = vunpack.c.l.b16 %v4146
        %v4664 = vunpack.c.l.b16 %v4147
        %v4665 = vunpack.c.l.b16 %v4148
        %v4666 = vunpack.c.l.b16 %v4149
        %v4667 = vunpack.c.l.b16 %v4150
        %v4668 = vunpack.c.l.b16 %v4151
        %v4669 = vunpack.c.l.b16 %v4152
        %v4670 = vunpack.c.l.b16 %v4153
        %v4671 = vunpack.c.l.b16 %v4154
        %v4672 = vunpack.c.l.b16 %v4155
        %v4673 = vunpack.c.l.b16 %v4156
        %v4674 = vunpack.c.l.b16 %v4157
        %v4675 = vunpack.c.l.b16 %v4158
        %v4676 = vunpack.c.l.b16 %v4159
        %v4677 = vunpack.c.l.b16 %v4160
        %v4678 = vunpack.c.l.b16 %v4161
        %v4679 = vunpack.c.l.b16 %v4162
        %v4680 = vunpack.c.l.b16 %v4163
        %v4681 = vunpack.c.l.b16 %v4164
        %v4682 = vunpack.c.l.b16 %v4165
        %v4683 = vunpack.c.l.b16 %v4166
        %v4684 = vunpack.c.l.b16 %v4167
        %v4685 = vunpack.c.l.b16 %v4168
        %v4686 = vunpack.c.l.b16 %v4169
        %v4687 = vunpack.c.l.b16 %v4170
        %v4688 = vunpack.c.l.b16 %v4171
        %v4689 = vunpack.c.l.b16 %v4172
        %v4690 = vunpack.c.l.b16 %v4173
        %v4691 = vunpack.c.l.b16 %v4174
        %v4692 = vunpack.c.l.b16 %v4175
        %v4693 = vunpack.c.l.b16 %v4176
        %v4694 = vunpack.c.l.b16 %v4177
        %v4695 = vunpack.c.l.b16 %v4178
        %v4696 = vunpack.c.l.b16 %v4179
        %v4697 = vpack.c.b16 %v4442, %v4441
        %v4698 = vpack.c.b16 %v4444, %v4443
        %v4699 = vpack.c.b16 %v4446, %v4445
        %v4700 = vpack.c.b16 %v4448, %v4447
        %v4701 = vpack.c.b16 %v4450, %v4449
        %v4702 = vpack.c.b16 %v4452, %v4451
        %v4703 = vpack.c.b16 %v4454, %v4453
        %v4704 = vpack.c.b16 %v4456, %v4455
        %v4705 = vpack.c.b16 %v4458, %v4457
        %v4706 = vpack.c.b16 %v4460, %v4459
        %v4707 = vpack.c.b16 %v4462, %v4461
        %v4708 = vpack.c.b16 %v4464, %v4463
        %v4709 = vpack.c.b16 %v4466, %v4465
        %v4710 = vpack.c.b16 %v4468, %v4467
        %v4711 = vpack.c.b16 %v4470, %v4469
        %v4712 = vpack.c.b16 %v4472, %v4471
        %v4713 = vpack.c.b16 %v4474, %v4473
        %v4714 = vpack.c.b16 %v4476, %v4475
        %v4715 = vpack.c.b16 %v4478, %v4477
        %v4716 = vpack.c.b16 %v4480, %v4479
        %v4717 = vpack.c.b16 %v4482, %v4481
        %v4718 = vpack.c.b16 %v4484, %v4483
        %v4719 = vpack.c.b16 %v4486, %v4485
        %v4720 = vpack.c.b16 %v4488, %v4487
        %v4721 = vpack.c.b16 %v4490, %v4489
        %v4722 = vpack.c.b16 %v4492, %v4491
        %v4723 = vpack.c.b16 %v4494, %v4493
        %v4724 = vpack.c.b16 %v4496, %v4495
        %v4725 = vpack.c.b16 %v4498, %v4497
        %v4726 = vpack.c.b16 %v4500, %v4499
        %v4727 = vpack.c.b16 %v4502, %v4501
        %v4728 = vpack.c.b16 %v4504, %v4503
        %v4729 = vpack.c.b16 %v4506, %v4505
        %v4730 = vpack.c.b16 %v4508, %v4507
        %v4731 = vpack.c.b16 %v4510, %v4509
        %v4732 = vpack.c.b16 %v4512, %v4511
        %v4733 = vpack.c.b16 %v4514, %v4513
        %v4734 = vpack.c.b16 %v4516, %v4515
        %v4735 = vpack.c.b16 %v4518, %v4517
        %v4736 = vpack.c.b16 %v4520, %v4519
        %v4737 = vpack.c.b16 %v4522, %v4521
        %v4738 = vpack.c.b16 %v4524, %v4523
        %v4739 = vpack.c.b16 %v4526, %v4525
        %v4740 = vpack.c.b16 %v4528, %v4527
        %v4741 = vpack.c.b16 %v4530, %v4529
        %v4742 = vpack.c.b16 %v4532, %v4531
        %v4743 = vpack.c.b16 %v4534, %v4533
        %v4744 = vpack.c.b16 %v4536, %v4535
        %v4745 = vpack.c.b16 %v4538, %v4537
        %v4746 = vpack.c.b16 %v4540, %v4539
        %v4747 = vpack.c.b16 %v4542, %v4541
        %v4748 = vpack.c.b16 %v4544, %v4543
        %v4749 = vpack.c.b16 %v4546, %v4545
        %v4750 = vpack.c.b16 %v4548, %v4547
        %v4751 = vpack.c.b16 %v4550, %v4549
        %v4752 = vpack.c.b16 %v4552, %v4551
        %v4753 = vpack.c.b16 %v4554, %v4553
        %v4754 = vpack.c.b16 %v4556, %v4555
        %v4755 = vpack.c.b16 %v4558, %v4557
        %v4756 = vpack.c.b16 %v4560, %v4559
        %v4757 = vpack.c.b16 %v4562, %v4561
        %v4758 = vpack.c.b16 %v4564, %v4563
        %v4759 = vpack.c.b16 %v4566, %v4565
        %v4760 = vpack.c.b16 %v4568, %v4567
        %v4761 = vpack.c.b16 %v4570, %v4569
        %v4762 = vpack.c.b16 %v4572, %v4571
        %v4763 = vpack.c.b16 %v4574, %v4573
        %v4764 = vpack.c.b16 %v4576, %v4575
        %v4765 = vpack.c.b16 %v4578, %v4577
        %v4766 = vpack.c.b16 %v4580, %v4579
        %v4767 = vpack.c.b16 %v4582, %v4581
        %v4768 = vpack.c.b16 %v4584, %v4583
        %v4769 = vpack.c.b16 %v4586, %v4585
        %v4770 = vpack.c.b16 %v4588, %v4587
        %v4771 = vpack.c.b16 %v4590, %v4589
        %v4772 = vpack.c.b16 %v4592, %v4591
        %v4773 = vpack.c.b16 %v4594, %v4593
        %v4774 = vpack.c.b16 %v4596, %v4595
        %v4775 = vpack.c.b16 %v4598, %v4597
        %v4776 = vpack.c.b16 %v4600, %v4599
        %v4777 = vpack.c.b16 %v4602, %v4601
        %v4778 = vpack.c.b16 %v4604, %v4603
        %v4779 = vpack.c.b16 %v4606, %v4605
        %v4780 = vpack.c.b16 %v4608, %v4607
        %v4781 = vpack.c.b16 %v4610, %v4609
        %v4782 = vpack.c.b16 %v4612, %v4611
        %v4783 = vpack.c.b16 %v4614, %v4613
        %v4784 = vpack.c.b16 %v4616, %v4615
        %v4785 = vpack.c.b16 %v4618, %v4617
        %v4786 = vpack.c.b16 %v4620, %v4619
        %v4787 = vpack.c.b16 %v4622, %v4621
        %v4788 = vpack.c.b16 %v4624, %v4623
        %v4789 = vpack.c.b16 %v4626, %v4625
        %v4790 = vpack.c.b16 %v4628, %v4627
        %v4791 = vpack.c.b16 %v4630, %v4629
        %v4792 = vpack.c.b16 %v4632, %v4631
        %v4793 = vpack.c.b16 %v4634, %v4633
        %v4794 = vpack.c.b16 %v4636, %v4635
        %v4795 = vpack.c.b16 %v4638, %v4637
        %v4796 = vpack.c.b16 %v4640, %v4639
        %v4797 = vpack.c.b16 %v4642, %v4641
        %v4798 = vpack.c.b16 %v4644, %v4643
        %v4799 = vpack.c.b16 %v4646, %v4645
        %v4800 = vpack.c.b16 %v4648, %v4647
        %v4801 = vpack.c.b16 %v4650, %v4649
        %v4802 = vpack.c.b16 %v4652, %v4651
        %v4803 = vpack.c.b16 %v4654, %v4653
        %v4804 = vpack.c.b16 %v4656, %v4655
        %v4805 = vpack.c.b16 %v4658, %v4657
        %v4806 = vpack.c.b16 %v4660, %v4659
        %v4807 = vpack.c.b16 %v4662, %v4661
        %v4808 = vpack.c.b16 %v4664, %v4663
        %v4809 = vpack.c.b16 %v4666, %v4665
        %v4810 = vpack.c.b16 %v4668, %v4667
        %v4811 = vpack.c.b16 %v4670, %v4669
        %v4812 = vpack.c.b16 %v4672, %v4671
        %v4813 = vpack.c.b16 %v4674, %v4673
        %v4814 = vpack.c.b16 %v4676, %v4675
        %v4815 = vpack.c.b16 %v4678, %v4677
        %v4816 = vpack.c.b16 %v4680, %v4679
        %v4817 = vpack.c.b16 %v4682, %v4681
        %v4818 = vpack.c.b16 %v4684, %v4683
        %v4819 = vpack.c.b16 %v4686, %v4685
        %v4820 = vpack.c.b16 %v4688, %v4687
        %v4821 = vpack.c.b16 %v4690, %v4689
        %v4822 = vpack.c.b16 %v4692, %v4691
        %v4823 = vpack.c.b16 %v4694, %v4693
        %v4824 = vpack.c.b16 %v4696, %v4695
        %4953 = vmatprep.subr.bf16.mxu0 0
        %4954 = vmatpush1.bf16.msra.mxu0 %v4704
        %4955 = vmatprep.subr.bf16.mxu0 0
        %4956 = vmatpush1.bf16.msra.mxu0 %v4703
        %4957 = vmatprep.subr.bf16.mxu0 0
        %4958 = vmatpush1.bf16.msra.mxu0 %v4702
        %4959 = vmatprep.subr.bf16.mxu0 0
        %4960 = vmatpush1.bf16.msra.mxu0 %v4701
        %4961 = vmatprep.subr.bf16.mxu0 0
        %4962 = vmatpush1.bf16.msra.mxu0 %v4700
        %4963 = vmatprep.subr.bf16.mxu0 0
        %4964 = vmatpush1.bf16.msra.mxu0 %v4699
        %4965 = vmatprep.subr.bf16.mxu0 0
        %4966 = vmatpush1.bf16.msra.mxu0 %v4698
        %4967 = vmatprep.subr.bf16.mxu0 0
        %4968 = vmatpush1.bf16.msra.mxu0 %v4697
        %4969 = vmatprep.subr.bf16.mxu0 0
        %4970 = vmatpush2.bf16.msra.mxu0 %v4712
        %4971 = vmatprep.subr.bf16.mxu0 0
        %4972 = vmatpush2.bf16.msra.mxu0 %v4711
        %4973 = vmatprep.subr.bf16.mxu0 0
        %4974 = vmatpush2.bf16.msra.mxu0 %v4710
        %4975 = vmatprep.subr.bf16.mxu0 0
        %4976 = vmatpush2.bf16.msra.mxu0 %v4709
        %4977 = vmatprep.subr.bf16.mxu0 0
        %4978 = vmatpush2.bf16.msra.mxu0 %v4708
        %4979 = vmatprep.subr.bf16.mxu0 0
        %4980 = vmatpush2.bf16.msra.mxu0 %v4707
        %4981 = vmatprep.subr.bf16.mxu0 0
        %4982 = vmatpush2.bf16.msra.mxu0 %v4706
        %4983 = vmatprep.subr.bf16.mxu0 0
        %4984 = vmatpush2.bf16.msra.mxu0 %v4705
        %4985 = vmatprep.mubr.bf16.mxu0 %v3909
        %4986 = vmatmul.mubr.bf16.gmra.mxu0 %v3908
        %v4987 = vpop.f32.mrf.mxu0
        %v4988 = vadd.f32 %v4184, %v4987
        %v4989 = vpop.f32.mrf.mxu0
        %v4990 = vpop.f32.mrf.mxu0
        %v4991 = vadd.f32 %v4184, %v4990
        %v4992 = vpop.f32.mrf.mxu0
        %4993 = vdwg.mxu0
        %4994 = vmatprep.subr.bf16.mxu0 0
        %4995 = vmatpush1.bf16.msra.mxu0 %v4720
        %4996 = vmatprep.subr.bf16.mxu0 0
        %4997 = vmatpush1.bf16.msra.mxu0 %v4719
        %4998 = vmatprep.subr.bf16.mxu0 0
        %4999 = vmatpush1.bf16.msra.mxu0 %v4718
        %5000 = vmatprep.subr.bf16.mxu0 0
        %5001 = vmatpush1.bf16.msra.mxu0 %v4717
        %5002 = vmatprep.subr.bf16.mxu0 0
        %5003 = vmatpush1.bf16.msra.mxu0 %v4716
        %5004 = vmatprep.subr.bf16.mxu0 0
        %5005 = vmatpush1.bf16.msra.mxu0 %v4715
        %5006 = vmatprep.subr.bf16.mxu0 0
        %5007 = vmatpush1.bf16.msra.mxu0 %v4714
        %5008 = vmatprep.subr.bf16.mxu0 0
        %5009 = vmatpush1.bf16.msra.mxu0 %v4713
        %5010 = vmatprep.subr.bf16.mxu0 0
        %5011 = vmatpush2.bf16.msra.mxu0 %v4728
        %5012 = vmatprep.subr.bf16.mxu0 0
        %5013 = vmatpush2.bf16.msra.mxu0 %v4727
        %5014 = vmatprep.subr.bf16.mxu0 0
        %5015 = vmatpush2.bf16.msra.mxu0 %v4726
        %5016 = vmatprep.subr.bf16.mxu0 0
        %5017 = vmatpush2.bf16.msra.mxu0 %v4725
        %5018 = vmatprep.subr.bf16.mxu0 0
        %5019 = vmatpush2.bf16.msra.mxu0 %v4724
        %5020 = vmatprep.subr.bf16.mxu0 0
        %5021 = vmatpush2.bf16.msra.mxu0 %v4723
        %5022 = vmatprep.subr.bf16.mxu0 0
        %5023 = vmatpush2.bf16.msra.mxu0 %v4722
        %5024 = vmatprep.subr.bf16.mxu0 0
        %5025 = vmatpush2.bf16.msra.mxu0 %v4721
        %5026 = vmatprep.mubr.bf16.mxu0 %v3911
        %5027 = vmatmul.mubr.bf16.gmra.mxu0 %v3910
        %v5028 = vpop.f32.mrf.mxu0
        %v5029 = vadd.f32 %v4988, %v5028
        %v5030 = vpop.f32.mrf.mxu0
        %v5031 = vpop.f32.mrf.mxu0
        %v5032 = vadd.f32 %v4991, %v5031
        %v5033 = vpop.f32.mrf.mxu0
        %5034 = vdwg.mxu0
        %5035 = vmatprep.subr.bf16.mxu0 0
        %5036 = vmatpush1.bf16.msra.mxu0 %v4736
        %5037 = vmatprep.subr.bf16.mxu0 0
        %5038 = vmatpush1.bf16.msra.mxu0 %v4735
        %5039 = vmatprep.subr.bf16.mxu0 0
        %5040 = vmatpush1.bf16.msra.mxu0 %v4734
        %5041 = vmatprep.subr.bf16.mxu0 0
        %5042 = vmatpush1.bf16.msra.mxu0 %v4733
        %5043 = vmatprep.subr.bf16.mxu0 0
        %5044 = vmatpush1.bf16.msra.mxu0 %v4732
        %5045 = vmatprep.subr.bf16.mxu0 0
        %5046 = vmatpush1.bf16.msra.mxu0 %v4731
        %5047 = vmatprep.subr.bf16.mxu0 0
        %5048 = vmatpush1.bf16.msra.mxu0 %v4730
        %5049 = vmatprep.subr.bf16.mxu0 0
        %5050 = vmatpush1.bf16.msra.mxu0 %v4729
        %5051 = vmatprep.subr.bf16.mxu0 0
        %5052 = vmatpush2.bf16.msra.mxu0 %v4744
        %5053 = vmatprep.subr.bf16.mxu0 0
        %5054 = vmatpush2.bf16.msra.mxu0 %v4743
        %5055 = vmatprep.subr.bf16.mxu0 0
        %5056 = vmatpush2.bf16.msra.mxu0 %v4742
        %5057 = vmatprep.subr.bf16.mxu0 0
        %5058 = vmatpush2.bf16.msra.mxu0 %v4741
        %5059 = vmatprep.subr.bf16.mxu0 0
        %5060 = vmatpush2.bf16.msra.mxu0 %v4740
        %5061 = vmatprep.subr.bf16.mxu0 0
        %5062 = vmatpush2.bf16.msra.mxu0 %v4739
        %5063 = vmatprep.subr.bf16.mxu0 0
        %5064 = vmatpush2.bf16.msra.mxu0 %v4738
        %5065 = vmatprep.subr.bf16.mxu0 0
        %5066 = vmatpush2.bf16.msra.mxu0 %v4737
        %5067 = vmatprep.mubr.bf16.mxu0 %v3913
        %5068 = vmatmul.mubr.bf16.gmra.mxu0 %v3912
        %v5069 = vpop.f32.mrf.mxu0
        %v5070 = vadd.f32 %v5029, %v5069
        %v5071 = vpop.f32.mrf.mxu0
        %v5072 = vpop.f32.mrf.mxu0
        %v5073 = vadd.f32 %v5032, %v5072
        %v5074 = vpop.f32.mrf.mxu0
        %5075 = vdwg.mxu0
        %5076 = vmatprep.subr.bf16.mxu0 0
        %5077 = vmatpush1.bf16.msra.mxu0 %v4752
        %5078 = vmatprep.subr.bf16.mxu0 0
        %5079 = vmatpush1.bf16.msra.mxu0 %v4751
        %5080 = vmatprep.subr.bf16.mxu0 0
        %5081 = vmatpush1.bf16.msra.mxu0 %v4750
        %5082 = vmatprep.subr.bf16.mxu0 0
        %5083 = vmatpush1.bf16.msra.mxu0 %v4749
        %5084 = vmatprep.subr.bf16.mxu0 0
        %5085 = vmatpush1.bf16.msra.mxu0 %v4748
        %5086 = vmatprep.subr.bf16.mxu0 0
        %5087 = vmatpush1.bf16.msra.mxu0 %v4747
        %5088 = vmatprep.subr.bf16.mxu0 0
        %5089 = vmatpush1.bf16.msra.mxu0 %v4746
        %5090 = vmatprep.subr.bf16.mxu0 0
        %5091 = vmatpush1.bf16.msra.mxu0 %v4745
        %5092 = vmatprep.subr.bf16.mxu0 0
        %5093 = vmatpush2.bf16.msra.mxu0 %v4760
        %5094 = vmatprep.subr.bf16.mxu0 0
        %5095 = vmatpush2.bf16.msra.mxu0 %v4759
        %5096 = vmatprep.subr.bf16.mxu0 0
        %5097 = vmatpush2.bf16.msra.mxu0 %v4758
        %5098 = vmatprep.subr.bf16.mxu0 0
        %5099 = vmatpush2.bf16.msra.mxu0 %v4757
        %5100 = vmatprep.subr.bf16.mxu0 0
        %5101 = vmatpush2.bf16.msra.mxu0 %v4756
        %5102 = vmatprep.subr.bf16.mxu0 0
        %5103 = vmatpush2.bf16.msra.mxu0 %v4755
        %5104 = vmatprep.subr.bf16.mxu0 0
        %5105 = vmatpush2.bf16.msra.mxu0 %v4754
        %5106 = vmatprep.subr.bf16.mxu0 0
        %5107 = vmatpush2.bf16.msra.mxu0 %v4753
        %5108 = vmatprep.mubr.bf16.mxu0 %v3915
        %5109 = vmatmul.mubr.bf16.gmra.mxu0 %v3914
        %v5110 = vpop.f32.mrf.mxu0
        %v5111 = vadd.f32 %v5070, %v5110
        %v5112 = vpop.f32.mrf.mxu0
        %v5113 = vpop.f32.mrf.mxu0
        %v5114 = vadd.f32 %v5073, %v5113
        %v5115 = vpop.f32.mrf.mxu0
        %5116 = vdwg.mxu0
        %5117 = vmatprep.subr.bf16.mxu0 0
        %5118 = vmatpush1.bf16.msra.mxu0 %v4768
        %5119 = vmatprep.subr.bf16.mxu0 0
        %5120 = vmatpush1.bf16.msra.mxu0 %v4767
        %5121 = vmatprep.subr.bf16.mxu0 0
        %5122 = vmatpush1.bf16.msra.mxu0 %v4766
        %5123 = vmatprep.subr.bf16.mxu0 0
        %5124 = vmatpush1.bf16.msra.mxu0 %v4765
        %5125 = vmatprep.subr.bf16.mxu0 0
        %5126 = vmatpush1.bf16.msra.mxu0 %v4764
        %5127 = vmatprep.subr.bf16.mxu0 0
        %5128 = vmatpush1.bf16.msra.mxu0 %v4763
        %5129 = vmatprep.subr.bf16.mxu0 0
        %5130 = vmatpush1.bf16.msra.mxu0 %v4762
        %5131 = vmatprep.subr.bf16.mxu0 0
        %5132 = vmatpush1.bf16.msra.mxu0 %v4761
        %5133 = vmatprep.subr.bf16.mxu0 0
        %5134 = vmatpush2.bf16.msra.mxu0 %v4776
        %5135 = vmatprep.subr.bf16.mxu0 0
        %5136 = vmatpush2.bf16.msra.mxu0 %v4775
        %5137 = vmatprep.subr.bf16.mxu0 0
        %5138 = vmatpush2.bf16.msra.mxu0 %v4774
        %5139 = vmatprep.subr.bf16.mxu0 0
        %5140 = vmatpush2.bf16.msra.mxu0 %v4773
        %5141 = vmatprep.subr.bf16.mxu0 0
        %5142 = vmatpush2.bf16.msra.mxu0 %v4772
        %5143 = vmatprep.subr.bf16.mxu0 0
        %5144 = vmatpush2.bf16.msra.mxu0 %v4771
        %5145 = vmatprep.subr.bf16.mxu0 0
        %5146 = vmatpush2.bf16.msra.mxu0 %v4770
        %5147 = vmatprep.subr.bf16.mxu0 0
        %5148 = vmatpush2.bf16.msra.mxu0 %v4769
        %5149 = vmatprep.mubr.bf16.mxu0 %v3917
        %5150 = vmatmul.mubr.bf16.gmra.mxu0 %v3916
        %v5151 = vpop.f32.mrf.mxu0
        %v5152 = vadd.f32 %v5111, %v5151
        %v5153 = vpop.f32.mrf.mxu0
        %v5154 = vpop.f32.mrf.mxu0
        %v5155 = vadd.f32 %v5114, %v5154
        %v5156 = vpop.f32.mrf.mxu0
        %5157 = vdwg.mxu0
        %5158 = vmatprep.subr.bf16.mxu0 0
        %5159 = vmatpush1.bf16.msra.mxu0 %v4784
        %5160 = vmatprep.subr.bf16.mxu0 0
        %5161 = vmatpush1.bf16.msra.mxu0 %v4783
        %5162 = vmatprep.subr.bf16.mxu0 0
        %5163 = vmatpush1.bf16.msra.mxu0 %v4782
        %5164 = vmatprep.subr.bf16.mxu0 0
        %5165 = vmatpush1.bf16.msra.mxu0 %v4781
        %5166 = vmatprep.subr.bf16.mxu0 0
        %5167 = vmatpush1.bf16.msra.mxu0 %v4780
        %5168 = vmatprep.subr.bf16.mxu0 0
        %5169 = vmatpush1.bf16.msra.mxu0 %v4779
        %5170 = vmatprep.subr.bf16.mxu0 0
        %5171 = vmatpush1.bf16.msra.mxu0 %v4778
        %5172 = vmatprep.subr.bf16.mxu0 0
        %5173 = vmatpush1.bf16.msra.mxu0 %v4777
        %5174 = vmatprep.subr.bf16.mxu0 0
        %5175 = vmatpush2.bf16.msra.mxu0 %v4792
        %5176 = vmatprep.subr.bf16.mxu0 0
        %5177 = vmatpush2.bf16.msra.mxu0 %v4791
        %5178 = vmatprep.subr.bf16.mxu0 0
        %5179 = vmatpush2.bf16.msra.mxu0 %v4790
        %5180 = vmatprep.subr.bf16.mxu0 0
        %5181 = vmatpush2.bf16.msra.mxu0 %v4789
        %5182 = vmatprep.subr.bf16.mxu0 0
        %5183 = vmatpush2.bf16.msra.mxu0 %v4788
        %5184 = vmatprep.subr.bf16.mxu0 0
        %5185 = vmatpush2.bf16.msra.mxu0 %v4787
        %5186 = vmatprep.subr.bf16.mxu0 0
        %5187 = vmatpush2.bf16.msra.mxu0 %v4786
        %5188 = vmatprep.subr.bf16.mxu0 0
        %5189 = vmatpush2.bf16.msra.mxu0 %v4785
        %5190 = vmatprep.mubr.bf16.mxu0 %v3919
        %5191 = vmatmul.mubr.bf16.gmra.mxu0 %v3918
        %v5192 = vpop.f32.mrf.mxu0
        %v5193 = vadd.f32 %v5152, %v5192
        %v5194 = vpop.f32.mrf.mxu0
        %v5195 = vpop.f32.mrf.mxu0
        %v5196 = vadd.f32 %v5155, %v5195
        %v5197 = vpop.f32.mrf.mxu0
        %5198 = vdwg.mxu0
        %5199 = vmatprep.subr.bf16.mxu0 0
        %5200 = vmatpush1.bf16.msra.mxu0 %v4800
        %5201 = vmatprep.subr.bf16.mxu0 0
        %5202 = vmatpush1.bf16.msra.mxu0 %v4799
        %5203 = vmatprep.subr.bf16.mxu0 0
        %5204 = vmatpush1.bf16.msra.mxu0 %v4798
        %5205 = vmatprep.subr.bf16.mxu0 0
        %5206 = vmatpush1.bf16.msra.mxu0 %v4797
        %5207 = vmatprep.subr.bf16.mxu0 0
        %5208 = vmatpush1.bf16.msra.mxu0 %v4796
        %5209 = vmatprep.subr.bf16.mxu0 0
        %5210 = vmatpush1.bf16.msra.mxu0 %v4795
        %5211 = vmatprep.subr.bf16.mxu0 0
        %5212 = vmatpush1.bf16.msra.mxu0 %v4794
        %5213 = vmatprep.subr.bf16.mxu0 0
        %5214 = vmatpush1.bf16.msra.mxu0 %v4793
        %5215 = vmatprep.subr.bf16.mxu0 0
        %5216 = vmatpush2.bf16.msra.mxu0 %v4808
        %5217 = vmatprep.subr.bf16.mxu0 0
        %5218 = vmatpush2.bf16.msra.mxu0 %v4807
        %5219 = vmatprep.subr.bf16.mxu0 0
        %5220 = vmatpush2.bf16.msra.mxu0 %v4806
        %5221 = vmatprep.subr.bf16.mxu0 0
        %5222 = vmatpush2.bf16.msra.mxu0 %v4805
        %5223 = vmatprep.subr.bf16.mxu0 0
        %5224 = vmatpush2.bf16.msra.mxu0 %v4804
        %5225 = vmatprep.subr.bf16.mxu0 0
        %5226 = vmatpush2.bf16.msra.mxu0 %v4803
        %5227 = vmatprep.subr.bf16.mxu0 0
        %5228 = vmatpush2.bf16.msra.mxu0 %v4802
        %5229 = vmatprep.subr.bf16.mxu0 0
        %5230 = vmatpush2.bf16.msra.mxu0 %v4801
        %5231 = vmatprep.mubr.bf16.mxu0 %v3921
        %5232 = vmatmul.mubr.bf16.gmra.mxu0 %v3920
        %v5233 = vpop.f32.mrf.mxu0
        %v5234 = vadd.f32 %v5193, %v5233
        %v5235 = vpop.f32.mrf.mxu0
        %v5236 = vpop.f32.mrf.mxu0
        %v5237 = vadd.f32 %v5196, %v5236
        %v5238 = vpop.f32.mrf.mxu0
        %5239 = vdwg.mxu0
        %5240 = vmatprep.subr.bf16.mxu0 0
        %5241 = vmatpush1.bf16.msra.mxu0 %v4816
        %5242 = vmatprep.subr.bf16.mxu0 0
        %5243 = vmatpush1.bf16.msra.mxu0 %v4815
        %5244 = vmatprep.subr.bf16.mxu0 0
        %5245 = vmatpush1.bf16.msra.mxu0 %v4814
        %5246 = vmatprep.subr.bf16.mxu0 0
        %5247 = vmatpush1.bf16.msra.mxu0 %v4813
        %5248 = vmatprep.subr.bf16.mxu0 0
        %5249 = vmatpush1.bf16.msra.mxu0 %v4812
        %5250 = vmatprep.subr.bf16.mxu0 0
        %5251 = vmatpush1.bf16.msra.mxu0 %v4811
        %5252 = vmatprep.subr.bf16.mxu0 0
        %5253 = vmatpush1.bf16.msra.mxu0 %v4810
        %5254 = vmatprep.subr.bf16.mxu0 0
        %5255 = vmatpush1.bf16.msra.mxu0 %v4809
        %5256 = vmatprep.subr.bf16.mxu0 0
        %5257 = vmatpush2.bf16.msra.mxu0 %v4824
        %5258 = vmatprep.subr.bf16.mxu0 0
        %5259 = vmatpush2.bf16.msra.mxu0 %v4823
        %5260 = vmatprep.subr.bf16.mxu0 0
        %5261 = vmatpush2.bf16.msra.mxu0 %v4822
        %5262 = vmatprep.subr.bf16.mxu0 0
        %5263 = vmatpush2.bf16.msra.mxu0 %v4821
        %5264 = vmatprep.subr.bf16.mxu0 0
        %5265 = vmatpush2.bf16.msra.mxu0 %v4820
        %5266 = vmatprep.subr.bf16.mxu0 0
        %5267 = vmatpush2.bf16.msra.mxu0 %v4819
        %5268 = vmatprep.subr.bf16.mxu0 0
        %5269 = vmatpush2.bf16.msra.mxu0 %v4818
        %5270 = vmatprep.subr.bf16.mxu0 0
        %5271 = vmatpush2.bf16.msra.mxu0 %v4817
        %5272 = vmatprep.mubr.bf16.mxu0 %v3923
        %5273 = vmatmul.mubr.bf16.gmra.mxu0 %v3922
        %v5274 = vpop.f32.mrf.mxu0
        %v5275 = vadd.f32 %v5234, %v5274
        %v5276 = vpop.f32.mrf.mxu0
        %v5277 = vpop.f32.mrf.mxu0
        %v5278 = vadd.f32 %v5237, %v5277
        %v5279 = vpop.f32.mrf.mxu0
        %5280 = vdwg.mxu0
        %v5281 = vadd.f32 %v3250, %v5275
        %v5282 = vadd.f32 %v3251, %v5278
        %v5283 = vld [vmem:[%s637 + $0x47] sm:$0x1]
        %v5284 = vld [vmem:[%s637 + $0x48] sm:$0x1]
        %v5285 = vsel %vm2946, %v5281, 0.0
        %5286 = vadd.xlane.f32.xlu0 %v5285
        %v5287 = vpop.xlane.xlu0 %5286
        %v5288 = vsel %vm2946, %v5282, 0.0
        %5289 = vadd.xlane.f32.xlu0 %v5288
        %v5290 = vpop.xlane.xlu0 %5289
        %v5291 = vmul.f32 %v5287, %v2953
        %v5292 = vmul.f32 %v5290, %v2953
        %v5293 = vsub.f32 %v5281, %v5291
        %v5294 = vsub.f32 %v5282, %v5292
        %v5295 = vmul.f32 %v5293, %v5293
        %v5296 = vmul.f32 %v5294, %v5294
        %v5297 = vsel %vm2946, %v5295, 0.0
        %5298 = vadd.xlane.f32.xlu0 %v5297
        %v5299 = vpop.xlane.xlu0 %5298
        %v5300 = vsel %vm2946, %v5296, 0.0
        %5301 = vadd.xlane.f32.xlu0 %v5300
        %v5302 = vpop.xlane.xlu0 %5301
        %v5303 = vmul.f32 %v5299, %v2953
        %v5304 = vmul.f32 %v5302, %v2953
        %v5305 = vadd.f32 %v5303, 1e-05
        %v5306 = vadd.f32 %v5304, 1e-05
        %v5307 = vrsqrt.pop %v5305
        %v5308 = vrsqrt.pop %v5306
        %v5309 = vmul.f32 %v5293, %v5307
        %v5310 = vmul.f32 %v5294, %v5308
        %v5311 = vlaneseq
        %v5312 = vshrl.u32 %v5311, 7
        %v5313 = vsub.s32 0, %v5312
        %v5314 = vrot.slane %v5283, %v5313
        %v5315 = vmul.f32 %v5309, %v5314
        %v5316 = vmul.f32 %v5310, %v5314
        %v5317 = vlaneseq
        %v5318 = vshrl.u32 %v5317, 7
        %v5319 = vsub.s32 0, %v5318
        %v5320 = vrot.slane %v5284, %v5319
        %v5321 = vadd.f32 %v5315, %v5320
        %v5322 = vadd.f32 %v5316, %v5320
        %5323 = vst.msk [vmem:[#allocation3] sm:$0xff] %vm2946, %v5321
        %5324 = vst.msk [vmem:[#allocation3 + $0x8] sm:$0xff] %vm2946, %v5322
        %p5325 = scmp.eq.s32.totalorder %s23, 19
        // Predicated region
        $region81: #{pallas_forward.1} parent=79 // pred_check
          %p5326 = pneg %p5325
        $region82: #{pallas_forward.1} parent=79 // pred_check_branch
          %5328 = sbr.rel (%p5326) target = $region84
        $region83: #{pallas_forward.1} parent=79 // pred_region
          %v5329 = vld [vmem:[%s2 + $0x4] sm:$0x1]
          %v5330 = vld [vmem:[%s2 + $0x5] sm:$0x1]
          %v5331 = vsel %vm2946, %v5321, 0.0
          %5332 = vadd.xlane.f32.xlu0 %v5331
          %v5333 = vpop.xlane.xlu0 %5332
          %v5334 = vsel %vm2946, %v5322, 0.0
          %5335 = vadd.xlane.f32.xlu0 %v5334
          %v5336 = vpop.xlane.xlu0 %5335
          %v5337 = vmul.f32 %v5333, %v2953
          %v5338 = vmul.f32 %v5336, %v2953
          %v5339 = vsub.f32 %v5321, %v5337
          %v5340 = vsub.f32 %v5322, %v5338
          %v5341 = vmul.f32 %v5339, %v5339
          %v5342 = vmul.f32 %v5340, %v5340
          %v5343 = vsel %vm2946, %v5341, 0.0
          %5344 = vadd.xlane.f32.xlu0 %v5343
          %v5345 = vpop.xlane.xlu0 %5344
          %v5346 = vsel %vm2946, %v5342, 0.0
          %5347 = vadd.xlane.f32.xlu0 %v5346
          %v5348 = vpop.xlane.xlu0 %5347
          %v5349 = vmul.f32 %v5345, %v2953
          %v5350 = vmul.f32 %v5348, %v2953
          %v5351 = vadd.f32 %v5349, 1e-05
          %v5352 = vadd.f32 %v5350, 1e-05
          %v5353 = vrsqrt.pop %v5351
          %v5354 = vrsqrt.pop %v5352
          %v5355 = vmul.f32 %v5339, %v5353
          %v5356 = vmul.f32 %v5340, %v5354
          %v5357 = vlaneseq
          %v5358 = vshrl.u32 %v5357, 7
          %v5359 = vsub.s32 0, %v5358
          %v5360 = vrot.slane %v5329, %v5359
          %v5361 = vmul.f32 %v5355, %v5360
          %v5362 = vmul.f32 %v5356, %v5360
          %v5363 = vlaneseq
          %v5364 = vshrl.u32 %v5363, 7
          %v5365 = vsub.s32 0, %v5364
          %v5366 = vrot.slane %v5330, %v5365
          %v5367 = vadd.f32 %v5361, %v5366
          %v5368 = vadd.f32 %v5362, %v5366
          %v5369 = vld [vmem:[%s3] sm:$0xff]
          %v5370 = vld [vmem:[%s3 + $0x8] sm:$0xff]
          %v5371 = vld [vmem:[%s3 + $0x10] sm:$0xff]
          %v5372 = vld [vmem:[%s3 + $0x18] sm:$0xff]
          %v5373 = vld [vmem:[%s3 + $0x20] sm:$0x1]
          %v5374 = vlaneseq
          %v5375 = vshrl.u32 %v5374, 7
          %v5376 = vsub.s32 0, %v5375
          %v5377 = vrot.slane %v5373, %v5376
          %v5379 = vsel %vm2946, %v5367, 0
          %v5382 = vsel %vm2946, %v5368, 0
          %5384 = vmatprep.subr.mxu0 0.0
          %5385 = vmatpush1.msra.mxu0 0.0
          %5386 = vmatprep.subr.mxu0 0.0
          %5387 = vmatpush1.msra.mxu0 0.0
          %5388 = vmatprep.subr.mxu0 0.0
          %5389 = vmatpush1.msra.mxu0 0.0
          %5390 = vmatprep.subr.mxu0 0.0
          %5391 = vmatpush1.msra.mxu0 0.0
          %5392 = vmatprep.subr.mxu0 0.0
          %5393 = vmatpush1.msra.mxu0 0.0
          %5394 = vmatprep.subr.mxu0 0.0
          %5395 = vmatpush1.msra.mxu0 0.0
          %5396 = vmatprep.subr.mxu0 0.0
          %5397 = vmatpush1.msra.mxu0 0.0
          %5398 = vmatprep.subr.mxu0 0.0
          %5399 = vmatpush1.msra.mxu0 0.0
          %5400 = vmatprep.subr.mxu0 0.0
          %5401 = vmatpush1.msra.mxu0 0.0
          %5402 = vmatprep.subr.mxu0 0.0
          %5403 = vmatpush1.msra.mxu0 0.0
          %5404 = vmatprep.subr.mxu0 0.0
          %5405 = vmatpush1.msra.mxu0 0.0
          %5406 = vmatprep.subr.mxu0 0.0
          %5407 = vmatpush1.msra.mxu0 0.0
          %5408 = vmatprep.subr.mxu0 0.0
          %5409 = vmatpush1.msra.mxu0 %v5372
          %5410 = vmatprep.subr.mxu0 0.0
          %5411 = vmatpush1.msra.mxu0 %v5371
          %5412 = vmatprep.subr.mxu0 0.0
          %5413 = vmatpush1.msra.mxu0 %v5370
          %5414 = vmatprep.subr.mxu0 0.0
          %5415 = vmatpush1.msra.mxu0 %v5369
          %5416 = vmatprep.subr.mxu0 0.0
          %5417 = vmatpush2.msra.mxu0 0.0
          %5418 = vmatprep.subr.mxu0 0.0
          %5419 = vmatpush2.msra.mxu0 0.0
          %5420 = vmatprep.subr.mxu0 0.0
          %5421 = vmatpush2.msra.mxu0 0.0
          %5422 = vmatprep.subr.mxu0 0.0
          %5423 = vmatpush2.msra.mxu0 0.0
          %5424 = vmatprep.subr.mxu0 0.0
          %5425 = vmatpush2.msra.mxu0 0.0
          %5426 = vmatprep.subr.mxu0 0.0
          %5427 = vmatpush2.msra.mxu0 0.0
          %5428 = vmatprep.subr.mxu0 0.0
          %5429 = vmatpush2.msra.mxu0 0.0
          %5430 = vmatprep.subr.mxu0 0.0
          %5431 = vmatpush2.msra.mxu0 0.0
          %5432 = vmatprep.subr.mxu0 0.0
          %5433 = vmatpush2.msra.mxu0 0.0
          %5434 = vmatprep.subr.mxu0 0.0
          %5435 = vmatpush2.msra.mxu0 0.0
          %5436 = vmatprep.subr.mxu0 0.0
          %5437 = vmatpush2.msra.mxu0 0.0
          %5438 = vmatprep.subr.mxu0 0.0
          %5439 = vmatpush2.msra.mxu0 0.0
          %5440 = vmatprep.subr.mxu0 0.0
          %5441 = vmatpush2.msra.mxu0 0.0
          %5442 = vmatprep.subr.mxu0 0.0
          %5443 = vmatpush2.msra.mxu0 0.0
          %5444 = vmatprep.subr.mxu0 0.0
          %5445 = vmatpush2.msra.mxu0 0.0
          %5446 = vmatprep.subr.mxu0 0.0
          %5447 = vmatpush2.msra.mxu0 0.0
          %5448 = vmatprep.mubr.f32.mxu0 0.0
          %5449 = vmatmul.mubr.f32.gmra.mxu0 %v5379
          %v5450 = vpop.f32.mrf.mxu0
          %v5451 = vadd.f32 %v5377, %v5450
          %v5452 = vpop.f32.mrf.mxu0
          %5453 = vmatprep.mubr.f32.mxu0 0.0
          %5454 = vmatmul.mubr.f32.gmra.mxu0 %v5382
          %v5455 = vpop.f32.mrf.mxu0
          %v5456 = vadd.f32 %v5377, %v5455
          %v5457 = vpop.f32.mrf.mxu0
          %5458 = vdwg.mxu0
          %5459 = vst [vmem:[%s12] sm:$0xff] %v5451
          %5460 = vst [vmem:[%s12 + $0x8] sm:$0xff] %v5456
        $region84: #{pallas_forward.1} parent=79 // pred_fallthru
          _
      $region80: #{pallas_forward.1} parent=67 // pred_fallthru
        _
      // Predicated region
      $region85: #{pallas_forward.1} parent=67 // pred_check
        %p5461 = pneg %p368
      $region86: #{pallas_forward.1} parent=67 // pred_check_branch
        %5463 = sbr.rel (%p5461) target = $region88
      $region87: #{pallas_forward.1} parent=67 // pred_region
        _
      $region88: #{pallas_forward.1} parent=67 // pred_fallthru
        _
      // Predicated region
      $region89: #{pallas_forward.1} parent=67 // pred_check
        %p5464 = pneg %p368
      $region90: #{pallas_forward.1} parent=67 // pred_check_branch
        %5466 = sbr.rel (%p5464) target = $region92
      $region91: #{pallas_forward.1} parent=67 // pred_region
        _
      $region92: #{pallas_forward.1} parent=67 // pred_fallthru
        _
    $region68: #{pallas_forward.1} parent=5 // pred_fallthru
      _
    %p5467 = scmp.le.s32.totalorder 2, %s18
    // Predicated region
    $region93: #{pallas_forward.1} parent=5 // pred_check
      %p5468 = pneg %p5467
    $region94: #{pallas_forward.1} parent=5 // pred_check_branch
      %5470 = sbr.rel (%p5468) target = $region96
    $region95: #{pallas_forward.1} parent=5 // pred_region
      %s5471 = ssub.s32 %s18, 2
    $region96: #{pallas_forward.1} parent=5 // pred_fallthru
      _
  $region6: #{pallas_forward.1} parent=0 // loop_footer
    %s22 = sadd.s32 1, %s18
  $region7: #{pallas_forward.1} parent=0 // loop_footer_branch
    %17 = sbr.rel target = $region3
  $region8: #{pallas_forward.1} parent=0 // loop_exit
    _

</llo_original>
